<compile_context>
chip_gen: v7x
topology: tpu7x:2x2x1
jax: 0.10.0
libtpu: 0.0.40
codegen_flags: <defaults>
</compile_context>

<pallas_src>
import functools
from dataclasses import dataclass

import jax
import jax.numpy as jnp
from jax import lax
from jax.experimental import pallas as pl
from jax.experimental.pallas import tpu as pltpu

EPS = 1e-5
NEG_INF = -1e30                          # exp() underflows to exactly 0.0 in f32
_VMEM_LIMIT = 48 * 1024 * 1024           # <= physical VMEM on v5e/v6e/v7x
HIGH = lax.Precision.HIGHEST             # reference-side matmul precision


# ----------------------------------------------------------------------------- helpers

def _round_up(n: int, m: int) -> int:
    return (n + m - 1) // m * m


def _pick_row_tile(rows: int, target: int) -> int:
    # Roofline-friendly row tile (target 256 rows) capped so tiny demo inputs are not
    # padded up to a full tile.  For realistic batch*seq this returns `target`.
    return min(target, max(8, _round_up(rows, 8)))


def _layer_norm_f32(r, gamma, beta):
    """LayerNorm over the last axis in f32 (centered two-pass, biased variance,
    matching torch.nn.LayerNorm)."""
    inv_d = 1.0 / r.shape[-1]
    mean = jnp.sum(r, axis=-1, keepdims=True) * inv_d
    c = r - mean
    var = jnp.sum(c * c, axis=-1, keepdims=True) * inv_d
    return c * lax.rsqrt(var + EPS) * gamma + beta


# ----------------------------------------------------------------------------- kernels

def mha_residual_kernel(x_ref, wq_ref, bq_ref, wk_ref, bk_ref, wv_ref, bv_ref,
                        wo_ref, bo_ref, g_ref, be_ref, o_ref, *, num_heads):
    """Residual(MultiHeadAttention) for one batch element:
       LayerNorm(x + MHA_causal(x, x, x)).  (dropout in eval mode == identity)"""
    x = x_ref[0]                                   # (S, D), native dtype -> MXU directly
    seq = x.shape[0]
    head_dim = wq_ref.shape[-1]
    inv_scale = 1.0 / (head_dim ** 0.5)

    row = lax.broadcasted_iota(jnp.int32, (seq, seq), 0)
    col = lax.broadcasted_iota(jnp.int32, (seq, seq), 1)
    causal = row >= col                            # query attends to keys <= its position

    acc = jnp.zeros((seq, x.shape[-1]), jnp.float32)
    for h in range(num_heads):                     # static unroll; num_heads is small
        q = jnp.dot(x, wq_ref[h], preferred_element_type=jnp.float32) + bq_ref[h]
        k = jnp.dot(x, wk_ref[h], preferred_element_type=jnp.float32) + bk_ref[h]
        v = jnp.dot(x, wv_ref[h], preferred_element_type=jnp.float32) + bv_ref[h]
        # q @ k^T without an explicit transpose.
        s = lax.dot_general(q, k, (((1,), (1,)), ((), ())),
                            preferred_element_type=jnp.float32) * inv_scale
        s = jnp.where(causal, s, NEG_INF)
        m = jnp.max(s, axis=-1, keepdims=True)
        e = jnp.exp(s - m)
        p = e / jnp.sum(e, axis=-1, keepdims=True)
        ctx = jnp.dot(p, v, preferred_element_type=jnp.float32)          # (S, dh)
        # Linear(concat(heads)) == sum_h ctx_h @ Wo_h: avoids in-kernel lane concat.
        acc = acc + jnp.dot(ctx.astype(wo_ref.dtype), wo_ref[h],
                            preferred_element_type=jnp.float32)
    r = x.astype(jnp.float32) + acc + bo_ref[...]                        # residual add in f32
    o_ref[0] = _layer_norm_f32(r, g_ref[...], be_ref[...]).astype(o_ref.dtype)


def ffn_residual_kernel(x_ref, w1_ref, b1_ref, w2_ref, b2_ref, g_ref, be_ref, o_ref):
    """Residual(FeedForward) on a (tm, D) row tile:
       LayerNorm(x + Linear2(relu(Linear1(x)))).  (dropout in eval mode == identity)"""
    x = x_ref[...]                                                       # native dtype
    h = jnp.dot(x, w1_ref[...], preferred_element_type=jnp.float32) + b1_ref[...]
    h = jnp.maximum(h, 0.0)
    y = jnp.dot(h.astype(w2_ref.dtype), w2_ref[...],
                preferred_element_type=jnp.float32) + b2_ref[...]
    r = x.astype(jnp.float32) + y                                        # residual add in f32
    o_ref[...] = _layer_norm_f32(r, g_ref[...], be_ref[...]).astype(o_ref.dtype)


def lm_head_kernel(x_ref, w_ref, o_ref):
    o_ref[...] = jnp.dot(x_ref[...], w_ref[...],
                         preferred_element_type=jnp.float32).astype(o_ref.dtype)


# ----------------------------------------------------------------------------- wrappers

def mha_residual_forward(x, lp):
    B, S, D = x.shape
    H, _, dh = lp["wq"].shape
    assert D % 128 == 0, "embedding_dim must be a multiple of 128 (lane-dense)"
    f32 = lambda a: a.astype(jnp.float32)          # hoist small-vector casts out of the kernel
    full3 = lambda shape: pl.BlockSpec(shape, lambda b: (0, 0, 0))
    vec = pl.BlockSpec((1, D), lambda b: (0, 0))
    # grid over batch; on v7x keep B >= 2 so both TensorCores get work.
    return pl.pallas_call(
        functools.partial(mha_residual_kernel, num_heads=H),
        out_shape=jax.ShapeDtypeStruct((B, S, D), x.dtype),
        grid_spec=pltpu.PrefetchScalarGridSpec(
            num_scalar_prefetch=0,
            grid=(B,),
            in_specs=[
                pl.BlockSpec((1, S, D), lambda b: (b, 0, 0)),
                full3((H, D, dh)), full3((H, 1, dh)),
                full3((H, D, dh)), full3((H, 1, dh)),
                full3((H, D, dh)), full3((H, 1, dh)),
                full3((H, dh, D)),
                vec, vec, vec,
            ],
            out_specs=pl.BlockSpec((1, S, D), lambda b: (b, 0, 0)),
        ),
        compiler_params=pltpu.CompilerParams(
            dimension_semantics=("parallel",),
            vmem_limit_bytes=_VMEM_LIMIT),
    )(x, lp["wq"], f32(lp["bq"]), lp["wk"], f32(lp["bk"]), lp["wv"], f32(lp["bv"]),
      lp["wo"], f32(lp["bo"]).reshape(1, D),
      f32(lp["ln1_g"]).reshape(1, D), f32(lp["ln1_b"]).reshape(1, D))


def ffn_residual_forward(x, lp, *, tm_target=256):
    B, S, D = x.shape
    Hd = lp["w1"].shape[1]
    assert D % 128 == 0 and Hd % 128 == 0, "feature dims must be multiples of 128"
    rows = B * S
    tm = _pick_row_tile(rows, tm_target)
    R = _round_up(rows, tm)
    x2 = x.reshape(rows, D)
    if R != rows:                                   # pad rows instead of asserting divisibility
        x2 = jnp.pad(x2, ((0, R - rows), (0, 0)))
    f32 = lambda a: a.astype(jnp.float32)
    out = pl.pallas_call(
        ffn_residual_kernel,
        out_shape=jax.ShapeDtypeStruct((R, D), x.dtype),
        grid_spec=pltpu.PrefetchScalarGridSpec(
            num_scalar_prefetch=0,
            grid=(R // tm,),
            in_specs=[
                pl.BlockSpec((tm, D), lambda i: (i, 0)),
                pl.BlockSpec((D, Hd), lambda i: (0, 0)),   # resident weight, native dtype
                pl.BlockSpec((1, Hd), lambda i: (0, 0)),
                pl.BlockSpec((Hd, D), lambda i: (0, 0)),   # resident weight, native dtype
                pl.BlockSpec((1, D), lambda i: (0, 0)),
                pl.BlockSpec((1, D), lambda i: (0, 0)),
                pl.BlockSpec((1, D), lambda i: (0, 0)),
            ],
            out_specs=pl.BlockSpec((tm, D), lambda i: (i, 0)),
        ),
        compiler_params=pltpu.CompilerParams(
            dimension_semantics=("parallel",),
            vmem_limit_bytes=_VMEM_LIMIT),
    )(x2, lp["w1"], f32(lp["b1"]).reshape(1, Hd), lp["w2"], f32(lp["b2"]).reshape(1, D),
      f32(lp["ln2_g"]).reshape(1, D), f32(lp["ln2_b"]).reshape(1, D))
    return out[:rows].reshape(B, S, D)


def lm_head_forward(x, w, *, tm_target=256, tv=256):
    """logits = x @ w, with w already stored pre-transposed as (D, vocab)."""
    B, S, D = x.shape
    V = w.shape[1]
    assert D % 128 == 0
    rows = B * S
    tm = _pick_row_tile(rows, tm_target)
    R = _round_up(rows, tm)
    Vp = _round_up(V, tv)                           # lane-dense vocab tiles
    x2 = x.reshape(rows, D)
    if R != rows:
        x2 = jnp.pad(x2, ((0, R - rows), (0, 0)))
    wp = w if Vp == V else jnp.pad(w, ((0, 0), (0, Vp - V)))
    out = pl.pallas_call(
        lm_head_kernel,
        out_shape=jax.ShapeDtypeStruct((R, Vp), x.dtype),
        grid_spec=pltpu.PrefetchScalarGridSpec(
            num_scalar_prefetch=0,
            grid=(R // tm, Vp // tv),
            in_specs=[
                pl.BlockSpec((tm, D), lambda i, j: (i, 0)),
                pl.BlockSpec((D, tv), lambda i, j: (0, j)),
            ],
            out_specs=pl.BlockSpec((tm, tv), lambda i, j: (i, j)),
        ),
        compiler_params=pltpu.CompilerParams(
            dimension_semantics=("parallel", "parallel"),
            vmem_limit_bytes=_VMEM_LIMIT),
    )(x2, wp)
    return out[:rows, :V].reshape(B, S, V)


def gpt_forward(tokens, params, *, tm_target=256):
    """Pallas-kernel GPT forward (eval mode). Returns logits [B, S, vocab]."""
    # TODO(synk): the token-embedding lookup is a data-dependent row gather; it is
    # left to XLA (jnp.take) rather than a Pallas kernel.
    S = tokens.shape[1]
    x = jnp.take(params["tok_emb"], tokens, axis=0) + params["pos_emb"][:, :S]
    # embedding_dropout / residual dropout: eval mode => identity.
    for lp in params["layers"]:
        x = mha_residual_forward(x, lp)
        x = ffn_residual_forward(x, lp, tm_target=tm_target)
    return lm_head_forward(x, params["lm_head"], tm_target=tm_target)


# ----------------------------------------------------------------------------- reference

def _layer_norm_ref(h, gamma, beta):
    mean = jnp.mean(h, axis=-1, keepdims=True)
    var = jnp.mean((h - mean) ** 2, axis=-1, keepdims=True)
    return (h - mean) * lax.rsqrt(var + EPS) * gamma + beta


def gpt_reference(tokens, params):
    S = tokens.shape[1]
    x = params["tok_emb"][tokens] + params["pos_emb"][:, :S]
    for lp in params["layers"]:
        _, _, dh = lp["wq"].shape
        q = jnp.einsum("bsd,hde->bhse", x, lp["wq"], precision=HIGH) + lp["bq"][None]
        k = jnp.einsum("bsd,hde->bhse", x, lp["wk"], precision=HIGH) + lp["bk"][None]
        v = jnp.einsum("bsd,hde->bhse", x, lp["wv"], precision=HIGH) + lp["bv"][None]
        s = jnp.einsum("bhqe,bhke->bhqk", q, k, precision=HIGH) / (dh ** 0.5)
        causal = jnp.tril(jnp.ones((S, S), bool))
        s = jnp.where(causal[None, None], s, -jnp.inf)
        p = jax.nn.softmax(s, axis=-1)
        ctx = jnp.einsum("bhqk,bhke->bhqe", p, v, precision=HIGH)
        attn = jnp.einsum("bhse,hed->bsd", ctx, lp["wo"], precision=HIGH) + lp["bo"]
        x = _layer_norm_ref(x + attn, lp["ln1_g"], lp["ln1_b"])
        h = jnp.maximum(jnp.einsum("bsd,dk->bsk", x, lp["w1"], precision=HIGH) + lp["b1"], 0.0)
        y = jnp.einsum("bsk,kd->bsd", h, lp["w2"], precision=HIGH) + lp["b2"]
        x = _layer_norm_ref(x + y, lp["ln2_g"], lp["ln2_b"])
    return jnp.einsum("bsd,dv->bsv", x, params["lm_head"], precision=HIGH)


# ----------------------------------------------------------------------------- demo

@dataclass
class GPTConfig:
    vocab_size: int = 512          # multiple of 128 -> lane-dense logits tiles
    seq_len: int = 8
    embedding_dim: int = 128       # multiple of 128 -> lane-dense hidden tiles
    num_heads: int = 4
    hidden_dim: int = 256          # multiple of 128
    num_decoder_layers: int = 2
    embedding_drop_prob: float = 0.1
    residual_drop_prob: float = 0.1


def init_params(key, cfg):
    D, Hd, H = cfg.embedding_dim, cfg.hidden_dim, cfg.num_heads
    dh = D // H
    std = 0.02
    n_layer_keys = 14
    keys = jax.random.split(key, 3 + cfg.num_decoder_layers * n_layer_keys)
    nrm = lambda k, shape: (std * jax.random.normal(k, shape)).astype(jnp.float32)
    params = {
        "tok_emb": nrm(keys[0], (cfg.vocab_size, D)),
        "pos_emb": nrm(keys[1], (1, cfg.seq_len, D)),
        "lm_head": nrm(keys[2], (D, cfg.vocab_size)),   # stored pre-transposed: logits = x @ lm_head
        "layers": [],
    }
    for li in range(cfg.num_decoder_layers):
        k = keys[3 + li * n_layer_keys: 3 + (li + 1) * n_layer_keys]
        params["layers"].append({
            # per-head q/k/v weights laid out (H, D, dh); output proj as (H, dh, D).
            "wq": nrm(k[0], (H, D, dh)), "bq": nrm(k[1], (H, 1, dh)),
            "wk": nrm(k[2], (H, D, dh)), "bk": nrm(k[3], (H, 1, dh)),
            "wv": nrm(k[4], (H, D, dh)), "bv": nrm(k[5], (H, 1, dh)),
            "wo": nrm(k[6], (H, dh, D)), "bo": nrm(k[7], (D,)),
            "ln1_g": jnp.ones((D,), jnp.float32), "ln1_b": nrm(k[8], (D,)),
            "w1": nrm(k[9], (D, Hd)), "b1": nrm(k[10], (Hd,)),
            "w2": nrm(k[11], (Hd, D)), "b2": nrm(k[12], (D,)),
            "ln2_g": jnp.ones((D,), jnp.float32), "ln2_b": nrm(k[13], (D,)),
        })
    return params


if __name__ == "__main__":
    cfg = GPTConfig()
    key = jax.random.PRNGKey(0)
    kp, kt = jax.random.split(key)
    params = init_params(kp, cfg)
    tokens = jax.random.randint(kt, (2, cfg.seq_len), 0, cfg.vocab_size, dtype=jnp.int32)

    logits = gpt_forward(tokens, params)
    logits = jax.block_until_ready(logits)

    ref = gpt_reference(tokens, params)
    assert logits.shape == (2, cfg.seq_len, cfg.vocab_size)
    max_err = jnp.max(jnp.abs(logits - ref))
    assert jnp.allclose(logits, ref, atol=1e-3, rtol=1e-3), (
        f"mismatch vs reference: max |diff| = {max_err}")

    print("KERNEL_OK")
</pallas_src>

<mosaic_0001>
module attributes {stable_mosaic.version = 11 : i64} {
  func.func @mha_residual_kernel(%arg0: i32, %arg1: memref<1x8x128xf32, #tpu.memory_space<vmem>>, %arg2: memref<4x128x32xf32, #tpu.memory_space<vmem>>, %arg3: memref<4x1x32xf32, #tpu.memory_space<vmem>>, %arg4: memref<4x128x32xf32, #tpu.memory_space<vmem>>, %arg5: memref<4x1x32xf32, #tpu.memory_space<vmem>>, %arg6: memref<4x128x32xf32, #tpu.memory_space<vmem>>, %arg7: memref<4x1x32xf32, #tpu.memory_space<vmem>>, %arg8: memref<4x32x128xf32, #tpu.memory_space<vmem>>, %arg9: memref<1x128xf32, #tpu.memory_space<vmem>>, %arg10: memref<1x128xf32, #tpu.memory_space<vmem>>, %arg11: memref<1x128xf32, #tpu.memory_space<vmem>>, %arg12: memref<1x8x128xf32, #tpu.memory_space<vmem>>) attributes {dimension_semantics = [#tpu.dimension_semantics<parallel>], iteration_bounds = array<i64: 2>, scalar_prefetch = 0 : i64, scratch_operands = 0 : i64, tpu.core_type = #tpu.core_type<tc>, window_params = [{transform_indices = @transform_0, window_bounds = array<i64: 1, 8, 128>}, {pipeline_mode = #tpu.pipeline_mode<synchronous>, transform_indices = @transform_1, window_bounds = array<i64: 4, 128, 32>}, {pipeline_mode = #tpu.pipeline_mode<synchronous>, transform_indices = @transform_2, window_bounds = array<i64: 4, 1, 32>}, {pipeline_mode = #tpu.pipeline_mode<synchronous>, transform_indices = @transform_3, window_bounds = array<i64: 4, 128, 32>}, {pipeline_mode = #tpu.pipeline_mode<synchronous>, transform_indices = @transform_4, window_bounds = array<i64: 4, 1, 32>}, {pipeline_mode = #tpu.pipeline_mode<synchronous>, transform_indices = @transform_5, window_bounds = array<i64: 4, 128, 32>}, {pipeline_mode = #tpu.pipeline_mode<synchronous>, transform_indices = @transform_6, window_bounds = array<i64: 4, 1, 32>}, {pipeline_mode = #tpu.pipeline_mode<synchronous>, transform_indices = @transform_7, window_bounds = array<i64: 4, 32, 128>}, {pipeline_mode = #tpu.pipeline_mode<synchronous>, transform_indices = @transform_8, window_bounds = array<i64: 1, 128>}, {pipeline_mode = #tpu.pipeline_mode<synchronous>, transform_indices = @transform_9, window_bounds = array<i64: 1, 128>}, {pipeline_mode = #tpu.pipeline_mode<synchronous>, transform_indices = @transform_10, window_bounds = array<i64: 1, 128>}, {transform_indices = @transform_11, window_bounds = array<i64: 1, 8, 128>}]} {
    %c0 = arith.constant 0 : index
    %c0_0 = arith.constant 0 : index
    %c0_1 = arith.constant 0 : index
    %0 = vector.load %arg1[%c0, %c0_0, %c0_1] : memref<1x8x128xf32, #tpu.memory_space<vmem>>, vector<1x8x128xf32>
    %1 = vector.shape_cast %0 : vector<1x8x128xf32> to vector<8x128xf32>
    %2 = tpu.iota {dimensions = array<i32: 0>} : vector<8x8xi32>
    %3 = tpu.iota {dimensions = array<i32: 1>} : vector<8x8xi32>
    %4 = arith.cmpi sge, %2, %3 : vector<8x8xi32>
    %cst = arith.constant 0.000000e+00 : f32
    %5 = vector.broadcast %cst : f32 to vector<8x128xf32>
    %c0_2 = arith.constant 0 : index
    %c0_3 = arith.constant 0 : index
    %c0_4 = arith.constant 0 : index
    %6 = vector.load %arg2[%c0_2, %c0_3, %c0_4] : memref<4x128x32xf32, #tpu.memory_space<vmem>>, vector<1x128x32xf32>
    %7 = vector.shape_cast %6 : vector<1x128x32xf32> to vector<128x32xf32>
    %cst_5 = arith.constant dense<0.000000e+00> : vector<8x32xf32>
    %8 = tpu.matmul %1, %7, %cst_5 {dimension_numbers = #tpu.dot_dimension_numbers<[1], [0], [0], [1], [0, 0, 1, 1], [], []>} : vector<8x128xf32>, vector<128x32xf32>, vector<8x32xf32> -> vector<8x32xf32>
    %c0_6 = arith.constant 0 : index
    %c0_7 = arith.constant 0 : index
    %c0_8 = arith.constant 0 : index
    %9 = vector.load %arg3[%c0_6, %c0_7, %c0_8] : memref<4x1x32xf32, #tpu.memory_space<vmem>>, vector<1x1x32xf32>
    %10 = vector.shape_cast %9 : vector<1x1x32xf32> to vector<1x32xf32>
    %11 = vector.broadcast %10 : vector<1x32xf32> to vector<8x32xf32>
    %12 = arith.addf %8, %11 : vector<8x32xf32>
    %c0_9 = arith.constant 0 : index
    %c0_10 = arith.constant 0 : index
    %c0_11 = arith.constant 0 : index
    %13 = vector.load %arg4[%c0_9, %c0_10, %c0_11] : memref<4x128x32xf32, #tpu.memory_space<vmem>>, vector<1x128x32xf32>
    %14 = vector.shape_cast %13 : vector<1x128x32xf32> to vector<128x32xf32>
    %cst_12 = arith.constant dense<0.000000e+00> : vector<8x32xf32>
    %15 = tpu.matmul %1, %14, %cst_12 {dimension_numbers = #tpu.dot_dimension_numbers<[1], [0], [0], [1], [0, 0, 1, 1], [], []>} : vector<8x128xf32>, vector<128x32xf32>, vector<8x32xf32> -> vector<8x32xf32>
    %c0_13 = arith.constant 0 : index
    %c0_14 = arith.constant 0 : index
    %c0_15 = arith.constant 0 : index
    %16 = vector.load %arg5[%c0_13, %c0_14, %c0_15] : memref<4x1x32xf32, #tpu.memory_space<vmem>>, vector<1x1x32xf32>
    %17 = vector.shape_cast %16 : vector<1x1x32xf32> to vector<1x32xf32>
    %18 = vector.broadcast %17 : vector<1x32xf32> to vector<8x32xf32>
    %19 = arith.addf %15, %18 : vector<8x32xf32>
    %c0_16 = arith.constant 0 : index
    %c0_17 = arith.constant 0 : index
    %c0_18 = arith.constant 0 : index
    %20 = vector.load %arg6[%c0_16, %c0_17, %c0_18] : memref<4x128x32xf32, #tpu.memory_space<vmem>>, vector<1x128x32xf32>
    %21 = vector.shape_cast %20 : vector<1x128x32xf32> to vector<128x32xf32>
    %cst_19 = arith.constant dense<0.000000e+00> : vector<8x32xf32>
    %22 = tpu.matmul %1, %21, %cst_19 {dimension_numbers = #tpu.dot_dimension_numbers<[1], [0], [0], [1], [0, 0, 1, 1], [], []>} : vector<8x128xf32>, vector<128x32xf32>, vector<8x32xf32> -> vector<8x32xf32>
    %c0_20 = arith.constant 0 : index
    %c0_21 = arith.constant 0 : index
    %c0_22 = arith.constant 0 : index
    %23 = vector.load %arg7[%c0_20, %c0_21, %c0_22] : memref<4x1x32xf32, #tpu.memory_space<vmem>>, vector<1x1x32xf32>
    %24 = vector.shape_cast %23 : vector<1x1x32xf32> to vector<1x32xf32>
    %25 = vector.broadcast %24 : vector<1x32xf32> to vector<8x32xf32>
    %26 = arith.addf %22, %25 : vector<8x32xf32>
    %cst_23 = arith.constant dense<0.000000e+00> : vector<8x8xf32>
    %27 = tpu.matmul %12, %19, %cst_23 {dimension_numbers = #tpu.dot_dimension_numbers<[1], [1], [0], [0], [0, 0, 1, 0], [], []>} : vector<8x32xf32>, vector<8x32xf32>, vector<8x8xf32> -> vector<8x8xf32>
    %cst_24 = arith.constant 0.176776692 : f32
    %28 = vector.broadcast %cst_24 : f32 to vector<8x8xf32>
    %29 = arith.mulf %27, %28 : vector<8x8xf32>
    %cst_25 = arith.constant -1.000000e+30 : f32
    %30 = vector.broadcast %cst_25 : f32 to vector<8x8xf32>
    %31 = arith.select %4, %29, %30 : vector<8x8xi1>, vector<8x8xf32>
    %cst_26 = arith.constant dense<0xFF800000> : vector<8xf32>
    %32 = vector.multi_reduction <maximumf>, %31, %cst_26 [1] : vector<8x8xf32> to vector<8xf32>
    %33 = vector.shape_cast %32 : vector<8xf32> to vector<8x1xf32>
    %34 = vector.broadcast %33 : vector<8x1xf32> to vector<8x8xf32>
    %35 = arith.subf %31, %34 : vector<8x8xf32>
    %36 = math.exp %35 : vector<8x8xf32>
    %cst_27 = arith.constant dense<0.000000e+00> : vector<8xf32>
    %37 = vector.multi_reduction <add>, %36, %cst_27 [1] : vector<8x8xf32> to vector<8xf32>
    %38 = vector.shape_cast %37 : vector<8xf32> to vector<8x1xf32>
    %39 = vector.broadcast %38 : vector<8x1xf32> to vector<8x8xf32>
    %40 = arith.divf %36, %39 : vector<8x8xf32>
    %cst_28 = arith.constant dense<0.000000e+00> : vector<8x32xf32>
    %41 = tpu.matmul %40, %26, %cst_28 {dimension_numbers = #tpu.dot_dimension_numbers<[1], [0], [0], [1], [0, 0, 1, 1], [], []>} : vector<8x8xf32>, vector<8x32xf32>, vector<8x32xf32> -> vector<8x32xf32>
    %c0_29 = arith.constant 0 : index
    %c0_30 = arith.constant 0 : index
    %c0_31 = arith.constant 0 : index
    %42 = vector.load %arg8[%c0_29, %c0_30, %c0_31] : memref<4x32x128xf32, #tpu.memory_space<vmem>>, vector<1x32x128xf32>
    %43 = vector.shape_cast %42 : vector<1x32x128xf32> to vector<32x128xf32>
    %cst_32 = arith.constant dense<0.000000e+00> : vector<8x128xf32>
    %44 = tpu.matmul %41, %43, %cst_32 {dimension_numbers = #tpu.dot_dimension_numbers<[1], [0], [0], [1], [0, 0, 1, 1], [], []>} : vector<8x32xf32>, vector<32x128xf32>, vector<8x128xf32> -> vector<8x128xf32>
    %45 = arith.addf %5, %44 : vector<8x128xf32>
    %c1 = arith.constant 1 : index
    %c0_33 = arith.constant 0 : index
    %c0_34 = arith.constant 0 : index
    %46 = vector.load %arg2[%c1, %c0_33, %c0_34] : memref<4x128x32xf32, #tpu.memory_space<vmem>>, vector<1x128x32xf32>
    %47 = vector.shape_cast %46 : vector<1x128x32xf32> to vector<128x32xf32>
    %cst_35 = arith.constant dense<0.000000e+00> : vector<8x32xf32>
    %48 = tpu.matmul %1, %47, %cst_35 {dimension_numbers = #tpu.dot_dimension_numbers<[1], [0], [0], [1], [0, 0, 1, 1], [], []>} : vector<8x128xf32>, vector<128x32xf32>, vector<8x32xf32> -> vector<8x32xf32>
    %c1_36 = arith.constant 1 : index
    %c0_37 = arith.constant 0 : index
    %c0_38 = arith.constant 0 : index
    %49 = vector.load %arg3[%c1_36, %c0_37, %c0_38] : memref<4x1x32xf32, #tpu.memory_space<vmem>>, vector<1x1x32xf32>
    %50 = vector.shape_cast %49 : vector<1x1x32xf32> to vector<1x32xf32>
    %51 = vector.broadcast %50 : vector<1x32xf32> to vector<8x32xf32>
    %52 = arith.addf %48, %51 : vector<8x32xf32>
    %c1_39 = arith.constant 1 : index
    %c0_40 = arith.constant 0 : index
    %c0_41 = arith.constant 0 : index
    %53 = vector.load %arg4[%c1_39, %c0_40, %c0_41] : memref<4x128x32xf32, #tpu.memory_space<vmem>>, vector<1x128x32xf32>
    %54 = vector.shape_cast %53 : vector<1x128x32xf32> to vector<128x32xf32>
    %cst_42 = arith.constant dense<0.000000e+00> : vector<8x32xf32>
    %55 = tpu.matmul %1, %54, %cst_42 {dimension_numbers = #tpu.dot_dimension_numbers<[1], [0], [0], [1], [0, 0, 1, 1], [], []>} : vector<8x128xf32>, vector<128x32xf32>, vector<8x32xf32> -> vector<8x32xf32>
    %c1_43 = arith.constant 1 : index
    %c0_44 = arith.constant 0 : index
    %c0_45 = arith.constant 0 : index
    %56 = vector.load %arg5[%c1_43, %c0_44, %c0_45] : memref<4x1x32xf32, #tpu.memory_space<vmem>>, vector<1x1x32xf32>
    %57 = vector.shape_cast %56 : vector<1x1x32xf32> to vector<1x32xf32>
    %58 = vector.broadcast %57 : vector<1x32xf32> to vector<8x32xf32>
    %59 = arith.addf %55, %58 : vector<8x32xf32>
    %c1_46 = arith.constant 1 : index
    %c0_47 = arith.constant 0 : index
    %c0_48 = arith.constant 0 : index
    %60 = vector.load %arg6[%c1_46, %c0_47, %c0_48] : memref<4x128x32xf32, #tpu.memory_space<vmem>>, vector<1x128x32xf32>
    %61 = vector.shape_cast %60 : vector<1x128x32xf32> to vector<128x32xf32>
    %cst_49 = arith.constant dense<0.000000e+00> : vector<8x32xf32>
    %62 = tpu.matmul %1, %61, %cst_49 {dimension_numbers = #tpu.dot_dimension_numbers<[1], [0], [0], [1], [0, 0, 1, 1], [], []>} : vector<8x128xf32>, vector<128x32xf32>, vector<8x32xf32> -> vector<8x32xf32>
    %c1_50 = arith.constant 1 : index
    %c0_51 = arith.constant 0 : index
    %c0_52 = arith.constant 0 : index
    %63 = vector.load %arg7[%c1_50, %c0_51, %c0_52] : memref<4x1x32xf32, #tpu.memory_space<vmem>>, vector<1x1x32xf32>
    %64 = vector.shape_cast %63 : vector<1x1x32xf32> to vector<1x32xf32>
    %65 = vector.broadcast %64 : vector<1x32xf32> to vector<8x32xf32>
    %66 = arith.addf %62, %65 : vector<8x32xf32>
    %cst_53 = arith.constant dense<0.000000e+00> : vector<8x8xf32>
    %67 = tpu.matmul %52, %59, %cst_53 {dimension_numbers = #tpu.dot_dimension_numbers<[1], [1], [0], [0], [0, 0, 1, 0], [], []>} : vector<8x32xf32>, vector<8x32xf32>, vector<8x8xf32> -> vector<8x8xf32>
    %cst_54 = arith.constant 0.176776692 : f32
    %68 = vector.broadcast %cst_54 : f32 to vector<8x8xf32>
    %69 = arith.mulf %67, %68 : vector<8x8xf32>
    %cst_55 = arith.constant -1.000000e+30 : f32
    %70 = vector.broadcast %cst_55 : f32 to vector<8x8xf32>
    %71 = arith.select %4, %69, %70 : vector<8x8xi1>, vector<8x8xf32>
    %cst_56 = arith.constant dense<0xFF800000> : vector<8xf32>
    %72 = vector.multi_reduction <maximumf>, %71, %cst_56 [1] : vector<8x8xf32> to vector<8xf32>
    %73 = vector.shape_cast %72 : vector<8xf32> to vector<8x1xf32>
    %74 = vector.broadcast %73 : vector<8x1xf32> to vector<8x8xf32>
    %75 = arith.subf %71, %74 : vector<8x8xf32>
    %76 = math.exp %75 : vector<8x8xf32>
    %cst_57 = arith.constant dense<0.000000e+00> : vector<8xf32>
    %77 = vector.multi_reduction <add>, %76, %cst_57 [1] : vector<8x8xf32> to vector<8xf32>
    %78 = vector.shape_cast %77 : vector<8xf32> to vector<8x1xf32>
    %79 = vector.broadcast %78 : vector<8x1xf32> to vector<8x8xf32>
    %80 = arith.divf %76, %79 : vector<8x8xf32>
    %cst_58 = arith.constant dense<0.000000e+00> : vector<8x32xf32>
    %81 = tpu.matmul %80, %66, %cst_58 {dimension_numbers = #tpu.dot_dimension_numbers<[1], [0], [0], [1], [0, 0, 1, 1], [], []>} : vector<8x8xf32>, vector<8x32xf32>, vector<8x32xf32> -> vector<8x32xf32>
    %c1_59 = arith.constant 1 : index
    %c0_60 = arith.constant 0 : index
    %c0_61 = arith.constant 0 : index
    %82 = vector.load %arg8[%c1_59, %c0_60, %c0_61] : memref<4x32x128xf32, #tpu.memory_space<vmem>>, vector<1x32x128xf32>
    %83 = vector.shape_cast %82 : vector<1x32x128xf32> to vector<32x128xf32>
    %cst_62 = arith.constant dense<0.000000e+00> : vector<8x128xf32>
    %84 = tpu.matmul %81, %83, %cst_62 {dimension_numbers = #tpu.dot_dimension_numbers<[1], [0], [0], [1], [0, 0, 1, 1], [], []>} : vector<8x32xf32>, vector<32x128xf32>, vector<8x128xf32> -> vector<8x128xf32>
    %85 = arith.addf %45, %84 : vector<8x128xf32>
    %c2 = arith.constant 2 : index
    %c0_63 = arith.constant 0 : index
    %c0_64 = arith.constant 0 : index
    %86 = vector.load %arg2[%c2, %c0_63, %c0_64] : memref<4x128x32xf32, #tpu.memory_space<vmem>>, vector<1x128x32xf32>
    %87 = vector.shape_cast %86 : vector<1x128x32xf32> to vector<128x32xf32>
    %cst_65 = arith.constant dense<0.000000e+00> : vector<8x32xf32>
    %88 = tpu.matmul %1, %87, %cst_65 {dimension_numbers = #tpu.dot_dimension_numbers<[1], [0], [0], [1], [0, 0, 1, 1], [], []>} : vector<8x128xf32>, vector<128x32xf32>, vector<8x32xf32> -> vector<8x32xf32>
    %c2_66 = arith.constant 2 : index
    %c0_67 = arith.constant 0 : index
    %c0_68 = arith.constant 0 : index
    %89 = vector.load %arg3[%c2_66, %c0_67, %c0_68] : memref<4x1x32xf32, #tpu.memory_space<vmem>>, vector<1x1x32xf32>
    %90 = vector.shape_cast %89 : vector<1x1x32xf32> to vector<1x32xf32>
    %91 = vector.broadcast %90 : vector<1x32xf32> to vector<8x32xf32>
    %92 = arith.addf %88, %91 : vector<8x32xf32>
    %c2_69 = arith.constant 2 : index
    %c0_70 = arith.constant 0 : index
    %c0_71 = arith.constant 0 : index
    %93 = vector.load %arg4[%c2_69, %c0_70, %c0_71] : memref<4x128x32xf32, #tpu.memory_space<vmem>>, vector<1x128x32xf32>
    %94 = vector.shape_cast %93 : vector<1x128x32xf32> to vector<128x32xf32>
    %cst_72 = arith.constant dense<0.000000e+00> : vector<8x32xf32>
    %95 = tpu.matmul %1, %94, %cst_72 {dimension_numbers = #tpu.dot_dimension_numbers<[1], [0], [0], [1], [0, 0, 1, 1], [], []>} : vector<8x128xf32>, vector<128x32xf32>, vector<8x32xf32> -> vector<8x32xf32>
    %c2_73 = arith.constant 2 : index
    %c0_74 = arith.constant 0 : index
    %c0_75 = arith.constant 0 : index
    %96 = vector.load %arg5[%c2_73, %c0_74, %c0_75] : memref<4x1x32xf32, #tpu.memory_space<vmem>>, vector<1x1x32xf32>
    %97 = vector.shape_cast %96 : vector<1x1x32xf32> to vector<1x32xf32>
    %98 = vector.broadcast %97 : vector<1x32xf32> to vector<8x32xf32>
    %99 = arith.addf %95, %98 : vector<8x32xf32>
    %c2_76 = arith.constant 2 : index
    %c0_77 = arith.constant 0 : index
    %c0_78 = arith.constant 0 : index
    %100 = vector.load %arg6[%c2_76, %c0_77, %c0_78] : memref<4x128x32xf32, #tpu.memory_space<vmem>>, vector<1x128x32xf32>
    %101 = vector.shape_cast %100 : vector<1x128x32xf32> to vector<128x32xf32>
    %cst_79 = arith.constant dense<0.000000e+00> : vector<8x32xf32>
    %102 = tpu.matmul %1, %101, %cst_79 {dimension_numbers = #tpu.dot_dimension_numbers<[1], [0], [0], [1], [0, 0, 1, 1], [], []>} : vector<8x128xf32>, vector<128x32xf32>, vector<8x32xf32> -> vector<8x32xf32>
    %c2_80 = arith.constant 2 : index
    %c0_81 = arith.constant 0 : index
    %c0_82 = arith.constant 0 : index
    %103 = vector.load %arg7[%c2_80, %c0_81, %c0_82] : memref<4x1x32xf32, #tpu.memory_space<vmem>>, vector<1x1x32xf32>
    %104 = vector.shape_cast %103 : vector<1x1x32xf32> to vector<1x32xf32>
    %105 = vector.broadcast %104 : vector<1x32xf32> to vector<8x32xf32>
    %106 = arith.addf %102, %105 : vector<8x32xf32>
    %cst_83 = arith.constant dense<0.000000e+00> : vector<8x8xf32>
    %107 = tpu.matmul %92, %99, %cst_83 {dimension_numbers = #tpu.dot_dimension_numbers<[1], [1], [0], [0], [0, 0, 1, 0], [], []>} : vector<8x32xf32>, vector<8x32xf32>, vector<8x8xf32> -> vector<8x8xf32>
    %cst_84 = arith.constant 0.176776692 : f32
    %108 = vector.broadcast %cst_84 : f32 to vector<8x8xf32>
    %109 = arith.mulf %107, %108 : vector<8x8xf32>
    %cst_85 = arith.constant -1.000000e+30 : f32
    %110 = vector.broadcast %cst_85 : f32 to vector<8x8xf32>
    %111 = arith.select %4, %109, %110 : vector<8x8xi1>, vector<8x8xf32>
    %cst_86 = arith.constant dense<0xFF800000> : vector<8xf32>
    %112 = vector.multi_reduction <maximumf>, %111, %cst_86 [1] : vector<8x8xf32> to vector<8xf32>
    %113 = vector.shape_cast %112 : vector<8xf32> to vector<8x1xf32>
    %114 = vector.broadcast %113 : vector<8x1xf32> to vector<8x8xf32>
    %115 = arith.subf %111, %114 : vector<8x8xf32>
    %116 = math.exp %115 : vector<8x8xf32>
    %cst_87 = arith.constant dense<0.000000e+00> : vector<8xf32>
    %117 = vector.multi_reduction <add>, %116, %cst_87 [1] : vector<8x8xf32> to vector<8xf32>
    %118 = vector.shape_cast %117 : vector<8xf32> to vector<8x1xf32>
    %119 = vector.broadcast %118 : vector<8x1xf32> to vector<8x8xf32>
    %120 = arith.divf %116, %119 : vector<8x8xf32>
    %cst_88 = arith.constant dense<0.000000e+00> : vector<8x32xf32>
    %121 = tpu.matmul %120, %106, %cst_88 {dimension_numbers = #tpu.dot_dimension_numbers<[1], [0], [0], [1], [0, 0, 1, 1], [], []>} : vector<8x8xf32>, vector<8x32xf32>, vector<8x32xf32> -> vector<8x32xf32>
    %c2_89 = arith.constant 2 : index
    %c0_90 = arith.constant 0 : index
    %c0_91 = arith.constant 0 : index
    %122 = vector.load %arg8[%c2_89, %c0_90, %c0_91] : memref<4x32x128xf32, #tpu.memory_space<vmem>>, vector<1x32x128xf32>
    %123 = vector.shape_cast %122 : vector<1x32x128xf32> to vector<32x128xf32>
    %cst_92 = arith.constant dense<0.000000e+00> : vector<8x128xf32>
    %124 = tpu.matmul %121, %123, %cst_92 {dimension_numbers = #tpu.dot_dimension_numbers<[1], [0], [0], [1], [0, 0, 1, 1], [], []>} : vector<8x32xf32>, vector<32x128xf32>, vector<8x128xf32> -> vector<8x128xf32>
    %125 = arith.addf %85, %124 : vector<8x128xf32>
    %c3 = arith.constant 3 : index
    %c0_93 = arith.constant 0 : index
    %c0_94 = arith.constant 0 : index
    %126 = vector.load %arg2[%c3, %c0_93, %c0_94] : memref<4x128x32xf32, #tpu.memory_space<vmem>>, vector<1x128x32xf32>
    %127 = vector.shape_cast %126 : vector<1x128x32xf32> to vector<128x32xf32>
    %cst_95 = arith.constant dense<0.000000e+00> : vector<8x32xf32>
    %128 = tpu.matmul %1, %127, %cst_95 {dimension_numbers = #tpu.dot_dimension_numbers<[1], [0], [0], [1], [0, 0, 1, 1], [], []>} : vector<8x128xf32>, vector<128x32xf32>, vector<8x32xf32> -> vector<8x32xf32>
    %c3_96 = arith.constant 3 : index
    %c0_97 = arith.constant 0 : index
    %c0_98 = arith.constant 0 : index
    %129 = vector.load %arg3[%c3_96, %c0_97, %c0_98] : memref<4x1x32xf32, #tpu.memory_space<vmem>>, vector<1x1x32xf32>
    %130 = vector.shape_cast %129 : vector<1x1x32xf32> to vector<1x32xf32>
    %131 = vector.broadcast %130 : vector<1x32xf32> to vector<8x32xf32>
    %132 = arith.addf %128, %131 : vector<8x32xf32>
    %c3_99 = arith.constant 3 : index
    %c0_100 = arith.constant 0 : index
    %c0_101 = arith.constant 0 : index
    %133 = vector.load %arg4[%c3_99, %c0_100, %c0_101] : memref<4x128x32xf32, #tpu.memory_space<vmem>>, vector<1x128x32xf32>
    %134 = vector.shape_cast %133 : vector<1x128x32xf32> to vector<128x32xf32>
    %cst_102 = arith.constant dense<0.000000e+00> : vector<8x32xf32>
    %135 = tpu.matmul %1, %134, %cst_102 {dimension_numbers = #tpu.dot_dimension_numbers<[1], [0], [0], [1], [0, 0, 1, 1], [], []>} : vector<8x128xf32>, vector<128x32xf32>, vector<8x32xf32> -> vector<8x32xf32>
    %c3_103 = arith.constant 3 : index
    %c0_104 = arith.constant 0 : index
    %c0_105 = arith.constant 0 : index
    %136 = vector.load %arg5[%c3_103, %c0_104, %c0_105] : memref<4x1x32xf32, #tpu.memory_space<vmem>>, vector<1x1x32xf32>
    %137 = vector.shape_cast %136 : vector<1x1x32xf32> to vector<1x32xf32>
    %138 = vector.broadcast %137 : vector<1x32xf32> to vector<8x32xf32>
    %139 = arith.addf %135, %138 : vector<8x32xf32>
    %c3_106 = arith.constant 3 : index
    %c0_107 = arith.constant 0 : index
    %c0_108 = arith.constant 0 : index
    %140 = vector.load %arg6[%c3_106, %c0_107, %c0_108] : memref<4x128x32xf32, #tpu.memory_space<vmem>>, vector<1x128x32xf32>
    %141 = vector.shape_cast %140 : vector<1x128x32xf32> to vector<128x32xf32>
    %cst_109 = arith.constant dense<0.000000e+00> : vector<8x32xf32>
    %142 = tpu.matmul %1, %141, %cst_109 {dimension_numbers = #tpu.dot_dimension_numbers<[1], [0], [0], [1], [0, 0, 1, 1], [], []>} : vector<8x128xf32>, vector<128x32xf32>, vector<8x32xf32> -> vector<8x32xf32>
    %c3_110 = arith.constant 3 : index
    %c0_111 = arith.constant 0 : index
    %c0_112 = arith.constant 0 : index
    %143 = vector.load %arg7[%c3_110, %c0_111, %c0_112] : memref<4x1x32xf32, #tpu.memory_space<vmem>>, vector<1x1x32xf32>
    %144 = vector.shape_cast %143 : vector<1x1x32xf32> to vector<1x32xf32>
    %145 = vector.broadcast %144 : vector<1x32xf32> to vector<8x32xf32>
    %146 = arith.addf %142, %145 : vector<8x32xf32>
    %cst_113 = arith.constant dense<0.000000e+00> : vector<8x8xf32>
    %147 = tpu.matmul %132, %139, %cst_113 {dimension_numbers = #tpu.dot_dimension_numbers<[1], [1], [0], [0], [0, 0, 1, 0], [], []>} : vector<8x32xf32>, vector<8x32xf32>, vector<8x8xf32> -> vector<8x8xf32>
    %cst_114 = arith.constant 0.176776692 : f32
    %148 = vector.broadcast %cst_114 : f32 to vector<8x8xf32>
    %149 = arith.mulf %147, %148 : vector<8x8xf32>
    %cst_115 = arith.constant -1.000000e+30 : f32
    %150 = vector.broadcast %cst_115 : f32 to vector<8x8xf32>
    %151 = arith.select %4, %149, %150 : vector<8x8xi1>, vector<8x8xf32>
    %cst_116 = arith.constant dense<0xFF800000> : vector<8xf32>
    %152 = vector.multi_reduction <maximumf>, %151, %cst_116 [1] : vector<8x8xf32> to vector<8xf32>
    %153 = vector.shape_cast %152 : vector<8xf32> to vector<8x1xf32>
    %154 = vector.broadcast %153 : vector<8x1xf32> to vector<8x8xf32>
    %155 = arith.subf %151, %154 : vector<8x8xf32>
    %156 = math.exp %155 : vector<8x8xf32>
    %cst_117 = arith.constant dense<0.000000e+00> : vector<8xf32>
    %157 = vector.multi_reduction <add>, %156, %cst_117 [1] : vector<8x8xf32> to vector<8xf32>
    %158 = vector.shape_cast %157 : vector<8xf32> to vector<8x1xf32>
    %159 = vector.broadcast %158 : vector<8x1xf32> to vector<8x8xf32>
    %160 = arith.divf %156, %159 : vector<8x8xf32>
    %cst_118 = arith.constant dense<0.000000e+00> : vector<8x32xf32>
    %161 = tpu.matmul %160, %146, %cst_118 {dimension_numbers = #tpu.dot_dimension_numbers<[1], [0], [0], [1], [0, 0, 1, 1], [], []>} : vector<8x8xf32>, vector<8x32xf32>, vector<8x32xf32> -> vector<8x32xf32>
    %c3_119 = arith.constant 3 : index
    %c0_120 = arith.constant 0 : index
    %c0_121 = arith.constant 0 : index
    %162 = vector.load %arg8[%c3_119, %c0_120, %c0_121] : memref<4x32x128xf32, #tpu.memory_space<vmem>>, vector<1x32x128xf32>
    %163 = vector.shape_cast %162 : vector<1x32x128xf32> to vector<32x128xf32>
    %cst_122 = arith.constant dense<0.000000e+00> : vector<8x128xf32>
    %164 = tpu.matmul %161, %163, %cst_122 {dimension_numbers = #tpu.dot_dimension_numbers<[1], [0], [0], [1], [0, 0, 1, 1], [], []>} : vector<8x32xf32>, vector<32x128xf32>, vector<8x128xf32> -> vector<8x128xf32>
    %165 = arith.addf %125, %164 : vector<8x128xf32>
    %166 = arith.addf %1, %165 : vector<8x128xf32>
    %c0_123 = arith.constant 0 : index
    %c0_124 = arith.constant 0 : index
    %167 = vector.load %arg9[%c0_123, %c0_124] : memref<1x128xf32, #tpu.memory_space<vmem>>, vector<1x128xf32>
    %168 = vector.broadcast %167 : vector<1x128xf32> to vector<8x128xf32>
    %169 = arith.addf %166, %168 : vector<8x128xf32>
    %c0_125 = arith.constant 0 : index
    %c0_126 = arith.constant 0 : index
    %170 = vector.load %arg10[%c0_125, %c0_126] : memref<1x128xf32, #tpu.memory_space<vmem>>, vector<1x128xf32>
    %c0_127 = arith.constant 0 : index
    %c0_128 = arith.constant 0 : index
    %171 = vector.load %arg11[%c0_127, %c0_128] : memref<1x128xf32, #tpu.memory_space<vmem>>, vector<1x128xf32>
    %cst_129 = arith.constant dense<0.000000e+00> : vector<8xf32>
    %172 = vector.multi_reduction <add>, %169, %cst_129 [1] : vector<8x128xf32> to vector<8xf32>
    %173 = vector.shape_cast %172 : vector<8xf32> to vector<8x1xf32>
    %cst_130 = arith.constant 7.812500e-03 : f32
    %174 = vector.broadcast %cst_130 : f32 to vector<8x1xf32>
    %175 = arith.mulf %173, %174 : vector<8x1xf32>
    %176 = vector.broadcast %175 : vector<8x1xf32> to vector<8x128xf32>
    %177 = arith.subf %169, %176 : vector<8x128xf32>
    %178 = arith.mulf %177, %177 : vector<8x128xf32>
    %cst_131 = arith.constant dense<0.000000e+00> : vector<8xf32>
    %179 = vector.multi_reduction <add>, %178, %cst_131 [1] : vector<8x128xf32> to vector<8xf32>
    %180 = vector.shape_cast %179 : vector<8xf32> to vector<8x1xf32>
    %cst_132 = arith.constant 7.812500e-03 : f32
    %181 = vector.broadcast %cst_132 : f32 to vector<8x1xf32>
    %182 = arith.mulf %180, %181 : vector<8x1xf32>
    %cst_133 = arith.constant 9.99999974E-6 : f32
    %183 = vector.broadcast %cst_133 : f32 to vector<8x1xf32>
    %184 = arith.addf %182, %183 : vector<8x1xf32>
    %185 = math.rsqrt %184 : vector<8x1xf32>
    %186 = vector.broadcast %185 : vector<8x1xf32> to vector<8x128xf32>
    %187 = arith.mulf %177, %186 : vector<8x128xf32>
    %188 = vector.broadcast %170 : vector<1x128xf32> to vector<8x128xf32>
    %189 = arith.mulf %187, %188 : vector<8x128xf32>
    %190 = vector.broadcast %171 : vector<1x128xf32> to vector<8x128xf32>
    %191 = arith.addf %189, %190 : vector<8x128xf32>
    %c0_134 = arith.constant 0 : index
    %c0_135 = arith.constant 0 : index
    %c0_136 = arith.constant 0 : index
    %192 = vector.load %arg12[%c0_134, %c0_135, %c0_136] : memref<1x8x128xf32, #tpu.memory_space<vmem>>, vector<1x8x128xf32>
    %193 = vector.shape_cast %192 : vector<1x8x128xf32> to vector<8x128xf32>
    %194 = vector.shape_cast %191 : vector<8x128xf32> to vector<1x8x128xf32>
    tpu.vector_store %arg12[%c0_134, %c0_135, %c0_136], %194 {strides = array<i32>} : memref<1x8x128xf32, #tpu.memory_space<vmem>>, vector<1x8x128xf32>,
    return
  }
  func.func @transform_0(%arg0: i32) -> (i32, i32, i32) {
    %c0_i32 = arith.constant 0 : i32
    %c0_i32_0 = arith.constant 0 : i32
    %c0_i32_1 = arith.constant 0 : i32
    return %arg0, %c0_i32, %c0_i32_0 : i32, i32, i32
  }
  func.func @transform_1(%arg0: i32) -> (i32, i32, i32) {
    %c0_i32 = arith.constant 0 : i32
    %c0_i32_0 = arith.constant 0 : i32
    %c0_i32_1 = arith.constant 0 : i32
    %c0_i32_2 = arith.constant 0 : i32
    return %c0_i32, %c0_i32_0, %c0_i32_1 : i32, i32, i32
  }
  func.func @transform_2(%arg0: i32) -> (i32, i32, i32) {
    %c0_i32 = arith.constant 0 : i32
    %c0_i32_0 = arith.constant 0 : i32
    %c0_i32_1 = arith.constant 0 : i32
    %c0_i32_2 = arith.constant 0 : i32
    return %c0_i32, %c0_i32_0, %c0_i32_1 : i32, i32, i32
  }
  func.func @transform_3(%arg0: i32) -> (i32, i32, i32) {
    %c0_i32 = arith.constant 0 : i32
    %c0_i32_0 = arith.constant 0 : i32
    %c0_i32_1 = arith.constant 0 : i32
    %c0_i32_2 = arith.constant 0 : i32
    return %c0_i32, %c0_i32_0, %c0_i32_1 : i32, i32, i32
  }
  func.func @transform_4(%arg0: i32) -> (i32, i32, i32) {
    %c0_i32 = arith.constant 0 : i32
    %c0_i32_0 = arith.constant 0 : i32
    %c0_i32_1 = arith.constant 0 : i32
    %c0_i32_2 = arith.constant 0 : i32
    return %c0_i32, %c0_i32_0, %c0_i32_1 : i32, i32, i32
  }
  func.func @transform_5(%arg0: i32) -> (i32, i32, i32) {
    %c0_i32 = arith.constant 0 : i32
    %c0_i32_0 = arith.constant 0 : i32
    %c0_i32_1 = arith.constant 0 : i32
    %c0_i32_2 = arith.constant 0 : i32
    return %c0_i32, %c0_i32_0, %c0_i32_1 : i32, i32, i32
  }
  func.func @transform_6(%arg0: i32) -> (i32, i32, i32) {
    %c0_i32 = arith.constant 0 : i32
    %c0_i32_0 = arith.constant 0 : i32
    %c0_i32_1 = arith.constant 0 : i32
    %c0_i32_2 = arith.constant 0 : i32
    return %c0_i32, %c0_i32_0, %c0_i32_1 : i32, i32, i32
  }
  func.func @transform_7(%arg0: i32) -> (i32, i32, i32) {
    %c0_i32 = arith.constant 0 : i32
    %c0_i32_0 = arith.constant 0 : i32
    %c0_i32_1 = arith.constant 0 : i32
    %c0_i32_2 = arith.constant 0 : i32
    return %c0_i32, %c0_i32_0, %c0_i32_1 : i32, i32, i32
  }
  func.func @transform_8(%arg0: i32) -> (i32, i32) {
    %c0_i32 = arith.constant 0 : i32
    %c0_i32_0 = arith.constant 0 : i32
    %c0_i32_1 = arith.constant 0 : i32
    return %c0_i32, %c0_i32_0 : i32, i32
  }
  func.func @transform_9(%arg0: i32) -> (i32, i32) {
    %c0_i32 = arith.constant 0 : i32
    %c0_i32_0 = arith.constant 0 : i32
    %c0_i32_1 = arith.constant 0 : i32
    return %c0_i32, %c0_i32_0 : i32, i32
  }
  func.func @transform_10(%arg0: i32) -> (i32, i32) {
    %c0_i32 = arith.constant 0 : i32
    %c0_i32_0 = arith.constant 0 : i32
    %c0_i32_1 = arith.constant 0 : i32
    return %c0_i32, %c0_i32_0 : i32, i32
  }
  func.func @transform_11(%arg0: i32) -> (i32, i32, i32) {
    %c0_i32 = arith.constant 0 : i32
    %c0_i32_0 = arith.constant 0 : i32
    %c0_i32_1 = arith.constant 0 : i32
    return %arg0, %c0_i32, %c0_i32_0 : i32, i32, i32
  }
}

</mosaic_0001>

<llo_original>
// kernel: tpu_custom_call.1
$region0: #{tpu_custom_call.1}
  #allocation0 [shape = 'u32[]', space=smem, size = 0x4, offset = 0x4, fixed_abs, tag = 'smem constant byte address 0x4 - core index']
  #allocation1 [shape = 'u32[144,128]{1,0:T(1,128)}', space=vmem, size = 0x12000, scoped, tag = 'internal scratch']
  %s0 = inlined_call_operand.vmem [shape: f32[2,8,128], index: 0, kind: input, shape index: {}]
  %s1 = inlined_call_operand.vmem [shape: f32[4,128,32], index: 1, kind: input, shape index: {}]
  %s2 = inlined_call_operand.vmem [shape: f32[4,1,32], index: 2, kind: input, shape index: {}]
  %s3 = inlined_call_operand.vmem [shape: f32[4,128,32], index: 3, kind: input, shape index: {}]
  %s4 = inlined_call_operand.vmem [shape: f32[4,1,32], index: 4, kind: input, shape index: {}]
  %s5 = inlined_call_operand.vmem [shape: f32[4,128,32], index: 5, kind: input, shape index: {}]
  %s6 = inlined_call_operand.vmem [shape: f32[4,1,32], index: 6, kind: input, shape index: {}]
  %s7 = inlined_call_operand.vmem [shape: f32[4,32,128], index: 7, kind: input, shape index: {}]
  %s8 = inlined_call_operand.vmem [shape: f32[1,128], index: 8, kind: input, shape index: {}]
  %s9 = inlined_call_operand.vmem [shape: f32[1,128], index: 9, kind: input, shape index: {}]
  %s10 = inlined_call_operand.vmem [shape: f32[1,128], index: 10, kind: input, shape index: {}]
  %s11 = inlined_call_operand.hbm [shape: f32[2,8,128], index: 11, kind: output, shape index: {}]
  %s12 = sld [smem:[#allocation0]]
  $region77: #{tpu_custom_call.1} parent=0
    _
  %s14 = ssub.s32 1, %s12
  %s15 = scalar_select 0, %s14, %s12
  $region1: #{tpu_custom_call.1} parent=0
    #allocation2 [shape = 'u8[8192]{0}', space=vmem, size = 0x2000, scoped, tag = 'output window, operand 0']
    #allocation3 [shape = 's32[2]{0}', space=sflag, size = 0x8, scoped, tag = 'scoped memory for tpu_custom_call.1']
    %16 = vsyncpa [#allocation3], 0
    %s17 = scalar_lea.sflag [#allocation3], 1
    %18 = vsyncpa %s17, 0
    loop: start=0, step=1, limit=4
    $region2: #{tpu_custom_call.1} parent=1 // loop_pre_header
      _
    $region3: #{tpu_custom_call.1} parent=1 // loop_header
      %s20 = sphi 0, %s24
      %p21 = scmp.ge.s32.totalorder %s20, 4
      %s30 = sphi 0, %s32
      %s33 = sphi 0, %s30
      %s34 = sphi 0, %s33
      %s50 = sphi 0, %s34
      %s54 = sphi 0, %s54
      %s56 = sphi 0, %s54
      %s57 = sphi 0, %s56
      %s71 = sphi 0, %s57
      %s75 = sphi 0, %s75
      %s77 = sphi 0, %s75
      %s78 = sphi 0, %s77
      %s92 = sphi 0, %s78
      %s96 = sphi 0, %s96
      %s98 = sphi 0, %s96
      %s99 = sphi 0, %s98
      %s113 = sphi 0, %s99
      %s117 = sphi 0, %s117
      %s119 = sphi 0, %s117
      %s120 = sphi 0, %s119
      %s134 = sphi 0, %s120
      %s138 = sphi 0, %s138
      %s140 = sphi 0, %s138
      %s141 = sphi 0, %s140
      %s155 = sphi 0, %s141
      %s159 = sphi 0, %s159
      %s161 = sphi 0, %s159
      %s162 = sphi 0, %s161
      %s176 = sphi 0, %s162
      %s180 = sphi 0, %s180
      %s182 = sphi 0, %s180
      %s183 = sphi 0, %s182
      %s197 = sphi 0, %s183
      %s201 = sphi 0, %s201
      %s203 = sphi 0, %s201
      %s204 = sphi 0, %s203
      %s218 = sphi 0, %s204
      %s222 = sphi 0, %s222
      %s224 = sphi 0, %s222
      %s225 = sphi 0, %s224
      %s239 = sphi 0, %s225
      %s243 = sphi 0, %s243
      %s245 = sphi 0, %s243
      %s246 = sphi 0, %s245
      %s260 = sphi 0, %s246
      %s266 = sphi 0, %s268
      %s269 = sphi 0, %s266
      %s270 = sphi 0, %s269
      %s286 = sphi 0, %s270
    $region4: #{tpu_custom_call.1} parent=1 // loop_header_branch
      %23 = sbr.rel (%p21) target = $region8
    $region5: #{tpu_custom_call.1} parent=1 // loop_body
      %s25 = ssub.s32 %s20, 1
      %s26 = ssub.s32 %s20, 2
      %s27 = sadd.s32 %s20, 1
      %s28 = ssub.s32 %s20, %s27
      %p29 = scmp.eq.s32.totalorder %s28, 0
      %s31 = sadd.s32 %s30, 1
      %s32 = scalar_select %p29, %s30, %s31
      %p35 = pneg %p29
      %p36 = scmp.eq.s32.totalorder %s20, 1
      %p37 = por %p35, %p36
      %p38 = scmp.ne.s32.totalorder %s30, %s33
      %p39 = scmp.eq.s32.totalorder %s20, 0
      %p40 = por %p38, %p39
      %p41 = scmp.ne.s32.totalorder %s30, %s33
      %p42 = scmp.eq.s32.totalorder %s25, 1
      %p43 = por %p41, %p42
      %p44 = scmp.ne.s32.totalorder %s33, %s34
      %p45 = scmp.eq.s32.totalorder %s25, 0
      %p46 = por %p44, %p45
      %p47 = scmp.ne.s32.totalorder %s33, %s34
      %p48 = scmp.eq.s32.totalorder %s26, 1
      %p49 = por %p47, %p48
      %p51 = scmp.ne.s32.totalorder %s34, %s50
      %p52 = scmp.eq.s32.totalorder %s26, 0
      %p53 = por %p51, %p52
      %s55 = sadd.s32 %s54, 1
      %p58 = scmp.eq.s32.totalorder %s20, 1
      %p59 = scmp.ne.s32.totalorder %s54, %s56
      %p60 = scmp.eq.s32.totalorder %s20, 0
      %p61 = por %p59, %p60
      %p62 = scmp.ne.s32.totalorder %s54, %s56
      %p63 = scmp.eq.s32.totalorder %s25, 1
      %p64 = por %p62, %p63
      %p65 = scmp.ne.s32.totalorder %s56, %s57
      %p66 = scmp.eq.s32.totalorder %s25, 0
      %p67 = por %p65, %p66
      %p68 = scmp.ne.s32.totalorder %s56, %s57
      %p69 = scmp.eq.s32.totalorder %s26, 1
      %p70 = por %p68, %p69
      %p72 = scmp.ne.s32.totalorder %s57, %s71
      %p73 = scmp.eq.s32.totalorder %s26, 0
      %p74 = por %p72, %p73
      %s76 = sadd.s32 %s75, 1
      %p79 = scmp.eq.s32.totalorder %s20, 1
      %p80 = scmp.ne.s32.totalorder %s75, %s77
      %p81 = scmp.eq.s32.totalorder %s20, 0
      %p82 = por %p80, %p81
      %p83 = scmp.ne.s32.totalorder %s75, %s77
      %p84 = scmp.eq.s32.totalorder %s25, 1
      %p85 = por %p83, %p84
      %p86 = scmp.ne.s32.totalorder %s77, %s78
      %p87 = scmp.eq.s32.totalorder %s25, 0
      %p88 = por %p86, %p87
      %p89 = scmp.ne.s32.totalorder %s77, %s78
      %p90 = scmp.eq.s32.totalorder %s26, 1
      %p91 = por %p89, %p90
      %p93 = scmp.ne.s32.totalorder %s78, %s92
      %p94 = scmp.eq.s32.totalorder %s26, 0
      %p95 = por %p93, %p94
      %s97 = sadd.s32 %s96, 1
      %p100 = scmp.eq.s32.totalorder %s20, 1
      %p101 = scmp.ne.s32.totalorder %s96, %s98
      %p102 = scmp.eq.s32.totalorder %s20, 0
      %p103 = por %p101, %p102
      %p104 = scmp.ne.s32.totalorder %s96, %s98
      %p105 = scmp.eq.s32.totalorder %s25, 1
      %p106 = por %p104, %p105
      %p107 = scmp.ne.s32.totalorder %s98, %s99
      %p108 = scmp.eq.s32.totalorder %s25, 0
      %p109 = por %p107, %p108
      %p110 = scmp.ne.s32.totalorder %s98, %s99
      %p111 = scmp.eq.s32.totalorder %s26, 1
      %p112 = por %p110, %p111
      %p114 = scmp.ne.s32.totalorder %s99, %s113
      %p115 = scmp.eq.s32.totalorder %s26, 0
      %p116 = por %p114, %p115
      %s118 = sadd.s32 %s117, 1
      %p121 = scmp.eq.s32.totalorder %s20, 1
      %p122 = scmp.ne.s32.totalorder %s117, %s119
      %p123 = scmp.eq.s32.totalorder %s20, 0
      %p124 = por %p122, %p123
      %p125 = scmp.ne.s32.totalorder %s117, %s119
      %p126 = scmp.eq.s32.totalorder %s25, 1
      %p127 = por %p125, %p126
      %p128 = scmp.ne.s32.totalorder %s119, %s120
      %p129 = scmp.eq.s32.totalorder %s25, 0
      %p130 = por %p128, %p129
      %p131 = scmp.ne.s32.totalorder %s119, %s120
      %p132 = scmp.eq.s32.totalorder %s26, 1
      %p133 = por %p131, %p132
      %p135 = scmp.ne.s32.totalorder %s120, %s134
      %p136 = scmp.eq.s32.totalorder %s26, 0
      %p137 = por %p135, %p136
      %s139 = sadd.s32 %s138, 1
      %p142 = scmp.eq.s32.totalorder %s20, 1
      %p143 = scmp.ne.s32.totalorder %s138, %s140
      %p144 = scmp.eq.s32.totalorder %s20, 0
      %p145 = por %p143, %p144
      %p146 = scmp.ne.s32.totalorder %s138, %s140
      %p147 = scmp.eq.s32.totalorder %s25, 1
      %p148 = por %p146, %p147
      %p149 = scmp.ne.s32.totalorder %s140, %s141
      %p150 = scmp.eq.s32.totalorder %s25, 0
      %p151 = por %p149, %p150
      %p152 = scmp.ne.s32.totalorder %s140, %s141
      %p153 = scmp.eq.s32.totalorder %s26, 1
      %p154 = por %p152, %p153
      %p156 = scmp.ne.s32.totalorder %s141, %s155
      %p157 = scmp.eq.s32.totalorder %s26, 0
      %p158 = por %p156, %p157
      %s160 = sadd.s32 %s159, 1
      %p163 = scmp.eq.s32.totalorder %s20, 1
      %p164 = scmp.ne.s32.totalorder %s159, %s161
      %p165 = scmp.eq.s32.totalorder %s20, 0
      %p166 = por %p164, %p165
      %p167 = scmp.ne.s32.totalorder %s159, %s161
      %p168 = scmp.eq.s32.totalorder %s25, 1
      %p169 = por %p167, %p168
      %p170 = scmp.ne.s32.totalorder %s161, %s162
      %p171 = scmp.eq.s32.totalorder %s25, 0
      %p172 = por %p170, %p171
      %p173 = scmp.ne.s32.totalorder %s161, %s162
      %p174 = scmp.eq.s32.totalorder %s26, 1
      %p175 = por %p173, %p174
      %p177 = scmp.ne.s32.totalorder %s162, %s176
      %p178 = scmp.eq.s32.totalorder %s26, 0
      %p179 = por %p177, %p178
      %s181 = sadd.s32 %s180, 1
      %p184 = scmp.eq.s32.totalorder %s20, 1
      %p185 = scmp.ne.s32.totalorder %s180, %s182
      %p186 = scmp.eq.s32.totalorder %s20, 0
      %p187 = por %p185, %p186
      %p188 = scmp.ne.s32.totalorder %s180, %s182
      %p189 = scmp.eq.s32.totalorder %s25, 1
      %p190 = por %p188, %p189
      %p191 = scmp.ne.s32.totalorder %s182, %s183
      %p192 = scmp.eq.s32.totalorder %s25, 0
      %p193 = por %p191, %p192
      %p194 = scmp.ne.s32.totalorder %s182, %s183
      %p195 = scmp.eq.s32.totalorder %s26, 1
      %p196 = por %p194, %p195
      %p198 = scmp.ne.s32.totalorder %s183, %s197
      %p199 = scmp.eq.s32.totalorder %s26, 0
      %p200 = por %p198, %p199
      %s202 = sadd.s32 %s201, 1
      %p205 = scmp.eq.s32.totalorder %s20, 1
      %p206 = scmp.ne.s32.totalorder %s201, %s203
      %p207 = scmp.eq.s32.totalorder %s20, 0
      %p208 = por %p206, %p207
      %p209 = scmp.ne.s32.totalorder %s201, %s203
      %p210 = scmp.eq.s32.totalorder %s25, 1
      %p211 = por %p209, %p210
      %p212 = scmp.ne.s32.totalorder %s203, %s204
      %p213 = scmp.eq.s32.totalorder %s25, 0
      %p214 = por %p212, %p213
      %p215 = scmp.ne.s32.totalorder %s203, %s204
      %p216 = scmp.eq.s32.totalorder %s26, 1
      %p217 = por %p215, %p216
      %p219 = scmp.ne.s32.totalorder %s204, %s218
      %p220 = scmp.eq.s32.totalorder %s26, 0
      %p221 = por %p219, %p220
      %s223 = sadd.s32 %s222, 1
      %p226 = scmp.eq.s32.totalorder %s20, 1
      %p227 = scmp.ne.s32.totalorder %s222, %s224
      %p228 = scmp.eq.s32.totalorder %s20, 0
      %p229 = por %p227, %p228
      %p230 = scmp.ne.s32.totalorder %s222, %s224
      %p231 = scmp.eq.s32.totalorder %s25, 1
      %p232 = por %p230, %p231
      %p233 = scmp.ne.s32.totalorder %s224, %s225
      %p234 = scmp.eq.s32.totalorder %s25, 0
      %p235 = por %p233, %p234
      %p236 = scmp.ne.s32.totalorder %s224, %s225
      %p237 = scmp.eq.s32.totalorder %s26, 1
      %p238 = por %p236, %p237
      %p240 = scmp.ne.s32.totalorder %s225, %s239
      %p241 = scmp.eq.s32.totalorder %s26, 0
      %p242 = por %p240, %p241
      %s244 = sadd.s32 %s243, 1
      %p247 = scmp.eq.s32.totalorder %s20, 1
      %p248 = scmp.ne.s32.totalorder %s243, %s245
      %p249 = scmp.eq.s32.totalorder %s20, 0
      %p250 = por %p248, %p249
      %p251 = scmp.ne.s32.totalorder %s243, %s245
      %p252 = scmp.eq.s32.totalorder %s25, 1
      %p253 = por %p251, %p252
      %p254 = scmp.ne.s32.totalorder %s245, %s246
      %p255 = scmp.eq.s32.totalorder %s25, 0
      %p256 = por %p254, %p255
      %p257 = scmp.ne.s32.totalorder %s245, %s246
      %p258 = scmp.eq.s32.totalorder %s26, 1
      %p259 = por %p257, %p258
      %p261 = scmp.ne.s32.totalorder %s246, %s260
      %p262 = scmp.eq.s32.totalorder %s26, 0
      %p263 = por %p261, %p262
      %s264 = ssub.s32 %s20, %s27
      %p265 = scmp.eq.s32.totalorder %s264, 0
      %s267 = sadd.s32 %s266, 1
      %s268 = scalar_select %p265, %s266, %s267
      %p271 = pneg %p265
      %p272 = scmp.eq.s32.totalorder %s20, 1
      %p273 = por %p271, %p272
      %p274 = scmp.ne.s32.totalorder %s266, %s269
      %p275 = scmp.eq.s32.totalorder %s20, 0
      %p276 = por %p274, %p275
      %p277 = scmp.ne.s32.totalorder %s266, %s269
      %p278 = scmp.eq.s32.totalorder %s25, 1
      %p279 = por %p277, %p278
      %p280 = scmp.ne.s32.totalorder %s269, %s270
      %p281 = scmp.eq.s32.totalorder %s25, 0
      %p282 = por %p280, %p281
      %p283 = scmp.ne.s32.totalorder %s269, %s270
      %p284 = scmp.eq.s32.totalorder %s26, 1
      %p285 = por %p283, %p284
      %p287 = scmp.ne.s32.totalorder %s270, %s286
      %p288 = scmp.eq.s32.totalorder %s26, 0
      %p289 = por %p287, %p288
      %p290 = scmp.le.s32.totalorder 1, %s20
      %p291 = scmp.lt.s32.totalorder %s20, 3
      %p292 = pnand %p290, %p291
      %p293 = pneg %p292
      // Predicated region
      $region9: #{tpu_custom_call.1} parent=5 // pred_check
        _
      $region10: #{tpu_custom_call.1} parent=5 // pred_check_branch
        %295 = sbr.rel (%p292) target = $region12
      $region11: #{tpu_custom_call.1} parent=5 // pred_region
        %s296 = ssub.s32 %s20, 1
        // Predicated region
        $region13: #{tpu_custom_call.1} parent=11 // pred_check
          %p297 = pneg %p67
        $region14: #{tpu_custom_call.1} parent=11 // pred_check_branch
          %299 = sbr.rel (%p297) target = $region16
        $region15: #{tpu_custom_call.1} parent=11 // pred_region
          _
        $region16: #{tpu_custom_call.1} parent=11 // pred_fallthru
          _
        // Predicated region
        $region17: #{tpu_custom_call.1} parent=11 // pred_check
          %p300 = pneg %p88
        $region18: #{tpu_custom_call.1} parent=11 // pred_check_branch
          %302 = sbr.rel (%p300) target = $region20
        $region19: #{tpu_custom_call.1} parent=11 // pred_region
          _
        $region20: #{tpu_custom_call.1} parent=11 // pred_fallthru
          _
        // Predicated region
        $region21: #{tpu_custom_call.1} parent=11 // pred_check
          %p303 = pneg %p109
        $region22: #{tpu_custom_call.1} parent=11 // pred_check_branch
          %305 = sbr.rel (%p303) target = $region24
        $region23: #{tpu_custom_call.1} parent=11 // pred_region
          _
        $region24: #{tpu_custom_call.1} parent=11 // pred_fallthru
          _
        // Predicated region
        $region25: #{tpu_custom_call.1} parent=11 // pred_check
          %p306 = pneg %p130
        $region26: #{tpu_custom_call.1} parent=11 // pred_check_branch
          %308 = sbr.rel (%p306) target = $region28
        $region27: #{tpu_custom_call.1} parent=11 // pred_region
          _
        $region28: #{tpu_custom_call.1} parent=11 // pred_fallthru
          _
        // Predicated region
        $region29: #{tpu_custom_call.1} parent=11 // pred_check
          %p309 = pneg %p151
        $region30: #{tpu_custom_call.1} parent=11 // pred_check_branch
          %311 = sbr.rel (%p309) target = $region32
        $region31: #{tpu_custom_call.1} parent=11 // pred_region
          _
        $region32: #{tpu_custom_call.1} parent=11 // pred_fallthru
          _
        // Predicated region
        $region33: #{tpu_custom_call.1} parent=11 // pred_check
          %p312 = pneg %p172
        $region34: #{tpu_custom_call.1} parent=11 // pred_check_branch
          %314 = sbr.rel (%p312) target = $region36
        $region35: #{tpu_custom_call.1} parent=11 // pred_region
          _
        $region36: #{tpu_custom_call.1} parent=11 // pred_fallthru
          _
        // Predicated region
        $region37: #{tpu_custom_call.1} parent=11 // pred_check
          %p315 = pneg %p193
        $region38: #{tpu_custom_call.1} parent=11 // pred_check_branch
          %317 = sbr.rel (%p315) target = $region40
        $region39: #{tpu_custom_call.1} parent=11 // pred_region
          _
        $region40: #{tpu_custom_call.1} parent=11 // pred_fallthru
          _
        // Predicated region
        $region41: #{tpu_custom_call.1} parent=11 // pred_check
          %p318 = pneg %p214
        $region42: #{tpu_custom_call.1} parent=11 // pred_check_branch
          %320 = sbr.rel (%p318) target = $region44
        $region43: #{tpu_custom_call.1} parent=11 // pred_region
          _
        $region44: #{tpu_custom_call.1} parent=11 // pred_fallthru
          _
        // Predicated region
        $region45: #{tpu_custom_call.1} parent=11 // pred_check
          %p321 = pneg %p235
        $region46: #{tpu_custom_call.1} parent=11 // pred_check_branch
          %323 = sbr.rel (%p321) target = $region48
        $region47: #{tpu_custom_call.1} parent=11 // pred_region
          _
        $region48: #{tpu_custom_call.1} parent=11 // pred_fallthru
          _
        // Predicated region
        $region49: #{tpu_custom_call.1} parent=11 // pred_check
          %p324 = pneg %p256
        $region50: #{tpu_custom_call.1} parent=11 // pred_check_branch
          %326 = sbr.rel (%p324) target = $region52
        $region51: #{tpu_custom_call.1} parent=11 // pred_region
          _
        $region52: #{tpu_custom_call.1} parent=11 // pred_fallthru
          _
      $region12: #{tpu_custom_call.1} parent=5 // pred_fallthru
        _
      %p327 = scmp.lt.s32.totalorder %s20, 2
      // Predicated region
      $region53: #{tpu_custom_call.1} parent=5 // pred_check
        %p328 = pneg %p327
      $region54: #{tpu_custom_call.1} parent=5 // pred_check_branch
        %330 = sbr.rel (%p328) target = $region56
      $region55: #{tpu_custom_call.1} parent=5 // pred_region
        // Predicated region
        $region57: #{tpu_custom_call.1} parent=55 // pred_check
          %p331 = pneg %p40
        $region58: #{tpu_custom_call.1} parent=55 // pred_check_branch
          %333 = sbr.rel (%p331) target = $region60
        $region59: #{tpu_custom_call.1} parent=55 // pred_region
          %p334 = scmp.lt.s32.totalorder %s20, 1
          %s335 = scalar_select %p334, %s20, 1
          %s336 = smul.addr %s335, 8
          %s337 = scalar_lea.vmem %s0, %s336
        $region60: #{tpu_custom_call.1} parent=55 // pred_fallthru
          _
      $region56: #{tpu_custom_call.1} parent=5 // pred_fallthru
        _
      %p338 = scmp.le.s32.totalorder 1, %s20
      %p339 = scmp.lt.s32.totalorder %s20, 3
      %p340 = pnand %p338, %p339
      %p341 = pneg %p340
      // Predicated region
      $region61: #{tpu_custom_call.1} parent=5 // pred_check
        _
      $region62: #{tpu_custom_call.1} parent=5 // pred_check_branch
        %343 = sbr.rel (%p340) target = $region64
      $region63: #{tpu_custom_call.1} parent=5 // pred_region
        %s344 = ssub.s32 %s20, 1
        %p345 = scmp.lt.s32.totalorder %s25, 1
        %s346 = scalar_select %p345, %s25, 1
        %s347 = smul.addr %s346, 8
        %s348 = scalar_lea.vmem %s0, %s347
        %p349 = pneg %p46
        %p350 = pneg %p43
        %p351 = pneg %p67
        %p352 = pneg %p64
        %p353 = pneg %p88
        %p354 = pneg %p85
        %p355 = pneg %p109
        %p356 = pneg %p106
        %p357 = pneg %p130
        %p358 = pneg %p127
        %p359 = pneg %p151
        %p360 = pneg %p148
        %p361 = pneg %p172
        %p362 = pneg %p169
        %p363 = pneg %p193
        %p364 = pneg %p190
        %p365 = pneg %p214
        %p366 = pneg %p211
        %p367 = pneg %p235
        %p368 = pneg %p232
        %p369 = pneg %p256
        %p370 = pneg %p253
        %p371 = pneg %p282
        %p372 = pneg %p279
        %s373 = sand.u32 %s269, 1
        %s374 = scalar_lea.sflag [#allocation3], %s373
        %s375 = sand.u32 %s269, 1
        %s376 = smul.addr %s375, 8
        %s377 = scalar_lea.vmem [#allocation2], %s376
        %p378 = scmp.lt.s32.totalorder %s25, 1
        %s379 = scalar_select %p378, %s25, 1
        %s380 = smul.addr %s379, 8
        %s381 = scalar_lea.vmem %s0, %s380
        %v382 = vld [vmem:[%s381] sm:$0xff]
        %v383 = vlaneseq
        %v384 = vshrl.u32 %v383, 7
        %v385 = vlaneseq
        %v386 = vand.u32 %v385, 127
        %vm387 = vcmp.ge.s32.totalorder %v384, %v386
        %v388 = vld [vmem:[%s1] sm:$0xff]
        %v389 = vld [vmem:[%s1 + $0x8] sm:$0xff]
        %v390 = vld [vmem:[%s1 + $0x10] sm:$0xff]
        %v391 = vld [vmem:[%s1 + $0x18] sm:$0xff]
        %v392 = vld [vmem:[%s1 + $0x20] sm:$0xff]
        %v393 = vld [vmem:[%s1 + $0x28] sm:$0xff]
        %v394 = vld [vmem:[%s1 + $0x30] sm:$0xff]
        %v395 = vld [vmem:[%s1 + $0x38] sm:$0xff]
        %v396 = vld [vmem:[%s1 + $0x40] sm:$0xff]
        %v397 = vld [vmem:[%s1 + $0x48] sm:$0xff]
        %v398 = vld [vmem:[%s1 + $0x50] sm:$0xff]
        %v399 = vld [vmem:[%s1 + $0x58] sm:$0xff]
        %v400 = vld [vmem:[%s1 + $0x60] sm:$0xff]
        %v401 = vld [vmem:[%s1 + $0x68] sm:$0xff]
        %v402 = vld [vmem:[%s1 + $0x70] sm:$0xff]
        %v403 = vld [vmem:[%s1 + $0x78] sm:$0xff]
        %v404 = vld [vmem:[%s2] sm:$0x1]
        %v406 = vlaneseq
        %v407 = vshrl.u32 %v406, 7
        %v408 = vsub.s32 0, %v407
        %v409 = vrot.slane %v404, %v408
        %411 = vmatprep.subr.mxu0 0.0
        %412 = vmatpush1.msra.mxu0 %v388
        %413 = vmatprep.subr.mxu0 0.0
        %414 = vmatpush1.msra.mxu0 %v389
        %415 = vmatprep.subr.mxu0 0.0
        %416 = vmatpush1.msra.mxu0 %v390
        %417 = vmatprep.subr.mxu0 0.0
        %418 = vmatpush1.msra.mxu0 %v391
        %419 = vmatprep.subr.mxu0 0.0
        %420 = vmatpush1.msra.mxu0 %v392
        %421 = vmatprep.subr.mxu0 0.0
        %422 = vmatpush1.msra.mxu0 %v393
        %423 = vmatprep.subr.mxu0 0.0
        %424 = vmatpush1.msra.mxu0 %v394
        %425 = vmatprep.subr.mxu0 0.0
        %426 = vmatpush1.msra.mxu0 %v395
        %427 = vmatprep.subr.mxu0 0.0
        %428 = vmatpush1.msra.mxu0 %v396
        %429 = vmatprep.subr.mxu0 0.0
        %430 = vmatpush1.msra.mxu0 %v397
        %431 = vmatprep.subr.mxu0 0.0
        %432 = vmatpush1.msra.mxu0 %v398
        %433 = vmatprep.subr.mxu0 0.0
        %434 = vmatpush1.msra.mxu0 %v399
        %435 = vmatprep.subr.mxu0 0.0
        %436 = vmatpush1.msra.mxu0 %v400
        %437 = vmatprep.subr.mxu0 0.0
        %438 = vmatpush1.msra.mxu0 %v401
        %439 = vmatprep.subr.mxu0 0.0
        %440 = vmatpush1.msra.mxu0 %v402
        %441 = vmatprep.subr.mxu0 0.0
        %442 = vmatpush1.msra.mxu0 %v403
        %443 = vmatprep.subr.mxu0 0.0
        %444 = vmatpush1.msra.mxu0 0.0
        %445 = vmatprep.subr.mxu0 0.0
        %446 = vmatpush1.msra.mxu0 0.0
        %447 = vmatprep.subr.mxu0 0.0
        %448 = vmatpush1.msra.mxu0 0.0
        %449 = vmatprep.subr.mxu0 0.0
        %450 = vmatpush1.msra.mxu0 0.0
        %451 = vmatprep.subr.mxu0 0.0
        %452 = vmatpush1.msra.mxu0 0.0
        %453 = vmatprep.subr.mxu0 0.0
        %454 = vmatpush1.msra.mxu0 0.0
        %455 = vmatprep.subr.mxu0 0.0
        %456 = vmatpush1.msra.mxu0 0.0
        %457 = vmatprep.subr.mxu0 0.0
        %458 = vmatpush1.msra.mxu0 0.0
        %459 = vmatprep.subr.mxu0 0.0
        %460 = vmatpush1.msra.mxu0 0.0
        %461 = vmatprep.subr.mxu0 0.0
        %462 = vmatpush1.msra.mxu0 0.0
        %463 = vmatprep.subr.mxu0 0.0
        %464 = vmatpush1.msra.mxu0 0.0
        %465 = vmatprep.subr.mxu0 0.0
        %466 = vmatpush1.msra.mxu0 0.0
        %467 = vmatprep.subr.mxu0 0.0
        %468 = vmatpush1.msra.mxu0 0.0
        %469 = vmatprep.subr.mxu0 0.0
        %470 = vmatpush1.msra.mxu0 0.0
        %471 = vmatprep.subr.mxu0 0.0
        %472 = vmatpush1.msra.mxu0 0.0
        %473 = vmatprep.subr.mxu0 0.0
        %474 = vmatpush1.msra.mxu0 0.0
        %475 = vmatprep.mubr.f32.mxu0 0.0
        %476 = vmatmul.mubr.f32.gmra.mrb[0].mxu0 %v382
        %v477 = vpop.f32.mrb[0].mxu0
        %v478 = vadd.f32 %v409, %v477
        %v479 = vpop.f32.mrb[0].mxu0
        %480 = vdwg.mxu0
        %v481 = vld [vmem:[%s3] sm:$0xff]
        %v482 = vld [vmem:[%s3 + $0x8] sm:$0xff]
        %v483 = vld [vmem:[%s3 + $0x10] sm:$0xff]
        %v484 = vld [vmem:[%s3 + $0x18] sm:$0xff]
        %v485 = vld [vmem:[%s3 + $0x20] sm:$0xff]
        %v486 = vld [vmem:[%s3 + $0x28] sm:$0xff]
        %v487 = vld [vmem:[%s3 + $0x30] sm:$0xff]
        %v488 = vld [vmem:[%s3 + $0x38] sm:$0xff]
        %v489 = vld [vmem:[%s3 + $0x40] sm:$0xff]
        %v490 = vld [vmem:[%s3 + $0x48] sm:$0xff]
        %v491 = vld [vmem:[%s3 + $0x50] sm:$0xff]
        %v492 = vld [vmem:[%s3 + $0x58] sm:$0xff]
        %v493 = vld [vmem:[%s3 + $0x60] sm:$0xff]
        %v494 = vld [vmem:[%s3 + $0x68] sm:$0xff]
        %v495 = vld [vmem:[%s3 + $0x70] sm:$0xff]
        %v496 = vld [vmem:[%s3 + $0x78] sm:$0xff]
        %v497 = vld [vmem:[%s4] sm:$0x1]
        %v499 = vlaneseq
        %v500 = vshrl.u32 %v499, 7
        %v501 = vsub.s32 0, %v500
        %v502 = vrot.slane %v497, %v501
        %504 = vmatprep.subr.mxu0 0.0
        %505 = vmatpush1.msra.mxu0 %v481
        %506 = vmatprep.subr.mxu0 0.0
        %507 = vmatpush1.msra.mxu0 %v482
        %508 = vmatprep.subr.mxu0 0.0
        %509 = vmatpush1.msra.mxu0 %v483
        %510 = vmatprep.subr.mxu0 0.0
        %511 = vmatpush1.msra.mxu0 %v484
        %512 = vmatprep.subr.mxu0 0.0
        %513 = vmatpush1.msra.mxu0 %v485
        %514 = vmatprep.subr.mxu0 0.0
        %515 = vmatpush1.msra.mxu0 %v486
        %516 = vmatprep.subr.mxu0 0.0
        %517 = vmatpush1.msra.mxu0 %v487
        %518 = vmatprep.subr.mxu0 0.0
        %519 = vmatpush1.msra.mxu0 %v488
        %520 = vmatprep.subr.mxu0 0.0
        %521 = vmatpush1.msra.mxu0 %v489
        %522 = vmatprep.subr.mxu0 0.0
        %523 = vmatpush1.msra.mxu0 %v490
        %524 = vmatprep.subr.mxu0 0.0
        %525 = vmatpush1.msra.mxu0 %v491
        %526 = vmatprep.subr.mxu0 0.0
        %527 = vmatpush1.msra.mxu0 %v492
        %528 = vmatprep.subr.mxu0 0.0
        %529 = vmatpush1.msra.mxu0 %v493
        %530 = vmatprep.subr.mxu0 0.0
        %531 = vmatpush1.msra.mxu0 %v494
        %532 = vmatprep.subr.mxu0 0.0
        %533 = vmatpush1.msra.mxu0 %v495
        %534 = vmatprep.subr.mxu0 0.0
        %535 = vmatpush1.msra.mxu0 %v496
        %536 = vmatprep.subr.mxu0 0.0
        %537 = vmatpush1.msra.mxu0 0.0
        %538 = vmatprep.subr.mxu0 0.0
        %539 = vmatpush1.msra.mxu0 0.0
        %540 = vmatprep.subr.mxu0 0.0
        %541 = vmatpush1.msra.mxu0 0.0
        %542 = vmatprep.subr.mxu0 0.0
        %543 = vmatpush1.msra.mxu0 0.0
        %544 = vmatprep.subr.mxu0 0.0
        %545 = vmatpush1.msra.mxu0 0.0
        %546 = vmatprep.subr.mxu0 0.0
        %547 = vmatpush1.msra.mxu0 0.0
        %548 = vmatprep.subr.mxu0 0.0
        %549 = vmatpush1.msra.mxu0 0.0
        %550 = vmatprep.subr.mxu0 0.0
        %551 = vmatpush1.msra.mxu0 0.0
        %552 = vmatprep.subr.mxu0 0.0
        %553 = vmatpush1.msra.mxu0 0.0
        %554 = vmatprep.subr.mxu0 0.0
        %555 = vmatpush1.msra.mxu0 0.0
        %556 = vmatprep.subr.mxu0 0.0
        %557 = vmatpush1.msra.mxu0 0.0
        %558 = vmatprep.subr.mxu0 0.0
        %559 = vmatpush1.msra.mxu0 0.0
        %560 = vmatprep.subr.mxu0 0.0
        %561 = vmatpush1.msra.mxu0 0.0
        %562 = vmatprep.subr.mxu0 0.0
        %563 = vmatpush1.msra.mxu0 0.0
        %564 = vmatprep.subr.mxu0 0.0
        %565 = vmatpush1.msra.mxu0 0.0
        %566 = vmatprep.subr.mxu0 0.0
        %567 = vmatpush1.msra.mxu0 0.0
        %568 = vmatprep.mubr.f32.mxu0 0.0
        %569 = vmatmul.mubr.f32.gmra.mrb[0].mxu0 %v382
        %v570 = vpop.f32.mrb[0].mxu0
        %v571 = vadd.f32 %v502, %v570
        %v572 = vpop.f32.mrb[0].mxu0
        %573 = vdwg.mxu0
        %v574 = vld [vmem:[%s5] sm:$0xff]
        %v575 = vld [vmem:[%s5 + $0x8] sm:$0xff]
        %v576 = vld [vmem:[%s5 + $0x10] sm:$0xff]
        %v577 = vld [vmem:[%s5 + $0x18] sm:$0xff]
        %v578 = vld [vmem:[%s5 + $0x20] sm:$0xff]
        %v579 = vld [vmem:[%s5 + $0x28] sm:$0xff]
        %v580 = vld [vmem:[%s5 + $0x30] sm:$0xff]
        %v581 = vld [vmem:[%s5 + $0x38] sm:$0xff]
        %v582 = vld [vmem:[%s5 + $0x40] sm:$0xff]
        %v583 = vld [vmem:[%s5 + $0x48] sm:$0xff]
        %v584 = vld [vmem:[%s5 + $0x50] sm:$0xff]
        %v585 = vld [vmem:[%s5 + $0x58] sm:$0xff]
        %v586 = vld [vmem:[%s5 + $0x60] sm:$0xff]
        %v587 = vld [vmem:[%s5 + $0x68] sm:$0xff]
        %v588 = vld [vmem:[%s5 + $0x70] sm:$0xff]
        %v589 = vld [vmem:[%s5 + $0x78] sm:$0xff]
        %v590 = vld [vmem:[%s6] sm:$0x1]
        %v592 = vlaneseq
        %v593 = vshrl.u32 %v592, 7
        %v594 = vsub.s32 0, %v593
        %v595 = vrot.slane %v590, %v594
        %597 = vmatprep.subr.mxu0 0.0
        %598 = vmatpush1.msra.mxu0 %v574
        %599 = vmatprep.subr.mxu0 0.0
        %600 = vmatpush1.msra.mxu0 %v575
        %601 = vmatprep.subr.mxu0 0.0
        %602 = vmatpush1.msra.mxu0 %v576
        %603 = vmatprep.subr.mxu0 0.0
        %604 = vmatpush1.msra.mxu0 %v577
        %605 = vmatprep.subr.mxu0 0.0
        %606 = vmatpush1.msra.mxu0 %v578
        %607 = vmatprep.subr.mxu0 0.0
        %608 = vmatpush1.msra.mxu0 %v579
        %609 = vmatprep.subr.mxu0 0.0
        %610 = vmatpush1.msra.mxu0 %v580
        %611 = vmatprep.subr.mxu0 0.0
        %612 = vmatpush1.msra.mxu0 %v581
        %613 = vmatprep.subr.mxu0 0.0
        %614 = vmatpush1.msra.mxu0 %v582
        %615 = vmatprep.subr.mxu0 0.0
        %616 = vmatpush1.msra.mxu0 %v583
        %617 = vmatprep.subr.mxu0 0.0
        %618 = vmatpush1.msra.mxu0 %v584
        %619 = vmatprep.subr.mxu0 0.0
        %620 = vmatpush1.msra.mxu0 %v585
        %621 = vmatprep.subr.mxu0 0.0
        %622 = vmatpush1.msra.mxu0 %v586
        %623 = vmatprep.subr.mxu0 0.0
        %624 = vmatpush1.msra.mxu0 %v587
        %625 = vmatprep.subr.mxu0 0.0
        %626 = vmatpush1.msra.mxu0 %v588
        %627 = vmatprep.subr.mxu0 0.0
        %628 = vmatpush1.msra.mxu0 %v589
        %629 = vmatprep.subr.mxu0 0.0
        %630 = vmatpush1.msra.mxu0 0.0
        %631 = vmatprep.subr.mxu0 0.0
        %632 = vmatpush1.msra.mxu0 0.0
        %633 = vmatprep.subr.mxu0 0.0
        %634 = vmatpush1.msra.mxu0 0.0
        %635 = vmatprep.subr.mxu0 0.0
        %636 = vmatpush1.msra.mxu0 0.0
        %637 = vmatprep.subr.mxu0 0.0
        %638 = vmatpush1.msra.mxu0 0.0
        %639 = vmatprep.subr.mxu0 0.0
        %640 = vmatpush1.msra.mxu0 0.0
        %641 = vmatprep.subr.mxu0 0.0
        %642 = vmatpush1.msra.mxu0 0.0
        %643 = vmatprep.subr.mxu0 0.0
        %644 = vmatpush1.msra.mxu0 0.0
        %645 = vmatprep.subr.mxu0 0.0
        %646 = vmatpush1.msra.mxu0 0.0
        %647 = vmatprep.subr.mxu0 0.0
        %648 = vmatpush1.msra.mxu0 0.0
        %649 = vmatprep.subr.mxu0 0.0
        %650 = vmatpush1.msra.mxu0 0.0
        %651 = vmatprep.subr.mxu0 0.0
        %652 = vmatpush1.msra.mxu0 0.0
        %653 = vmatprep.subr.mxu0 0.0
        %654 = vmatpush1.msra.mxu0 0.0
        %655 = vmatprep.subr.mxu0 0.0
        %656 = vmatpush1.msra.mxu0 0.0
        %657 = vmatprep.subr.mxu0 0.0
        %658 = vmatpush1.msra.mxu0 0.0
        %659 = vmatprep.subr.mxu0 0.0
        %660 = vmatpush1.msra.mxu0 0.0
        %661 = vmatprep.mubr.f32.mxu0 0.0
        %662 = vmatmul.mubr.f32.gmra.mrb[0].mxu0 %v382
        %v663 = vpop.f32.mrb[0].mxu0
        %v664 = vadd.f32 %v595, %v663
        %v665 = vpop.f32.mrb[0].mxu0
        %666 = vdwg.mxu0
        %vm667 = vcmask 261120
        %v669 = vsel %vm667, %v478, 0
        %v672 = vsel %vm667, %v571, 0
        %674 = vmatprep.subr.mxu0 0.0
        %675 = vmatpush1.xpose.msra.mxu0 %v672
        %676 = vmatprep.subr.mxu0 0.0
        %677 = vmatpush1.xpose.msra.mxu0 0.0
        %678 = vmatprep.subr.mxu0 0.0
        %679 = vmatpush1.xpose.msra.mxu0 0.0
        %680 = vmatprep.subr.mxu0 0.0
        %681 = vmatpush1.xpose.msra.mxu0 0.0
        %682 = vmatprep.subr.mxu0 0.0
        %683 = vmatpush1.xpose.msra.mxu0 0.0
        %684 = vmatprep.subr.mxu0 0.0
        %685 = vmatpush1.xpose.msra.mxu0 0.0
        %686 = vmatprep.subr.mxu0 0.0
        %687 = vmatpush1.xpose.msra.mxu0 0.0
        %688 = vmatprep.subr.mxu0 0.0
        %689 = vmatpush1.xpose.msra.mxu0 0.0
        %690 = vmatprep.subr.mxu0 0.0
        %691 = vmatpush1.xpose.msra.mxu0 0.0
        %692 = vmatprep.subr.mxu0 0.0
        %693 = vmatpush1.xpose.msra.mxu0 0.0
        %694 = vmatprep.subr.mxu0 0.0
        %695 = vmatpush1.xpose.msra.mxu0 0.0
        %696 = vmatprep.subr.mxu0 0.0
        %697 = vmatpush1.xpose.msra.mxu0 0.0
        %698 = vmatprep.subr.mxu0 0.0
        %699 = vmatpush1.xpose.msra.mxu0 0.0
        %700 = vmatprep.subr.mxu0 0.0
        %701 = vmatpush1.xpose.msra.mxu0 0.0
        %702 = vmatprep.subr.mxu0 0.0
        %703 = vmatpush1.xpose.msra.mxu0 0.0
        %704 = vmatprep.subr.mxu0 0.0
        %705 = vmatpush1.xpose.msra.mxu0 0.0
        %706 = vmatprep.subr.mxu0 0.0
        %707 = vmatpush1.xpose.msra.mxu0 0.0
        %708 = vmatprep.subr.mxu0 0.0
        %709 = vmatpush1.xpose.msra.mxu0 0.0
        %710 = vmatprep.subr.mxu0 0.0
        %711 = vmatpush1.xpose.msra.mxu0 0.0
        %712 = vmatprep.subr.mxu0 0.0
        %713 = vmatpush1.xpose.msra.mxu0 0.0
        %714 = vmatprep.subr.mxu0 0.0
        %715 = vmatpush1.xpose.msra.mxu0 0.0
        %716 = vmatprep.subr.mxu0 0.0
        %717 = vmatpush1.xpose.msra.mxu0 0.0
        %718 = vmatprep.subr.mxu0 0.0
        %719 = vmatpush1.xpose.msra.mxu0 0.0
        %720 = vmatprep.subr.mxu0 0.0
        %721 = vmatpush1.xpose.msra.mxu0 0.0
        %722 = vmatprep.subr.mxu0 0.0
        %723 = vmatpush1.xpose.msra.mxu0 0.0
        %724 = vmatprep.subr.mxu0 0.0
        %725 = vmatpush1.xpose.msra.mxu0 0.0
        %726 = vmatprep.subr.mxu0 0.0
        %727 = vmatpush1.xpose.msra.mxu0 0.0
        %728 = vmatprep.subr.mxu0 0.0
        %729 = vmatpush1.xpose.msra.mxu0 0.0
        %730 = vmatprep.subr.mxu0 0.0
        %731 = vmatpush1.xpose.msra.mxu0 0.0
        %732 = vmatprep.subr.mxu0 0.0
        %733 = vmatpush1.xpose.msra.mxu0 0.0
        %734 = vmatprep.subr.mxu0 0.0
        %735 = vmatpush1.xpose.msra.mxu0 0.0
        %736 = vmatprep.subr.mxu0 0.0
        %737 = vmatpush1.xpose.msra.mxu0 0.0
        %738 = vmatprep.mubr.f32.mxu0 0.0
        %739 = vmatmul.mubr.f32.gmra.mrb[0].mxu0 %v669
        %v740 = vpop.f32.mrb[0].mxu0
        %v741 = vadd.f32 0.0, %v740
        %v742 = vpop.f32.mrb[0].mxu0
        %743 = vdwg.mxu0
        %v744 = vmul.f32 %v741, 0.17677669
        %v745 = vsel %vm387, %v744, -1e+30
        %vm746 = vcmask 64512
        %v747 = vsel %vm746, %v745, -inf
        %748 = vmax.xlane.f32.xlu0 %v747
        %v749 = vpop.xlane.xlu0 %748
        %v750 = vsub.f32 %v745, %v749
        %v751 = vmul.f32 %v750, 1.442695
        %v752 = vpow.pop %v751
        %v753 = vsel %vm746, %v752, 0.0
        %754 = vadd.xlane.f32.xlu0 %v753
        %v755 = vpop.xlane.xlu0 %754
        %v756 = vrcp.pop %v755
        %v757 = vmul.f32 %v752, %v756
        %v759 = vsel %vm746, %v757, 0
        %761 = vmatprep.subr.mxu0 0.0
        %762 = vmatpush1.msra.mxu0 %v664
        %763 = vmatprep.subr.mxu0 0.0
        %764 = vmatpush1.msra.mxu0 0.0
        %765 = vmatprep.subr.mxu0 0.0
        %766 = vmatpush1.msra.mxu0 0.0
        %767 = vmatprep.subr.mxu0 0.0
        %768 = vmatpush1.msra.mxu0 0.0
        %769 = vmatprep.subr.mxu0 0.0
        %770 = vmatpush1.msra.mxu0 0.0
        %771 = vmatprep.subr.mxu0 0.0
        %772 = vmatpush1.msra.mxu0 0.0
        %773 = vmatprep.subr.mxu0 0.0
        %774 = vmatpush1.msra.mxu0 0.0
        %775 = vmatprep.subr.mxu0 0.0
        %776 = vmatpush1.msra.mxu0 0.0
        %777 = vmatprep.subr.mxu0 0.0
        %778 = vmatpush1.msra.mxu0 0.0
        %779 = vmatprep.subr.mxu0 0.0
        %780 = vmatpush1.msra.mxu0 0.0
        %781 = vmatprep.subr.mxu0 0.0
        %782 = vmatpush1.msra.mxu0 0.0
        %783 = vmatprep.subr.mxu0 0.0
        %784 = vmatpush1.msra.mxu0 0.0
        %785 = vmatprep.subr.mxu0 0.0
        %786 = vmatpush1.msra.mxu0 0.0
        %787 = vmatprep.subr.mxu0 0.0
        %788 = vmatpush1.msra.mxu0 0.0
        %789 = vmatprep.subr.mxu0 0.0
        %790 = vmatpush1.msra.mxu0 0.0
        %791 = vmatprep.subr.mxu0 0.0
        %792 = vmatpush1.msra.mxu0 0.0
        %793 = vmatprep.subr.mxu0 0.0
        %794 = vmatpush1.msra.mxu0 0.0
        %795 = vmatprep.subr.mxu0 0.0
        %796 = vmatpush1.msra.mxu0 0.0
        %797 = vmatprep.subr.mxu0 0.0
        %798 = vmatpush1.msra.mxu0 0.0
        %799 = vmatprep.subr.mxu0 0.0
        %800 = vmatpush1.msra.mxu0 0.0
        %801 = vmatprep.subr.mxu0 0.0
        %802 = vmatpush1.msra.mxu0 0.0
        %803 = vmatprep.subr.mxu0 0.0
        %804 = vmatpush1.msra.mxu0 0.0
        %805 = vmatprep.subr.mxu0 0.0
        %806 = vmatpush1.msra.mxu0 0.0
        %807 = vmatprep.subr.mxu0 0.0
        %808 = vmatpush1.msra.mxu0 0.0
        %809 = vmatprep.subr.mxu0 0.0
        %810 = vmatpush1.msra.mxu0 0.0
        %811 = vmatprep.subr.mxu0 0.0
        %812 = vmatpush1.msra.mxu0 0.0
        %813 = vmatprep.subr.mxu0 0.0
        %814 = vmatpush1.msra.mxu0 0.0
        %815 = vmatprep.subr.mxu0 0.0
        %816 = vmatpush1.msra.mxu0 0.0
        %817 = vmatprep.subr.mxu0 0.0
        %818 = vmatpush1.msra.mxu0 0.0
        %819 = vmatprep.subr.mxu0 0.0
        %820 = vmatpush1.msra.mxu0 0.0
        %821 = vmatprep.subr.mxu0 0.0
        %822 = vmatpush1.msra.mxu0 0.0
        %823 = vmatprep.subr.mxu0 0.0
        %824 = vmatpush1.msra.mxu0 0.0
        %825 = vmatprep.mubr.f32.mxu0 0.0
        %826 = vmatmul.mubr.f32.gmra.mrb[0].mxu0 %v759
        %v827 = vpop.f32.mrb[0].mxu0
        %v828 = vadd.f32 0.0, %v827
        %v829 = vpop.f32.mrb[0].mxu0
        %830 = vdwg.mxu0
        %v831 = vld [vmem:[%s7] sm:$0xff]
        %v832 = vld [vmem:[%s7 + $0x8] sm:$0xff]
        %v833 = vld [vmem:[%s7 + $0x10] sm:$0xff]
        %v834 = vld [vmem:[%s7 + $0x18] sm:$0xff]
        %s835 = scalar_lea.vmem %s1, 128
        %v836 = vld [vmem:[%s835] sm:$0xff]
        %v837 = vld [vmem:[%s835 + $0x8] sm:$0xff]
        %v838 = vld [vmem:[%s835 + $0x10] sm:$0xff]
        %v839 = vld [vmem:[%s835 + $0x18] sm:$0xff]
        %v840 = vld [vmem:[%s835 + $0x20] sm:$0xff]
        %v841 = vld [vmem:[%s835 + $0x28] sm:$0xff]
        %v842 = vld [vmem:[%s835 + $0x30] sm:$0xff]
        %v843 = vld [vmem:[%s835 + $0x38] sm:$0xff]
        %v844 = vld [vmem:[%s835 + $0x40] sm:$0xff]
        %v845 = vld [vmem:[%s835 + $0x48] sm:$0xff]
        %v846 = vld [vmem:[%s835 + $0x50] sm:$0xff]
        %v847 = vld [vmem:[%s835 + $0x58] sm:$0xff]
        %v848 = vld [vmem:[%s835 + $0x60] sm:$0xff]
        %v849 = vld [vmem:[%s835 + $0x68] sm:$0xff]
        %v850 = vld [vmem:[%s835 + $0x70] sm:$0xff]
        %v851 = vld [vmem:[%s835 + $0x78] sm:$0xff]
        %s852 = scalar_lea.vmem %s2, 1
        %v853 = vld [vmem:[%s852] sm:$0x1]
        %v855 = vlaneseq
        %v856 = vshrl.u32 %v855, 7
        %v857 = vsub.s32 0, %v856
        %v858 = vrot.slane %v853, %v857
        %860 = vmatprep.subr.mxu0 0.0
        %861 = vmatpush1.msra.mxu0 %v836
        %862 = vmatprep.subr.mxu0 0.0
        %863 = vmatpush1.msra.mxu0 %v837
        %864 = vmatprep.subr.mxu0 0.0
        %865 = vmatpush1.msra.mxu0 %v838
        %866 = vmatprep.subr.mxu0 0.0
        %867 = vmatpush1.msra.mxu0 %v839
        %868 = vmatprep.subr.mxu0 0.0
        %869 = vmatpush1.msra.mxu0 %v840
        %870 = vmatprep.subr.mxu0 0.0
        %871 = vmatpush1.msra.mxu0 %v841
        %872 = vmatprep.subr.mxu0 0.0
        %873 = vmatpush1.msra.mxu0 %v842
        %874 = vmatprep.subr.mxu0 0.0
        %875 = vmatpush1.msra.mxu0 %v843
        %876 = vmatprep.subr.mxu0 0.0
        %877 = vmatpush1.msra.mxu0 %v844
        %878 = vmatprep.subr.mxu0 0.0
        %879 = vmatpush1.msra.mxu0 %v845
        %880 = vmatprep.subr.mxu0 0.0
        %881 = vmatpush1.msra.mxu0 %v846
        %882 = vmatprep.subr.mxu0 0.0
        %883 = vmatpush1.msra.mxu0 %v847
        %884 = vmatprep.subr.mxu0 0.0
        %885 = vmatpush1.msra.mxu0 %v848
        %886 = vmatprep.subr.mxu0 0.0
        %887 = vmatpush1.msra.mxu0 %v849
        %888 = vmatprep.subr.mxu0 0.0
        %889 = vmatpush1.msra.mxu0 %v850
        %890 = vmatprep.subr.mxu0 0.0
        %891 = vmatpush1.msra.mxu0 %v851
        %892 = vmatprep.subr.mxu0 0.0
        %893 = vmatpush1.msra.mxu0 0.0
        %894 = vmatprep.subr.mxu0 0.0
        %895 = vmatpush1.msra.mxu0 0.0
        %896 = vmatprep.subr.mxu0 0.0
        %897 = vmatpush1.msra.mxu0 0.0
        %898 = vmatprep.subr.mxu0 0.0
        %899 = vmatpush1.msra.mxu0 0.0
        %900 = vmatprep.subr.mxu0 0.0
        %901 = vmatpush1.msra.mxu0 0.0
        %902 = vmatprep.subr.mxu0 0.0
        %903 = vmatpush1.msra.mxu0 0.0
        %904 = vmatprep.subr.mxu0 0.0
        %905 = vmatpush1.msra.mxu0 0.0
        %906 = vmatprep.subr.mxu0 0.0
        %907 = vmatpush1.msra.mxu0 0.0
        %908 = vmatprep.subr.mxu0 0.0
        %909 = vmatpush1.msra.mxu0 0.0
        %910 = vmatprep.subr.mxu0 0.0
        %911 = vmatpush1.msra.mxu0 0.0
        %912 = vmatprep.subr.mxu0 0.0
        %913 = vmatpush1.msra.mxu0 0.0
        %914 = vmatprep.subr.mxu0 0.0
        %915 = vmatpush1.msra.mxu0 0.0
        %916 = vmatprep.subr.mxu0 0.0
        %917 = vmatpush1.msra.mxu0 0.0
        %918 = vmatprep.subr.mxu0 0.0
        %919 = vmatpush1.msra.mxu0 0.0
        %920 = vmatprep.subr.mxu0 0.0
        %921 = vmatpush1.msra.mxu0 0.0
        %922 = vmatprep.subr.mxu0 0.0
        %923 = vmatpush1.msra.mxu0 0.0
        %924 = vmatprep.mubr.f32.mxu0 0.0
        %925 = vmatmul.mubr.f32.gmra.mrb[0].mxu0 %v382
        %v926 = vpop.f32.mrb[0].mxu0
        %v927 = vadd.f32 %v858, %v926
        %v928 = vpop.f32.mrb[0].mxu0
        %929 = vdwg.mxu0
        %s930 = scalar_lea.vmem %s3, 128
        %v931 = vld [vmem:[%s930] sm:$0xff]
        %v932 = vld [vmem:[%s930 + $0x8] sm:$0xff]
        %v933 = vld [vmem:[%s930 + $0x10] sm:$0xff]
        %v934 = vld [vmem:[%s930 + $0x18] sm:$0xff]
        %v935 = vld [vmem:[%s930 + $0x20] sm:$0xff]
        %v936 = vld [vmem:[%s930 + $0x28] sm:$0xff]
        %v937 = vld [vmem:[%s930 + $0x30] sm:$0xff]
        %v938 = vld [vmem:[%s930 + $0x38] sm:$0xff]
        %v939 = vld [vmem:[%s930 + $0x40] sm:$0xff]
        %v940 = vld [vmem:[%s930 + $0x48] sm:$0xff]
        %v941 = vld [vmem:[%s930 + $0x50] sm:$0xff]
        %v942 = vld [vmem:[%s930 + $0x58] sm:$0xff]
        %v943 = vld [vmem:[%s930 + $0x60] sm:$0xff]
        %v944 = vld [vmem:[%s930 + $0x68] sm:$0xff]
        %v945 = vld [vmem:[%s930 + $0x70] sm:$0xff]
        %v946 = vld [vmem:[%s930 + $0x78] sm:$0xff]
        %s947 = scalar_lea.vmem %s4, 1
        %v948 = vld [vmem:[%s947] sm:$0x1]
        %v950 = vlaneseq
        %v951 = vshrl.u32 %v950, 7
        %v952 = vsub.s32 0, %v951
        %v953 = vrot.slane %v948, %v952
        %955 = vmatprep.subr.mxu0 0.0
        %956 = vmatpush1.msra.mxu0 %v931
        %957 = vmatprep.subr.mxu0 0.0
        %958 = vmatpush1.msra.mxu0 %v932
        %959 = vmatprep.subr.mxu0 0.0
        %960 = vmatpush1.msra.mxu0 %v933
        %961 = vmatprep.subr.mxu0 0.0
        %962 = vmatpush1.msra.mxu0 %v934
        %963 = vmatprep.subr.mxu0 0.0
        %964 = vmatpush1.msra.mxu0 %v935
        %965 = vmatprep.subr.mxu0 0.0
        %966 = vmatpush1.msra.mxu0 %v936
        %967 = vmatprep.subr.mxu0 0.0
        %968 = vmatpush1.msra.mxu0 %v937
        %969 = vmatprep.subr.mxu0 0.0
        %970 = vmatpush1.msra.mxu0 %v938
        %971 = vmatprep.subr.mxu0 0.0
        %972 = vmatpush1.msra.mxu0 %v939
        %973 = vmatprep.subr.mxu0 0.0
        %974 = vmatpush1.msra.mxu0 %v940
        %975 = vmatprep.subr.mxu0 0.0
        %976 = vmatpush1.msra.mxu0 %v941
        %977 = vmatprep.subr.mxu0 0.0
        %978 = vmatpush1.msra.mxu0 %v942
        %979 = vmatprep.subr.mxu0 0.0
        %980 = vmatpush1.msra.mxu0 %v943
        %981 = vmatprep.subr.mxu0 0.0
        %982 = vmatpush1.msra.mxu0 %v944
        %983 = vmatprep.subr.mxu0 0.0
        %984 = vmatpush1.msra.mxu0 %v945
        %985 = vmatprep.subr.mxu0 0.0
        %986 = vmatpush1.msra.mxu0 %v946
        %987 = vmatprep.subr.mxu0 0.0
        %988 = vmatpush1.msra.mxu0 0.0
        %989 = vmatprep.subr.mxu0 0.0
        %990 = vmatpush1.msra.mxu0 0.0
        %991 = vmatprep.subr.mxu0 0.0
        %992 = vmatpush1.msra.mxu0 0.0
        %993 = vmatprep.subr.mxu0 0.0
        %994 = vmatpush1.msra.mxu0 0.0
        %995 = vmatprep.subr.mxu0 0.0
        %996 = vmatpush1.msra.mxu0 0.0
        %997 = vmatprep.subr.mxu0 0.0
        %998 = vmatpush1.msra.mxu0 0.0
        %999 = vmatprep.subr.mxu0 0.0
        %1000 = vmatpush1.msra.mxu0 0.0
        %1001 = vmatprep.subr.mxu0 0.0
        %1002 = vmatpush1.msra.mxu0 0.0
        %1003 = vmatprep.subr.mxu0 0.0
        %1004 = vmatpush1.msra.mxu0 0.0
        %1005 = vmatprep.subr.mxu0 0.0
        %1006 = vmatpush1.msra.mxu0 0.0
        %1007 = vmatprep.subr.mxu0 0.0
        %1008 = vmatpush1.msra.mxu0 0.0
        %1009 = vmatprep.subr.mxu0 0.0
        %1010 = vmatpush1.msra.mxu0 0.0
        %1011 = vmatprep.subr.mxu0 0.0
        %1012 = vmatpush1.msra.mxu0 0.0
        %1013 = vmatprep.subr.mxu0 0.0
        %1014 = vmatpush1.msra.mxu0 0.0
        %1015 = vmatprep.subr.mxu0 0.0
        %1016 = vmatpush1.msra.mxu0 0.0
        %1017 = vmatprep.subr.mxu0 0.0
        %1018 = vmatpush1.msra.mxu0 0.0
        %1019 = vmatprep.mubr.f32.mxu0 0.0
        %1020 = vmatmul.mubr.f32.gmra.mrb[0].mxu0 %v382
        %v1021 = vpop.f32.mrb[0].mxu0
        %v1022 = vadd.f32 %v953, %v1021
        %v1023 = vpop.f32.mrb[0].mxu0
        %1024 = vdwg.mxu0
        %s1025 = scalar_lea.vmem %s5, 128
        %v1026 = vld [vmem:[%s1025] sm:$0xff]
        %v1027 = vld [vmem:[%s1025 + $0x8] sm:$0xff]
        %v1028 = vld [vmem:[%s1025 + $0x10] sm:$0xff]
        %v1029 = vld [vmem:[%s1025 + $0x18] sm:$0xff]
        %v1030 = vld [vmem:[%s1025 + $0x20] sm:$0xff]
        %v1031 = vld [vmem:[%s1025 + $0x28] sm:$0xff]
        %v1032 = vld [vmem:[%s1025 + $0x30] sm:$0xff]
        %v1033 = vld [vmem:[%s1025 + $0x38] sm:$0xff]
        %v1034 = vld [vmem:[%s1025 + $0x40] sm:$0xff]
        %v1035 = vld [vmem:[%s1025 + $0x48] sm:$0xff]
        %v1036 = vld [vmem:[%s1025 + $0x50] sm:$0xff]
        %v1037 = vld [vmem:[%s1025 + $0x58] sm:$0xff]
        %v1038 = vld [vmem:[%s1025 + $0x60] sm:$0xff]
        %v1039 = vld [vmem:[%s1025 + $0x68] sm:$0xff]
        %v1040 = vld [vmem:[%s1025 + $0x70] sm:$0xff]
        %v1041 = vld [vmem:[%s1025 + $0x78] sm:$0xff]
        %s1042 = scalar_lea.vmem %s6, 1
        %v1043 = vld [vmem:[%s1042] sm:$0x1]
        %v1045 = vlaneseq
        %v1046 = vshrl.u32 %v1045, 7
        %v1047 = vsub.s32 0, %v1046
        %v1048 = vrot.slane %v1043, %v1047
        %1050 = vmatprep.subr.mxu0 0.0
        %1051 = vmatpush1.msra.mxu0 %v1026
        %1052 = vmatprep.subr.mxu0 0.0
        %1053 = vmatpush1.msra.mxu0 %v1027
        %1054 = vmatprep.subr.mxu0 0.0
        %1055 = vmatpush1.msra.mxu0 %v1028
        %1056 = vmatprep.subr.mxu0 0.0
        %1057 = vmatpush1.msra.mxu0 %v1029
        %1058 = vmatprep.subr.mxu0 0.0
        %1059 = vmatpush1.msra.mxu0 %v1030
        %1060 = vmatprep.subr.mxu0 0.0
        %1061 = vmatpush1.msra.mxu0 %v1031
        %1062 = vmatprep.subr.mxu0 0.0
        %1063 = vmatpush1.msra.mxu0 %v1032
        %1064 = vmatprep.subr.mxu0 0.0
        %1065 = vmatpush1.msra.mxu0 %v1033
        %1066 = vmatprep.subr.mxu0 0.0
        %1067 = vmatpush1.msra.mxu0 %v1034
        %1068 = vmatprep.subr.mxu0 0.0
        %1069 = vmatpush1.msra.mxu0 %v1035
        %1070 = vmatprep.subr.mxu0 0.0
        %1071 = vmatpush1.msra.mxu0 %v1036
        %1072 = vmatprep.subr.mxu0 0.0
        %1073 = vmatpush1.msra.mxu0 %v1037
        %1074 = vmatprep.subr.mxu0 0.0
        %1075 = vmatpush1.msra.mxu0 %v1038
        %1076 = vmatprep.subr.mxu0 0.0
        %1077 = vmatpush1.msra.mxu0 %v1039
        %1078 = vmatprep.subr.mxu0 0.0
        %1079 = vmatpush1.msra.mxu0 %v1040
        %1080 = vmatprep.subr.mxu0 0.0
        %1081 = vmatpush1.msra.mxu0 %v1041
        %1082 = vmatprep.subr.mxu0 0.0
        %1083 = vmatpush1.msra.mxu0 0.0
        %1084 = vmatprep.subr.mxu0 0.0
        %1085 = vmatpush1.msra.mxu0 0.0
        %1086 = vmatprep.subr.mxu0 0.0
        %1087 = vmatpush1.msra.mxu0 0.0
        %1088 = vmatprep.subr.mxu0 0.0
        %1089 = vmatpush1.msra.mxu0 0.0
        %1090 = vmatprep.subr.mxu0 0.0
        %1091 = vmatpush1.msra.mxu0 0.0
        %1092 = vmatprep.subr.mxu0 0.0
        %1093 = vmatpush1.msra.mxu0 0.0
        %1094 = vmatprep.subr.mxu0 0.0
        %1095 = vmatpush1.msra.mxu0 0.0
        %1096 = vmatprep.subr.mxu0 0.0
        %1097 = vmatpush1.msra.mxu0 0.0
        %1098 = vmatprep.subr.mxu0 0.0
        %1099 = vmatpush1.msra.mxu0 0.0
        %1100 = vmatprep.subr.mxu0 0.0
        %1101 = vmatpush1.msra.mxu0 0.0
        %1102 = vmatprep.subr.mxu0 0.0
        %1103 = vmatpush1.msra.mxu0 0.0
        %1104 = vmatprep.subr.mxu0 0.0
        %1105 = vmatpush1.msra.mxu0 0.0
        %1106 = vmatprep.subr.mxu0 0.0
        %1107 = vmatpush1.msra.mxu0 0.0
        %1108 = vmatprep.subr.mxu0 0.0
        %1109 = vmatpush1.msra.mxu0 0.0
        %1110 = vmatprep.subr.mxu0 0.0
        %1111 = vmatpush1.msra.mxu0 0.0
        %1112 = vmatprep.subr.mxu0 0.0
        %1113 = vmatpush1.msra.mxu0 0.0
        %1114 = vmatprep.mubr.f32.mxu0 0.0
        %1115 = vmatmul.mubr.f32.gmra.mrb[0].mxu0 %v382
        %v1116 = vpop.f32.mrb[0].mxu0
        %v1117 = vadd.f32 %v1048, %v1116
        %v1118 = vpop.f32.mrb[0].mxu0
        %1119 = vdwg.mxu0
        %v1121 = vsel %vm667, %v927, 0
        %v1124 = vsel %vm667, %v1022, 0
        %1126 = vmatprep.subr.mxu0 0.0
        %1127 = vmatpush1.xpose.msra.mxu0 %v1124
        %1128 = vmatprep.subr.mxu0 0.0
        %1129 = vmatpush1.xpose.msra.mxu0 0.0
        %1130 = vmatprep.subr.mxu0 0.0
        %1131 = vmatpush1.xpose.msra.mxu0 0.0
        %1132 = vmatprep.subr.mxu0 0.0
        %1133 = vmatpush1.xpose.msra.mxu0 0.0
        %1134 = vmatprep.subr.mxu0 0.0
        %1135 = vmatpush1.xpose.msra.mxu0 0.0
        %1136 = vmatprep.subr.mxu0 0.0
        %1137 = vmatpush1.xpose.msra.mxu0 0.0
        %1138 = vmatprep.subr.mxu0 0.0
        %1139 = vmatpush1.xpose.msra.mxu0 0.0
        %1140 = vmatprep.subr.mxu0 0.0
        %1141 = vmatpush1.xpose.msra.mxu0 0.0
        %1142 = vmatprep.subr.mxu0 0.0
        %1143 = vmatpush1.xpose.msra.mxu0 0.0
        %1144 = vmatprep.subr.mxu0 0.0
        %1145 = vmatpush1.xpose.msra.mxu0 0.0
        %1146 = vmatprep.subr.mxu0 0.0
        %1147 = vmatpush1.xpose.msra.mxu0 0.0
        %1148 = vmatprep.subr.mxu0 0.0
        %1149 = vmatpush1.xpose.msra.mxu0 0.0
        %1150 = vmatprep.subr.mxu0 0.0
        %1151 = vmatpush1.xpose.msra.mxu0 0.0
        %1152 = vmatprep.subr.mxu0 0.0
        %1153 = vmatpush1.xpose.msra.mxu0 0.0
        %1154 = vmatprep.subr.mxu0 0.0
        %1155 = vmatpush1.xpose.msra.mxu0 0.0
        %1156 = vmatprep.subr.mxu0 0.0
        %1157 = vmatpush1.xpose.msra.mxu0 0.0
        %1158 = vmatprep.subr.mxu0 0.0
        %1159 = vmatpush1.xpose.msra.mxu0 0.0
        %1160 = vmatprep.subr.mxu0 0.0
        %1161 = vmatpush1.xpose.msra.mxu0 0.0
        %1162 = vmatprep.subr.mxu0 0.0
        %1163 = vmatpush1.xpose.msra.mxu0 0.0
        %1164 = vmatprep.subr.mxu0 0.0
        %1165 = vmatpush1.xpose.msra.mxu0 0.0
        %1166 = vmatprep.subr.mxu0 0.0
        %1167 = vmatpush1.xpose.msra.mxu0 0.0
        %1168 = vmatprep.subr.mxu0 0.0
        %1169 = vmatpush1.xpose.msra.mxu0 0.0
        %1170 = vmatprep.subr.mxu0 0.0
        %1171 = vmatpush1.xpose.msra.mxu0 0.0
        %1172 = vmatprep.subr.mxu0 0.0
        %1173 = vmatpush1.xpose.msra.mxu0 0.0
        %1174 = vmatprep.subr.mxu0 0.0
        %1175 = vmatpush1.xpose.msra.mxu0 0.0
        %1176 = vmatprep.subr.mxu0 0.0
        %1177 = vmatpush1.xpose.msra.mxu0 0.0
        %1178 = vmatprep.subr.mxu0 0.0
        %1179 = vmatpush1.xpose.msra.mxu0 0.0
        %1180 = vmatprep.subr.mxu0 0.0
        %1181 = vmatpush1.xpose.msra.mxu0 0.0
        %1182 = vmatprep.subr.mxu0 0.0
        %1183 = vmatpush1.xpose.msra.mxu0 0.0
        %1184 = vmatprep.subr.mxu0 0.0
        %1185 = vmatpush1.xpose.msra.mxu0 0.0
        %1186 = vmatprep.subr.mxu0 0.0
        %1187 = vmatpush1.xpose.msra.mxu0 0.0
        %1188 = vmatprep.subr.mxu0 0.0
        %1189 = vmatpush1.xpose.msra.mxu0 0.0
        %1190 = vmatprep.mubr.f32.mxu0 0.0
        %1191 = vmatmul.mubr.f32.gmra.mrb[0].mxu0 %v1121
        %v1192 = vpop.f32.mrb[0].mxu0
        %v1193 = vadd.f32 0.0, %v1192
        %v1194 = vpop.f32.mrb[0].mxu0
        %1195 = vdwg.mxu0
        %v1196 = vmul.f32 %v1193, 0.17677669
        %v1197 = vsel %vm387, %v1196, -1e+30
        %v1198 = vsel %vm746, %v1197, -inf
        %1199 = vmax.xlane.f32.xlu0 %v1198
        %v1200 = vpop.xlane.xlu0 %1199
        %v1201 = vsub.f32 %v1197, %v1200
        %v1202 = vmul.f32 %v1201, 1.442695
        %v1203 = vpow.pop %v1202
        %v1204 = vsel %vm746, %v1203, 0.0
        %1205 = vadd.xlane.f32.xlu0 %v1204
        %v1206 = vpop.xlane.xlu0 %1205
        %v1207 = vrcp.pop %v1206
        %v1208 = vmul.f32 %v1203, %v1207
        %v1210 = vsel %vm746, %v1208, 0
        %1212 = vmatprep.subr.mxu0 0.0
        %1213 = vmatpush1.msra.mxu0 %v1117
        %1214 = vmatprep.subr.mxu0 0.0
        %1215 = vmatpush1.msra.mxu0 0.0
        %1216 = vmatprep.subr.mxu0 0.0
        %1217 = vmatpush1.msra.mxu0 0.0
        %1218 = vmatprep.subr.mxu0 0.0
        %1219 = vmatpush1.msra.mxu0 0.0
        %1220 = vmatprep.subr.mxu0 0.0
        %1221 = vmatpush1.msra.mxu0 0.0
        %1222 = vmatprep.subr.mxu0 0.0
        %1223 = vmatpush1.msra.mxu0 0.0
        %1224 = vmatprep.subr.mxu0 0.0
        %1225 = vmatpush1.msra.mxu0 0.0
        %1226 = vmatprep.subr.mxu0 0.0
        %1227 = vmatpush1.msra.mxu0 0.0
        %1228 = vmatprep.subr.mxu0 0.0
        %1229 = vmatpush1.msra.mxu0 0.0
        %1230 = vmatprep.subr.mxu0 0.0
        %1231 = vmatpush1.msra.mxu0 0.0
        %1232 = vmatprep.subr.mxu0 0.0
        %1233 = vmatpush1.msra.mxu0 0.0
        %1234 = vmatprep.subr.mxu0 0.0
        %1235 = vmatpush1.msra.mxu0 0.0
        %1236 = vmatprep.subr.mxu0 0.0
        %1237 = vmatpush1.msra.mxu0 0.0
        %1238 = vmatprep.subr.mxu0 0.0
        %1239 = vmatpush1.msra.mxu0 0.0
        %1240 = vmatprep.subr.mxu0 0.0
        %1241 = vmatpush1.msra.mxu0 0.0
        %1242 = vmatprep.subr.mxu0 0.0
        %1243 = vmatpush1.msra.mxu0 0.0
        %1244 = vmatprep.subr.mxu0 0.0
        %1245 = vmatpush1.msra.mxu0 0.0
        %1246 = vmatprep.subr.mxu0 0.0
        %1247 = vmatpush1.msra.mxu0 0.0
        %1248 = vmatprep.subr.mxu0 0.0
        %1249 = vmatpush1.msra.mxu0 0.0
        %1250 = vmatprep.subr.mxu0 0.0
        %1251 = vmatpush1.msra.mxu0 0.0
        %1252 = vmatprep.subr.mxu0 0.0
        %1253 = vmatpush1.msra.mxu0 0.0
        %1254 = vmatprep.subr.mxu0 0.0
        %1255 = vmatpush1.msra.mxu0 0.0
        %1256 = vmatprep.subr.mxu0 0.0
        %1257 = vmatpush1.msra.mxu0 0.0
        %1258 = vmatprep.subr.mxu0 0.0
        %1259 = vmatpush1.msra.mxu0 0.0
        %1260 = vmatprep.subr.mxu0 0.0
        %1261 = vmatpush1.msra.mxu0 0.0
        %1262 = vmatprep.subr.mxu0 0.0
        %1263 = vmatpush1.msra.mxu0 0.0
        %1264 = vmatprep.subr.mxu0 0.0
        %1265 = vmatpush1.msra.mxu0 0.0
        %1266 = vmatprep.subr.mxu0 0.0
        %1267 = vmatpush1.msra.mxu0 0.0
        %1268 = vmatprep.subr.mxu0 0.0
        %1269 = vmatpush1.msra.mxu0 0.0
        %1270 = vmatprep.subr.mxu0 0.0
        %1271 = vmatpush1.msra.mxu0 0.0
        %1272 = vmatprep.subr.mxu0 0.0
        %1273 = vmatpush1.msra.mxu0 0.0
        %1274 = vmatprep.subr.mxu0 0.0
        %1275 = vmatpush1.msra.mxu0 0.0
        %1276 = vmatprep.mubr.f32.mxu0 0.0
        %1277 = vmatmul.mubr.f32.gmra.mrb[0].mxu0 %v1210
        %v1278 = vpop.f32.mrb[0].mxu0
        %v1279 = vadd.f32 0.0, %v1278
        %v1280 = vpop.f32.mrb[0].mxu0
        %1281 = vdwg.mxu0
        %s1282 = scalar_lea.vmem %s7, 32
        %v1283 = vld [vmem:[%s1282] sm:$0xff]
        %v1284 = vld [vmem:[%s1282 + $0x8] sm:$0xff]
        %v1285 = vld [vmem:[%s1282 + $0x10] sm:$0xff]
        %v1286 = vld [vmem:[%s1282 + $0x18] sm:$0xff]
        %v1288 = vsel %vm667, %v1279, 0
        %1290 = vmatprep.subr.mxu0 0.0
        %1291 = vmatpush1.msra.mxu0 %v1283
        %1292 = vmatprep.subr.mxu0 0.0
        %1293 = vmatpush1.msra.mxu0 %v1284
        %1294 = vmatprep.subr.mxu0 0.0
        %1295 = vmatpush1.msra.mxu0 %v1285
        %1296 = vmatprep.subr.mxu0 0.0
        %1297 = vmatpush1.msra.mxu0 %v1286
        %1298 = vmatprep.subr.mxu0 0.0
        %1299 = vmatpush1.msra.mxu0 0.0
        %1300 = vmatprep.subr.mxu0 0.0
        %1301 = vmatpush1.msra.mxu0 0.0
        %1302 = vmatprep.subr.mxu0 0.0
        %1303 = vmatpush1.msra.mxu0 0.0
        %1304 = vmatprep.subr.mxu0 0.0
        %1305 = vmatpush1.msra.mxu0 0.0
        %1306 = vmatprep.subr.mxu0 0.0
        %1307 = vmatpush1.msra.mxu0 0.0
        %1308 = vmatprep.subr.mxu0 0.0
        %1309 = vmatpush1.msra.mxu0 0.0
        %1310 = vmatprep.subr.mxu0 0.0
        %1311 = vmatpush1.msra.mxu0 0.0
        %1312 = vmatprep.subr.mxu0 0.0
        %1313 = vmatpush1.msra.mxu0 0.0
        %1314 = vmatprep.subr.mxu0 0.0
        %1315 = vmatpush1.msra.mxu0 0.0
        %1316 = vmatprep.subr.mxu0 0.0
        %1317 = vmatpush1.msra.mxu0 0.0
        %1318 = vmatprep.subr.mxu0 0.0
        %1319 = vmatpush1.msra.mxu0 0.0
        %1320 = vmatprep.subr.mxu0 0.0
        %1321 = vmatpush1.msra.mxu0 0.0
        %1322 = vmatprep.subr.mxu0 0.0
        %1323 = vmatpush1.msra.mxu0 0.0
        %1324 = vmatprep.subr.mxu0 0.0
        %1325 = vmatpush1.msra.mxu0 0.0
        %1326 = vmatprep.subr.mxu0 0.0
        %1327 = vmatpush1.msra.mxu0 0.0
        %1328 = vmatprep.subr.mxu0 0.0
        %1329 = vmatpush1.msra.mxu0 0.0
        %1330 = vmatprep.subr.mxu0 0.0
        %1331 = vmatpush1.msra.mxu0 0.0
        %1332 = vmatprep.subr.mxu0 0.0
        %1333 = vmatpush1.msra.mxu0 0.0
        %1334 = vmatprep.subr.mxu0 0.0
        %1335 = vmatpush1.msra.mxu0 0.0
        %1336 = vmatprep.subr.mxu0 0.0
        %1337 = vmatpush1.msra.mxu0 0.0
        %1338 = vmatprep.subr.mxu0 0.0
        %1339 = vmatpush1.msra.mxu0 0.0
        %1340 = vmatprep.subr.mxu0 0.0
        %1341 = vmatpush1.msra.mxu0 0.0
        %1342 = vmatprep.subr.mxu0 0.0
        %1343 = vmatpush1.msra.mxu0 0.0
        %1344 = vmatprep.subr.mxu0 0.0
        %1345 = vmatpush1.msra.mxu0 0.0
        %1346 = vmatprep.subr.mxu0 0.0
        %1347 = vmatpush1.msra.mxu0 0.0
        %1348 = vmatprep.subr.mxu0 0.0
        %1349 = vmatpush1.msra.mxu0 0.0
        %1350 = vmatprep.subr.mxu0 0.0
        %1351 = vmatpush1.msra.mxu0 0.0
        %1352 = vmatprep.subr.mxu0 0.0
        %1353 = vmatpush1.msra.mxu0 0.0
        %1354 = vmatprep.mubr.f32.mxu0 0.0
        %1355 = vmatmul.mubr.f32.gmra.mrb[0].mxu0 %v1288
        %v1356 = vpop.f32.mrb[0].mxu0
        %v1357 = vadd.f32 0.0, %v1356
        %v1358 = vpop.f32.mrb[0].mxu0
        %1359 = vdwg.mxu0
        %v1361 = vsel %vm667, %v828, 0
        %1363 = vmatprep.subr.mxu0 0.0
        %1364 = vmatpush1.msra.mxu0 %v831
        %1365 = vmatprep.subr.mxu0 0.0
        %1366 = vmatpush1.msra.mxu0 %v832
        %1367 = vmatprep.subr.mxu0 0.0
        %1368 = vmatpush1.msra.mxu0 %v833
        %1369 = vmatprep.subr.mxu0 0.0
        %1370 = vmatpush1.msra.mxu0 %v834
        %1371 = vmatprep.subr.mxu0 0.0
        %1372 = vmatpush1.msra.mxu0 0.0
        %1373 = vmatprep.subr.mxu0 0.0
        %1374 = vmatpush1.msra.mxu0 0.0
        %1375 = vmatprep.subr.mxu0 0.0
        %1376 = vmatpush1.msra.mxu0 0.0
        %1377 = vmatprep.subr.mxu0 0.0
        %1378 = vmatpush1.msra.mxu0 0.0
        %1379 = vmatprep.subr.mxu0 0.0
        %1380 = vmatpush1.msra.mxu0 0.0
        %1381 = vmatprep.subr.mxu0 0.0
        %1382 = vmatpush1.msra.mxu0 0.0
        %1383 = vmatprep.subr.mxu0 0.0
        %1384 = vmatpush1.msra.mxu0 0.0
        %1385 = vmatprep.subr.mxu0 0.0
        %1386 = vmatpush1.msra.mxu0 0.0
        %1387 = vmatprep.subr.mxu0 0.0
        %1388 = vmatpush1.msra.mxu0 0.0
        %1389 = vmatprep.subr.mxu0 0.0
        %1390 = vmatpush1.msra.mxu0 0.0
        %1391 = vmatprep.subr.mxu0 0.0
        %1392 = vmatpush1.msra.mxu0 0.0
        %1393 = vmatprep.subr.mxu0 0.0
        %1394 = vmatpush1.msra.mxu0 0.0
        %1395 = vmatprep.subr.mxu0 0.0
        %1396 = vmatpush1.msra.mxu0 0.0
        %1397 = vmatprep.subr.mxu0 0.0
        %1398 = vmatpush1.msra.mxu0 0.0
        %1399 = vmatprep.subr.mxu0 0.0
        %1400 = vmatpush1.msra.mxu0 0.0
        %1401 = vmatprep.subr.mxu0 0.0
        %1402 = vmatpush1.msra.mxu0 0.0
        %1403 = vmatprep.subr.mxu0 0.0
        %1404 = vmatpush1.msra.mxu0 0.0
        %1405 = vmatprep.subr.mxu0 0.0
        %1406 = vmatpush1.msra.mxu0 0.0
        %1407 = vmatprep.subr.mxu0 0.0
        %1408 = vmatpush1.msra.mxu0 0.0
        %1409 = vmatprep.subr.mxu0 0.0
        %1410 = vmatpush1.msra.mxu0 0.0
        %1411 = vmatprep.subr.mxu0 0.0
        %1412 = vmatpush1.msra.mxu0 0.0
        %1413 = vmatprep.subr.mxu0 0.0
        %1414 = vmatpush1.msra.mxu0 0.0
        %1415 = vmatprep.subr.mxu0 0.0
        %1416 = vmatpush1.msra.mxu0 0.0
        %1417 = vmatprep.subr.mxu0 0.0
        %1418 = vmatpush1.msra.mxu0 0.0
        %1419 = vmatprep.subr.mxu0 0.0
        %1420 = vmatpush1.msra.mxu0 0.0
        %1421 = vmatprep.subr.mxu0 0.0
        %1422 = vmatpush1.msra.mxu0 0.0
        %1423 = vmatprep.subr.mxu0 0.0
        %1424 = vmatpush1.msra.mxu0 0.0
        %1425 = vmatprep.subr.mxu0 0.0
        %1426 = vmatpush1.msra.mxu0 0.0
        %1427 = vmatprep.mubr.f32.mxu0 0.0
        %1428 = vmatmul.mubr.f32.gmra.mrb[0].mxu0 %v1361
        %v1429 = vpop.f32.mrb[0].mxu0
        %v1430 = vadd.f32 %v1357, %v1429
        %v1431 = vpop.f32.mrb[0].mxu0
        %1432 = vdwg.mxu0
        %s1433 = scalar_lea.vmem %s1, 256
        %v1434 = vld [vmem:[%s1433] sm:$0xff]
        %v1435 = vld [vmem:[%s1433 + $0x8] sm:$0xff]
        %v1436 = vld [vmem:[%s1433 + $0x10] sm:$0xff]
        %v1437 = vld [vmem:[%s1433 + $0x18] sm:$0xff]
        %v1438 = vld [vmem:[%s1433 + $0x20] sm:$0xff]
        %v1439 = vld [vmem:[%s1433 + $0x28] sm:$0xff]
        %v1440 = vld [vmem:[%s1433 + $0x30] sm:$0xff]
        %v1441 = vld [vmem:[%s1433 + $0x38] sm:$0xff]
        %v1442 = vld [vmem:[%s1433 + $0x40] sm:$0xff]
        %v1443 = vld [vmem:[%s1433 + $0x48] sm:$0xff]
        %v1444 = vld [vmem:[%s1433 + $0x50] sm:$0xff]
        %v1445 = vld [vmem:[%s1433 + $0x58] sm:$0xff]
        %v1446 = vld [vmem:[%s1433 + $0x60] sm:$0xff]
        %v1447 = vld [vmem:[%s1433 + $0x68] sm:$0xff]
        %v1448 = vld [vmem:[%s1433 + $0x70] sm:$0xff]
        %v1449 = vld [vmem:[%s1433 + $0x78] sm:$0xff]
        %s1450 = scalar_lea.vmem %s2, 2
        %v1451 = vld [vmem:[%s1450] sm:$0x1]
        %v1453 = vlaneseq
        %v1454 = vshrl.u32 %v1453, 7
        %v1455 = vsub.s32 0, %v1454
        %v1456 = vrot.slane %v1451, %v1455
        %1458 = vmatprep.subr.mxu0 0.0
        %1459 = vmatpush1.msra.mxu0 %v1434
        %1460 = vmatprep.subr.mxu0 0.0
        %1461 = vmatpush1.msra.mxu0 %v1435
        %1462 = vmatprep.subr.mxu0 0.0
        %1463 = vmatpush1.msra.mxu0 %v1436
        %1464 = vmatprep.subr.mxu0 0.0
        %1465 = vmatpush1.msra.mxu0 %v1437
        %1466 = vmatprep.subr.mxu0 0.0
        %1467 = vmatpush1.msra.mxu0 %v1438
        %1468 = vmatprep.subr.mxu0 0.0
        %1469 = vmatpush1.msra.mxu0 %v1439
        %1470 = vmatprep.subr.mxu0 0.0
        %1471 = vmatpush1.msra.mxu0 %v1440
        %1472 = vmatprep.subr.mxu0 0.0
        %1473 = vmatpush1.msra.mxu0 %v1441
        %1474 = vmatprep.subr.mxu0 0.0
        %1475 = vmatpush1.msra.mxu0 %v1442
        %1476 = vmatprep.subr.mxu0 0.0
        %1477 = vmatpush1.msra.mxu0 %v1443
        %1478 = vmatprep.subr.mxu0 0.0
        %1479 = vmatpush1.msra.mxu0 %v1444
        %1480 = vmatprep.subr.mxu0 0.0
        %1481 = vmatpush1.msra.mxu0 %v1445
        %1482 = vmatprep.subr.mxu0 0.0
        %1483 = vmatpush1.msra.mxu0 %v1446
        %1484 = vmatprep.subr.mxu0 0.0
        %1485 = vmatpush1.msra.mxu0 %v1447
        %1486 = vmatprep.subr.mxu0 0.0
        %1487 = vmatpush1.msra.mxu0 %v1448
        %1488 = vmatprep.subr.mxu0 0.0
        %1489 = vmatpush1.msra.mxu0 %v1449
        %1490 = vmatprep.subr.mxu0 0.0
        %1491 = vmatpush1.msra.mxu0 0.0
        %1492 = vmatprep.subr.mxu0 0.0
        %1493 = vmatpush1.msra.mxu0 0.0
        %1494 = vmatprep.subr.mxu0 0.0
        %1495 = vmatpush1.msra.mxu0 0.0
        %1496 = vmatprep.subr.mxu0 0.0
        %1497 = vmatpush1.msra.mxu0 0.0
        %1498 = vmatprep.subr.mxu0 0.0
        %1499 = vmatpush1.msra.mxu0 0.0
        %1500 = vmatprep.subr.mxu0 0.0
        %1501 = vmatpush1.msra.mxu0 0.0
        %1502 = vmatprep.subr.mxu0 0.0
        %1503 = vmatpush1.msra.mxu0 0.0
        %1504 = vmatprep.subr.mxu0 0.0
        %1505 = vmatpush1.msra.mxu0 0.0
        %1506 = vmatprep.subr.mxu0 0.0
        %1507 = vmatpush1.msra.mxu0 0.0
        %1508 = vmatprep.subr.mxu0 0.0
        %1509 = vmatpush1.msra.mxu0 0.0
        %1510 = vmatprep.subr.mxu0 0.0
        %1511 = vmatpush1.msra.mxu0 0.0
        %1512 = vmatprep.subr.mxu0 0.0
        %1513 = vmatpush1.msra.mxu0 0.0
        %1514 = vmatprep.subr.mxu0 0.0
        %1515 = vmatpush1.msra.mxu0 0.0
        %1516 = vmatprep.subr.mxu0 0.0
        %1517 = vmatpush1.msra.mxu0 0.0
        %1518 = vmatprep.subr.mxu0 0.0
        %1519 = vmatpush1.msra.mxu0 0.0
        %1520 = vmatprep.subr.mxu0 0.0
        %1521 = vmatpush1.msra.mxu0 0.0
        %1522 = vmatprep.mubr.f32.mxu0 0.0
        %1523 = vmatmul.mubr.f32.gmra.mrb[0].mxu0 %v382
        %v1524 = vpop.f32.mrb[0].mxu0
        %v1525 = vadd.f32 %v1456, %v1524
        %v1526 = vpop.f32.mrb[0].mxu0
        %1527 = vdwg.mxu0
        %s1528 = scalar_lea.vmem %s3, 256
        %v1529 = vld [vmem:[%s1528] sm:$0xff]
        %v1530 = vld [vmem:[%s1528 + $0x8] sm:$0xff]
        %v1531 = vld [vmem:[%s1528 + $0x10] sm:$0xff]
        %v1532 = vld [vmem:[%s1528 + $0x18] sm:$0xff]
        %v1533 = vld [vmem:[%s1528 + $0x20] sm:$0xff]
        %v1534 = vld [vmem:[%s1528 + $0x28] sm:$0xff]
        %v1535 = vld [vmem:[%s1528 + $0x30] sm:$0xff]
        %v1536 = vld [vmem:[%s1528 + $0x38] sm:$0xff]
        %v1537 = vld [vmem:[%s1528 + $0x40] sm:$0xff]
        %v1538 = vld [vmem:[%s1528 + $0x48] sm:$0xff]
        %v1539 = vld [vmem:[%s1528 + $0x50] sm:$0xff]
        %v1540 = vld [vmem:[%s1528 + $0x58] sm:$0xff]
        %v1541 = vld [vmem:[%s1528 + $0x60] sm:$0xff]
        %v1542 = vld [vmem:[%s1528 + $0x68] sm:$0xff]
        %v1543 = vld [vmem:[%s1528 + $0x70] sm:$0xff]
        %v1544 = vld [vmem:[%s1528 + $0x78] sm:$0xff]
        %s1545 = scalar_lea.vmem %s4, 2
        %v1546 = vld [vmem:[%s1545] sm:$0x1]
        %v1548 = vlaneseq
        %v1549 = vshrl.u32 %v1548, 7
        %v1550 = vsub.s32 0, %v1549
        %v1551 = vrot.slane %v1546, %v1550
        %1553 = vmatprep.subr.mxu0 0.0
        %1554 = vmatpush1.msra.mxu0 %v1529
        %1555 = vmatprep.subr.mxu0 0.0
        %1556 = vmatpush1.msra.mxu0 %v1530
        %1557 = vmatprep.subr.mxu0 0.0
        %1558 = vmatpush1.msra.mxu0 %v1531
        %1559 = vmatprep.subr.mxu0 0.0
        %1560 = vmatpush1.msra.mxu0 %v1532
        %1561 = vmatprep.subr.mxu0 0.0
        %1562 = vmatpush1.msra.mxu0 %v1533
        %1563 = vmatprep.subr.mxu0 0.0
        %1564 = vmatpush1.msra.mxu0 %v1534
        %1565 = vmatprep.subr.mxu0 0.0
        %1566 = vmatpush1.msra.mxu0 %v1535
        %1567 = vmatprep.subr.mxu0 0.0
        %1568 = vmatpush1.msra.mxu0 %v1536
        %1569 = vmatprep.subr.mxu0 0.0
        %1570 = vmatpush1.msra.mxu0 %v1537
        %1571 = vmatprep.subr.mxu0 0.0
        %1572 = vmatpush1.msra.mxu0 %v1538
        %1573 = vmatprep.subr.mxu0 0.0
        %1574 = vmatpush1.msra.mxu0 %v1539
        %1575 = vmatprep.subr.mxu0 0.0
        %1576 = vmatpush1.msra.mxu0 %v1540
        %1577 = vmatprep.subr.mxu0 0.0
        %1578 = vmatpush1.msra.mxu0 %v1541
        %1579 = vmatprep.subr.mxu0 0.0
        %1580 = vmatpush1.msra.mxu0 %v1542
        %1581 = vmatprep.subr.mxu0 0.0
        %1582 = vmatpush1.msra.mxu0 %v1543
        %1583 = vmatprep.subr.mxu0 0.0
        %1584 = vmatpush1.msra.mxu0 %v1544
        %1585 = vmatprep.subr.mxu0 0.0
        %1586 = vmatpush1.msra.mxu0 0.0
        %1587 = vmatprep.subr.mxu0 0.0
        %1588 = vmatpush1.msra.mxu0 0.0
        %1589 = vmatprep.subr.mxu0 0.0
        %1590 = vmatpush1.msra.mxu0 0.0
        %1591 = vmatprep.subr.mxu0 0.0
        %1592 = vmatpush1.msra.mxu0 0.0
        %1593 = vmatprep.subr.mxu0 0.0
        %1594 = vmatpush1.msra.mxu0 0.0
        %1595 = vmatprep.subr.mxu0 0.0
        %1596 = vmatpush1.msra.mxu0 0.0
        %1597 = vmatprep.subr.mxu0 0.0
        %1598 = vmatpush1.msra.mxu0 0.0
        %1599 = vmatprep.subr.mxu0 0.0
        %1600 = vmatpush1.msra.mxu0 0.0
        %1601 = vmatprep.subr.mxu0 0.0
        %1602 = vmatpush1.msra.mxu0 0.0
        %1603 = vmatprep.subr.mxu0 0.0
        %1604 = vmatpush1.msra.mxu0 0.0
        %1605 = vmatprep.subr.mxu0 0.0
        %1606 = vmatpush1.msra.mxu0 0.0
        %1607 = vmatprep.subr.mxu0 0.0
        %1608 = vmatpush1.msra.mxu0 0.0
        %1609 = vmatprep.subr.mxu0 0.0
        %1610 = vmatpush1.msra.mxu0 0.0
        %1611 = vmatprep.subr.mxu0 0.0
        %1612 = vmatpush1.msra.mxu0 0.0
        %1613 = vmatprep.subr.mxu0 0.0
        %1614 = vmatpush1.msra.mxu0 0.0
        %1615 = vmatprep.subr.mxu0 0.0
        %1616 = vmatpush1.msra.mxu0 0.0
        %1617 = vmatprep.mubr.f32.mxu0 0.0
        %1618 = vmatmul.mubr.f32.gmra.mrb[0].mxu0 %v382
        %v1619 = vpop.f32.mrb[0].mxu0
        %v1620 = vadd.f32 %v1551, %v1619
        %v1621 = vpop.f32.mrb[0].mxu0
        %1622 = vdwg.mxu0
        %s1623 = scalar_lea.vmem %s5, 256
        %v1624 = vld [vmem:[%s1623] sm:$0xff]
        %v1625 = vld [vmem:[%s1623 + $0x8] sm:$0xff]
        %v1626 = vld [vmem:[%s1623 + $0x10] sm:$0xff]
        %v1627 = vld [vmem:[%s1623 + $0x18] sm:$0xff]
        %v1628 = vld [vmem:[%s1623 + $0x20] sm:$0xff]
        %v1629 = vld [vmem:[%s1623 + $0x28] sm:$0xff]
        %v1630 = vld [vmem:[%s1623 + $0x30] sm:$0xff]
        %v1631 = vld [vmem:[%s1623 + $0x38] sm:$0xff]
        %v1632 = vld [vmem:[%s1623 + $0x40] sm:$0xff]
        %v1633 = vld [vmem:[%s1623 + $0x48] sm:$0xff]
        %v1634 = vld [vmem:[%s1623 + $0x50] sm:$0xff]
        %v1635 = vld [vmem:[%s1623 + $0x58] sm:$0xff]
        %v1636 = vld [vmem:[%s1623 + $0x60] sm:$0xff]
        %v1637 = vld [vmem:[%s1623 + $0x68] sm:$0xff]
        %v1638 = vld [vmem:[%s1623 + $0x70] sm:$0xff]
        %v1639 = vld [vmem:[%s1623 + $0x78] sm:$0xff]
        %s1640 = scalar_lea.vmem %s6, 2
        %v1641 = vld [vmem:[%s1640] sm:$0x1]
        %v1643 = vlaneseq
        %v1644 = vshrl.u32 %v1643, 7
        %v1645 = vsub.s32 0, %v1644
        %v1646 = vrot.slane %v1641, %v1645
        %1648 = vmatprep.subr.mxu0 0.0
        %1649 = vmatpush1.msra.mxu0 %v1624
        %1650 = vmatprep.subr.mxu0 0.0
        %1651 = vmatpush1.msra.mxu0 %v1625
        %1652 = vmatprep.subr.mxu0 0.0
        %1653 = vmatpush1.msra.mxu0 %v1626
        %1654 = vmatprep.subr.mxu0 0.0
        %1655 = vmatpush1.msra.mxu0 %v1627
        %1656 = vmatprep.subr.mxu0 0.0
        %1657 = vmatpush1.msra.mxu0 %v1628
        %1658 = vmatprep.subr.mxu0 0.0
        %1659 = vmatpush1.msra.mxu0 %v1629
        %1660 = vmatprep.subr.mxu0 0.0
        %1661 = vmatpush1.msra.mxu0 %v1630
        %1662 = vmatprep.subr.mxu0 0.0
        %1663 = vmatpush1.msra.mxu0 %v1631
        %1664 = vmatprep.subr.mxu0 0.0
        %1665 = vmatpush1.msra.mxu0 %v1632
        %1666 = vmatprep.subr.mxu0 0.0
        %1667 = vmatpush1.msra.mxu0 %v1633
        %1668 = vmatprep.subr.mxu0 0.0
        %1669 = vmatpush1.msra.mxu0 %v1634
        %1670 = vmatprep.subr.mxu0 0.0
        %1671 = vmatpush1.msra.mxu0 %v1635
        %1672 = vmatprep.subr.mxu0 0.0
        %1673 = vmatpush1.msra.mxu0 %v1636
        %1674 = vmatprep.subr.mxu0 0.0
        %1675 = vmatpush1.msra.mxu0 %v1637
        %1676 = vmatprep.subr.mxu0 0.0
        %1677 = vmatpush1.msra.mxu0 %v1638
        %1678 = vmatprep.subr.mxu0 0.0
        %1679 = vmatpush1.msra.mxu0 %v1639
        %1680 = vmatprep.subr.mxu0 0.0
        %1681 = vmatpush1.msra.mxu0 0.0
        %1682 = vmatprep.subr.mxu0 0.0
        %1683 = vmatpush1.msra.mxu0 0.0
        %1684 = vmatprep.subr.mxu0 0.0
        %1685 = vmatpush1.msra.mxu0 0.0
        %1686 = vmatprep.subr.mxu0 0.0
        %1687 = vmatpush1.msra.mxu0 0.0
        %1688 = vmatprep.subr.mxu0 0.0
        %1689 = vmatpush1.msra.mxu0 0.0
        %1690 = vmatprep.subr.mxu0 0.0
        %1691 = vmatpush1.msra.mxu0 0.0
        %1692 = vmatprep.subr.mxu0 0.0
        %1693 = vmatpush1.msra.mxu0 0.0
        %1694 = vmatprep.subr.mxu0 0.0
        %1695 = vmatpush1.msra.mxu0 0.0
        %1696 = vmatprep.subr.mxu0 0.0
        %1697 = vmatpush1.msra.mxu0 0.0
        %1698 = vmatprep.subr.mxu0 0.0
        %1699 = vmatpush1.msra.mxu0 0.0
        %1700 = vmatprep.subr.mxu0 0.0
        %1701 = vmatpush1.msra.mxu0 0.0
        %1702 = vmatprep.subr.mxu0 0.0
        %1703 = vmatpush1.msra.mxu0 0.0
        %1704 = vmatprep.subr.mxu0 0.0
        %1705 = vmatpush1.msra.mxu0 0.0
        %1706 = vmatprep.subr.mxu0 0.0
        %1707 = vmatpush1.msra.mxu0 0.0
        %1708 = vmatprep.subr.mxu0 0.0
        %1709 = vmatpush1.msra.mxu0 0.0
        %1710 = vmatprep.subr.mxu0 0.0
        %1711 = vmatpush1.msra.mxu0 0.0
        %1712 = vmatprep.mubr.f32.mxu0 0.0
        %1713 = vmatmul.mubr.f32.gmra.mrb[0].mxu0 %v382
        %v1714 = vpop.f32.mrb[0].mxu0
        %v1715 = vadd.f32 %v1646, %v1714
        %v1716 = vpop.f32.mrb[0].mxu0
        %1717 = vdwg.mxu0
        %v1719 = vsel %vm667, %v1525, 0
        %v1722 = vsel %vm667, %v1620, 0
        %1724 = vmatprep.subr.mxu0 0.0
        %1725 = vmatpush1.xpose.msra.mxu0 %v1722
        %1726 = vmatprep.subr.mxu0 0.0
        %1727 = vmatpush1.xpose.msra.mxu0 0.0
        %1728 = vmatprep.subr.mxu0 0.0
        %1729 = vmatpush1.xpose.msra.mxu0 0.0
        %1730 = vmatprep.subr.mxu0 0.0
        %1731 = vmatpush1.xpose.msra.mxu0 0.0
        %1732 = vmatprep.subr.mxu0 0.0
        %1733 = vmatpush1.xpose.msra.mxu0 0.0
        %1734 = vmatprep.subr.mxu0 0.0
        %1735 = vmatpush1.xpose.msra.mxu0 0.0
        %1736 = vmatprep.subr.mxu0 0.0
        %1737 = vmatpush1.xpose.msra.mxu0 0.0
        %1738 = vmatprep.subr.mxu0 0.0
        %1739 = vmatpush1.xpose.msra.mxu0 0.0
        %1740 = vmatprep.subr.mxu0 0.0
        %1741 = vmatpush1.xpose.msra.mxu0 0.0
        %1742 = vmatprep.subr.mxu0 0.0
        %1743 = vmatpush1.xpose.msra.mxu0 0.0
        %1744 = vmatprep.subr.mxu0 0.0
        %1745 = vmatpush1.xpose.msra.mxu0 0.0
        %1746 = vmatprep.subr.mxu0 0.0
        %1747 = vmatpush1.xpose.msra.mxu0 0.0
        %1748 = vmatprep.subr.mxu0 0.0
        %1749 = vmatpush1.xpose.msra.mxu0 0.0
        %1750 = vmatprep.subr.mxu0 0.0
        %1751 = vmatpush1.xpose.msra.mxu0 0.0
        %1752 = vmatprep.subr.mxu0 0.0
        %1753 = vmatpush1.xpose.msra.mxu0 0.0
        %1754 = vmatprep.subr.mxu0 0.0
        %1755 = vmatpush1.xpose.msra.mxu0 0.0
        %1756 = vmatprep.subr.mxu0 0.0
        %1757 = vmatpush1.xpose.msra.mxu0 0.0
        %1758 = vmatprep.subr.mxu0 0.0
        %1759 = vmatpush1.xpose.msra.mxu0 0.0
        %1760 = vmatprep.subr.mxu0 0.0
        %1761 = vmatpush1.xpose.msra.mxu0 0.0
        %1762 = vmatprep.subr.mxu0 0.0
        %1763 = vmatpush1.xpose.msra.mxu0 0.0
        %1764 = vmatprep.subr.mxu0 0.0
        %1765 = vmatpush1.xpose.msra.mxu0 0.0
        %1766 = vmatprep.subr.mxu0 0.0
        %1767 = vmatpush1.xpose.msra.mxu0 0.0
        %1768 = vmatprep.subr.mxu0 0.0
        %1769 = vmatpush1.xpose.msra.mxu0 0.0
        %1770 = vmatprep.subr.mxu0 0.0
        %1771 = vmatpush1.xpose.msra.mxu0 0.0
        %1772 = vmatprep.subr.mxu0 0.0
        %1773 = vmatpush1.xpose.msra.mxu0 0.0
        %1774 = vmatprep.subr.mxu0 0.0
        %1775 = vmatpush1.xpose.msra.mxu0 0.0
        %1776 = vmatprep.subr.mxu0 0.0
        %1777 = vmatpush1.xpose.msra.mxu0 0.0
        %1778 = vmatprep.subr.mxu0 0.0
        %1779 = vmatpush1.xpose.msra.mxu0 0.0
        %1780 = vmatprep.subr.mxu0 0.0
        %1781 = vmatpush1.xpose.msra.mxu0 0.0
        %1782 = vmatprep.subr.mxu0 0.0
        %1783 = vmatpush1.xpose.msra.mxu0 0.0
        %1784 = vmatprep.subr.mxu0 0.0
        %1785 = vmatpush1.xpose.msra.mxu0 0.0
        %1786 = vmatprep.subr.mxu0 0.0
        %1787 = vmatpush1.xpose.msra.mxu0 0.0
        %1788 = vmatprep.mubr.f32.mxu0 0.0
        %1789 = vmatmul.mubr.f32.gmra.mrb[0].mxu0 %v1719
        %v1790 = vpop.f32.mrb[0].mxu0
        %v1791 = vadd.f32 0.0, %v1790
        %v1792 = vpop.f32.mrb[0].mxu0
        %1793 = vdwg.mxu0
        %v1794 = vmul.f32 %v1791, 0.17677669
        %v1795 = vsel %vm387, %v1794, -1e+30
        %v1796 = vsel %vm746, %v1795, -inf
        %1797 = vmax.xlane.f32.xlu0 %v1796
        %v1798 = vpop.xlane.xlu0 %1797
        %v1799 = vsub.f32 %v1795, %v1798
        %v1800 = vmul.f32 %v1799, 1.442695
        %v1801 = vpow.pop %v1800
        %v1802 = vsel %vm746, %v1801, 0.0
        %1803 = vadd.xlane.f32.xlu0 %v1802
        %v1804 = vpop.xlane.xlu0 %1803
        %v1805 = vrcp.pop %v1804
        %v1806 = vmul.f32 %v1801, %v1805
        %v1808 = vsel %vm746, %v1806, 0
        %1810 = vmatprep.subr.mxu0 0.0
        %1811 = vmatpush1.msra.mxu0 %v1715
        %1812 = vmatprep.subr.mxu0 0.0
        %1813 = vmatpush1.msra.mxu0 0.0
        %1814 = vmatprep.subr.mxu0 0.0
        %1815 = vmatpush1.msra.mxu0 0.0
        %1816 = vmatprep.subr.mxu0 0.0
        %1817 = vmatpush1.msra.mxu0 0.0
        %1818 = vmatprep.subr.mxu0 0.0
        %1819 = vmatpush1.msra.mxu0 0.0
        %1820 = vmatprep.subr.mxu0 0.0
        %1821 = vmatpush1.msra.mxu0 0.0
        %1822 = vmatprep.subr.mxu0 0.0
        %1823 = vmatpush1.msra.mxu0 0.0
        %1824 = vmatprep.subr.mxu0 0.0
        %1825 = vmatpush1.msra.mxu0 0.0
        %1826 = vmatprep.subr.mxu0 0.0
        %1827 = vmatpush1.msra.mxu0 0.0
        %1828 = vmatprep.subr.mxu0 0.0
        %1829 = vmatpush1.msra.mxu0 0.0
        %1830 = vmatprep.subr.mxu0 0.0
        %1831 = vmatpush1.msra.mxu0 0.0
        %1832 = vmatprep.subr.mxu0 0.0
        %1833 = vmatpush1.msra.mxu0 0.0
        %1834 = vmatprep.subr.mxu0 0.0
        %1835 = vmatpush1.msra.mxu0 0.0
        %1836 = vmatprep.subr.mxu0 0.0
        %1837 = vmatpush1.msra.mxu0 0.0
        %1838 = vmatprep.subr.mxu0 0.0
        %1839 = vmatpush1.msra.mxu0 0.0
        %1840 = vmatprep.subr.mxu0 0.0
        %1841 = vmatpush1.msra.mxu0 0.0
        %1842 = vmatprep.subr.mxu0 0.0
        %1843 = vmatpush1.msra.mxu0 0.0
        %1844 = vmatprep.subr.mxu0 0.0
        %1845 = vmatpush1.msra.mxu0 0.0
        %1846 = vmatprep.subr.mxu0 0.0
        %1847 = vmatpush1.msra.mxu0 0.0
        %1848 = vmatprep.subr.mxu0 0.0
        %1849 = vmatpush1.msra.mxu0 0.0
        %1850 = vmatprep.subr.mxu0 0.0
        %1851 = vmatpush1.msra.mxu0 0.0
        %1852 = vmatprep.subr.mxu0 0.0
        %1853 = vmatpush1.msra.mxu0 0.0
        %1854 = vmatprep.subr.mxu0 0.0
        %1855 = vmatpush1.msra.mxu0 0.0
        %1856 = vmatprep.subr.mxu0 0.0
        %1857 = vmatpush1.msra.mxu0 0.0
        %1858 = vmatprep.subr.mxu0 0.0
        %1859 = vmatpush1.msra.mxu0 0.0
        %1860 = vmatprep.subr.mxu0 0.0
        %1861 = vmatpush1.msra.mxu0 0.0
        %1862 = vmatprep.subr.mxu0 0.0
        %1863 = vmatpush1.msra.mxu0 0.0
        %1864 = vmatprep.subr.mxu0 0.0
        %1865 = vmatpush1.msra.mxu0 0.0
        %1866 = vmatprep.subr.mxu0 0.0
        %1867 = vmatpush1.msra.mxu0 0.0
        %1868 = vmatprep.subr.mxu0 0.0
        %1869 = vmatpush1.msra.mxu0 0.0
        %1870 = vmatprep.subr.mxu0 0.0
        %1871 = vmatpush1.msra.mxu0 0.0
        %1872 = vmatprep.subr.mxu0 0.0
        %1873 = vmatpush1.msra.mxu0 0.0
        %1874 = vmatprep.mubr.f32.mxu0 0.0
        %1875 = vmatmul.mubr.f32.gmra.mrb[0].mxu0 %v1808
        %v1876 = vpop.f32.mrb[0].mxu0
        %v1877 = vadd.f32 0.0, %v1876
        %v1878 = vpop.f32.mrb[0].mxu0
        %1879 = vdwg.mxu0
        %s1880 = scalar_lea.vmem %s7, 64
        %v1881 = vld [vmem:[%s1880] sm:$0xff]
        %v1882 = vld [vmem:[%s1880 + $0x8] sm:$0xff]
        %v1883 = vld [vmem:[%s1880 + $0x10] sm:$0xff]
        %v1884 = vld [vmem:[%s1880 + $0x18] sm:$0xff]
        %v1886 = vsel %vm667, %v1877, 0
        %1888 = vmatprep.subr.mxu0 0.0
        %1889 = vmatpush1.msra.mxu0 %v1881
        %1890 = vmatprep.subr.mxu0 0.0
        %1891 = vmatpush1.msra.mxu0 %v1882
        %1892 = vmatprep.subr.mxu0 0.0
        %1893 = vmatpush1.msra.mxu0 %v1883
        %1894 = vmatprep.subr.mxu0 0.0
        %1895 = vmatpush1.msra.mxu0 %v1884
        %1896 = vmatprep.subr.mxu0 0.0
        %1897 = vmatpush1.msra.mxu0 0.0
        %1898 = vmatprep.subr.mxu0 0.0
        %1899 = vmatpush1.msra.mxu0 0.0
        %1900 = vmatprep.subr.mxu0 0.0
        %1901 = vmatpush1.msra.mxu0 0.0
        %1902 = vmatprep.subr.mxu0 0.0
        %1903 = vmatpush1.msra.mxu0 0.0
        %1904 = vmatprep.subr.mxu0 0.0
        %1905 = vmatpush1.msra.mxu0 0.0
        %1906 = vmatprep.subr.mxu0 0.0
        %1907 = vmatpush1.msra.mxu0 0.0
        %1908 = vmatprep.subr.mxu0 0.0
        %1909 = vmatpush1.msra.mxu0 0.0
        %1910 = vmatprep.subr.mxu0 0.0
        %1911 = vmatpush1.msra.mxu0 0.0
        %1912 = vmatprep.subr.mxu0 0.0
        %1913 = vmatpush1.msra.mxu0 0.0
        %1914 = vmatprep.subr.mxu0 0.0
        %1915 = vmatpush1.msra.mxu0 0.0
        %1916 = vmatprep.subr.mxu0 0.0
        %1917 = vmatpush1.msra.mxu0 0.0
        %1918 = vmatprep.subr.mxu0 0.0
        %1919 = vmatpush1.msra.mxu0 0.0
        %1920 = vmatprep.subr.mxu0 0.0
        %1921 = vmatpush1.msra.mxu0 0.0
        %1922 = vmatprep.subr.mxu0 0.0
        %1923 = vmatpush1.msra.mxu0 0.0
        %1924 = vmatprep.subr.mxu0 0.0
        %1925 = vmatpush1.msra.mxu0 0.0
        %1926 = vmatprep.subr.mxu0 0.0
        %1927 = vmatpush1.msra.mxu0 0.0
        %1928 = vmatprep.subr.mxu0 0.0
        %1929 = vmatpush1.msra.mxu0 0.0
        %1930 = vmatprep.subr.mxu0 0.0
        %1931 = vmatpush1.msra.mxu0 0.0
        %1932 = vmatprep.subr.mxu0 0.0
        %1933 = vmatpush1.msra.mxu0 0.0
        %1934 = vmatprep.subr.mxu0 0.0
        %1935 = vmatpush1.msra.mxu0 0.0
        %1936 = vmatprep.subr.mxu0 0.0
        %1937 = vmatpush1.msra.mxu0 0.0
        %1938 = vmatprep.subr.mxu0 0.0
        %1939 = vmatpush1.msra.mxu0 0.0
        %1940 = vmatprep.subr.mxu0 0.0
        %1941 = vmatpush1.msra.mxu0 0.0
        %1942 = vmatprep.subr.mxu0 0.0
        %1943 = vmatpush1.msra.mxu0 0.0
        %1944 = vmatprep.subr.mxu0 0.0
        %1945 = vmatpush1.msra.mxu0 0.0
        %1946 = vmatprep.subr.mxu0 0.0
        %1947 = vmatpush1.msra.mxu0 0.0
        %1948 = vmatprep.subr.mxu0 0.0
        %1949 = vmatpush1.msra.mxu0 0.0
        %1950 = vmatprep.subr.mxu0 0.0
        %1951 = vmatpush1.msra.mxu0 0.0
        %1952 = vmatprep.mubr.f32.mxu0 0.0
        %1953 = vmatmul.mubr.f32.gmra.mrb[0].mxu0 %v1886
        %v1954 = vpop.f32.mrb[0].mxu0
        %v1955 = vadd.f32 0.0, %v1954
        %v1956 = vpop.f32.mrb[0].mxu0
        %1957 = vdwg.mxu0
        %v1958 = vadd.f32 %v1430, %v1955
        %s1959 = scalar_lea.vmem %s1, 384
        %v1960 = vld [vmem:[%s1959] sm:$0xff]
        %v1961 = vld [vmem:[%s1959 + $0x8] sm:$0xff]
        %v1962 = vld [vmem:[%s1959 + $0x10] sm:$0xff]
        %v1963 = vld [vmem:[%s1959 + $0x18] sm:$0xff]
        %v1964 = vld [vmem:[%s1959 + $0x20] sm:$0xff]
        %v1965 = vld [vmem:[%s1959 + $0x28] sm:$0xff]
        %v1966 = vld [vmem:[%s1959 + $0x30] sm:$0xff]
        %v1967 = vld [vmem:[%s1959 + $0x38] sm:$0xff]
        %v1968 = vld [vmem:[%s1959 + $0x40] sm:$0xff]
        %v1969 = vld [vmem:[%s1959 + $0x48] sm:$0xff]
        %v1970 = vld [vmem:[%s1959 + $0x50] sm:$0xff]
        %v1971 = vld [vmem:[%s1959 + $0x58] sm:$0xff]
        %v1972 = vld [vmem:[%s1959 + $0x60] sm:$0xff]
        %v1973 = vld [vmem:[%s1959 + $0x68] sm:$0xff]
        %v1974 = vld [vmem:[%s1959 + $0x70] sm:$0xff]
        %v1975 = vld [vmem:[%s1959 + $0x78] sm:$0xff]
        %s1976 = scalar_lea.vmem %s2, 3
        %v1977 = vld [vmem:[%s1976] sm:$0x1]
        %v1979 = vlaneseq
        %v1980 = vshrl.u32 %v1979, 7
        %v1981 = vsub.s32 0, %v1980
        %v1982 = vrot.slane %v1977, %v1981
        %1984 = vmatprep.subr.mxu0 0.0
        %1985 = vmatpush1.msra.mxu0 %v1960
        %1986 = vmatprep.subr.mxu0 0.0
        %1987 = vmatpush1.msra.mxu0 %v1961
        %1988 = vmatprep.subr.mxu0 0.0
        %1989 = vmatpush1.msra.mxu0 %v1962
        %1990 = vmatprep.subr.mxu0 0.0
        %1991 = vmatpush1.msra.mxu0 %v1963
        %1992 = vmatprep.subr.mxu0 0.0
        %1993 = vmatpush1.msra.mxu0 %v1964
        %1994 = vmatprep.subr.mxu0 0.0
        %1995 = vmatpush1.msra.mxu0 %v1965
        %1996 = vmatprep.subr.mxu0 0.0
        %1997 = vmatpush1.msra.mxu0 %v1966
        %1998 = vmatprep.subr.mxu0 0.0
        %1999 = vmatpush1.msra.mxu0 %v1967
        %2000 = vmatprep.subr.mxu0 0.0
        %2001 = vmatpush1.msra.mxu0 %v1968
        %2002 = vmatprep.subr.mxu0 0.0
        %2003 = vmatpush1.msra.mxu0 %v1969
        %2004 = vmatprep.subr.mxu0 0.0
        %2005 = vmatpush1.msra.mxu0 %v1970
        %2006 = vmatprep.subr.mxu0 0.0
        %2007 = vmatpush1.msra.mxu0 %v1971
        %2008 = vmatprep.subr.mxu0 0.0
        %2009 = vmatpush1.msra.mxu0 %v1972
        %2010 = vmatprep.subr.mxu0 0.0
        %2011 = vmatpush1.msra.mxu0 %v1973
        %2012 = vmatprep.subr.mxu0 0.0
        %2013 = vmatpush1.msra.mxu0 %v1974
        %2014 = vmatprep.subr.mxu0 0.0
        %2015 = vmatpush1.msra.mxu0 %v1975
        %2016 = vmatprep.subr.mxu0 0.0
        %2017 = vmatpush1.msra.mxu0 0.0
        %2018 = vmatprep.subr.mxu0 0.0
        %2019 = vmatpush1.msra.mxu0 0.0
        %2020 = vmatprep.subr.mxu0 0.0
        %2021 = vmatpush1.msra.mxu0 0.0
        %2022 = vmatprep.subr.mxu0 0.0
        %2023 = vmatpush1.msra.mxu0 0.0
        %2024 = vmatprep.subr.mxu0 0.0
        %2025 = vmatpush1.msra.mxu0 0.0
        %2026 = vmatprep.subr.mxu0 0.0
        %2027 = vmatpush1.msra.mxu0 0.0
        %2028 = vmatprep.subr.mxu0 0.0
        %2029 = vmatpush1.msra.mxu0 0.0
        %2030 = vmatprep.subr.mxu0 0.0
        %2031 = vmatpush1.msra.mxu0 0.0
        %2032 = vmatprep.subr.mxu0 0.0
        %2033 = vmatpush1.msra.mxu0 0.0
        %2034 = vmatprep.subr.mxu0 0.0
        %2035 = vmatpush1.msra.mxu0 0.0
        %2036 = vmatprep.subr.mxu0 0.0
        %2037 = vmatpush1.msra.mxu0 0.0
        %2038 = vmatprep.subr.mxu0 0.0
        %2039 = vmatpush1.msra.mxu0 0.0
        %2040 = vmatprep.subr.mxu0 0.0
        %2041 = vmatpush1.msra.mxu0 0.0
        %2042 = vmatprep.subr.mxu0 0.0
        %2043 = vmatpush1.msra.mxu0 0.0
        %2044 = vmatprep.subr.mxu0 0.0
        %2045 = vmatpush1.msra.mxu0 0.0
        %2046 = vmatprep.subr.mxu0 0.0
        %2047 = vmatpush1.msra.mxu0 0.0
        %2048 = vmatprep.mubr.f32.mxu0 0.0
        %2049 = vmatmul.mubr.f32.gmra.mrb[0].mxu0 %v382
        %v2050 = vpop.f32.mrb[0].mxu0
        %v2051 = vadd.f32 %v1982, %v2050
        %v2052 = vpop.f32.mrb[0].mxu0
        %2053 = vdwg.mxu0
        %s2054 = scalar_lea.vmem %s3, 384
        %v2055 = vld [vmem:[%s2054] sm:$0xff]
        %v2056 = vld [vmem:[%s2054 + $0x8] sm:$0xff]
        %v2057 = vld [vmem:[%s2054 + $0x10] sm:$0xff]
        %v2058 = vld [vmem:[%s2054 + $0x18] sm:$0xff]
        %v2059 = vld [vmem:[%s2054 + $0x20] sm:$0xff]
        %v2060 = vld [vmem:[%s2054 + $0x28] sm:$0xff]
        %v2061 = vld [vmem:[%s2054 + $0x30] sm:$0xff]
        %v2062 = vld [vmem:[%s2054 + $0x38] sm:$0xff]
        %v2063 = vld [vmem:[%s2054 + $0x40] sm:$0xff]
        %v2064 = vld [vmem:[%s2054 + $0x48] sm:$0xff]
        %v2065 = vld [vmem:[%s2054 + $0x50] sm:$0xff]
        %v2066 = vld [vmem:[%s2054 + $0x58] sm:$0xff]
        %v2067 = vld [vmem:[%s2054 + $0x60] sm:$0xff]
        %v2068 = vld [vmem:[%s2054 + $0x68] sm:$0xff]
        %v2069 = vld [vmem:[%s2054 + $0x70] sm:$0xff]
        %v2070 = vld [vmem:[%s2054 + $0x78] sm:$0xff]
        %s2071 = scalar_lea.vmem %s4, 3
        %v2072 = vld [vmem:[%s2071] sm:$0x1]
        %v2074 = vlaneseq
        %v2075 = vshrl.u32 %v2074, 7
        %v2076 = vsub.s32 0, %v2075
        %v2077 = vrot.slane %v2072, %v2076
        %2079 = vmatprep.subr.mxu0 0.0
        %2080 = vmatpush1.msra.mxu0 %v2055
        %2081 = vmatprep.subr.mxu0 0.0
        %2082 = vmatpush1.msra.mxu0 %v2056
        %2083 = vmatprep.subr.mxu0 0.0
        %2084 = vmatpush1.msra.mxu0 %v2057
        %2085 = vmatprep.subr.mxu0 0.0
        %2086 = vmatpush1.msra.mxu0 %v2058
        %2087 = vmatprep.subr.mxu0 0.0
        %2088 = vmatpush1.msra.mxu0 %v2059
        %2089 = vmatprep.subr.mxu0 0.0
        %2090 = vmatpush1.msra.mxu0 %v2060
        %2091 = vmatprep.subr.mxu0 0.0
        %2092 = vmatpush1.msra.mxu0 %v2061
        %2093 = vmatprep.subr.mxu0 0.0
        %2094 = vmatpush1.msra.mxu0 %v2062
        %2095 = vmatprep.subr.mxu0 0.0
        %2096 = vmatpush1.msra.mxu0 %v2063
        %2097 = vmatprep.subr.mxu0 0.0
        %2098 = vmatpush1.msra.mxu0 %v2064
        %2099 = vmatprep.subr.mxu0 0.0
        %2100 = vmatpush1.msra.mxu0 %v2065
        %2101 = vmatprep.subr.mxu0 0.0
        %2102 = vmatpush1.msra.mxu0 %v2066
        %2103 = vmatprep.subr.mxu0 0.0
        %2104 = vmatpush1.msra.mxu0 %v2067
        %2105 = vmatprep.subr.mxu0 0.0
        %2106 = vmatpush1.msra.mxu0 %v2068
        %2107 = vmatprep.subr.mxu0 0.0
        %2108 = vmatpush1.msra.mxu0 %v2069
        %2109 = vmatprep.subr.mxu0 0.0
        %2110 = vmatpush1.msra.mxu0 %v2070
        %2111 = vmatprep.subr.mxu0 0.0
        %2112 = vmatpush1.msra.mxu0 0.0
        %2113 = vmatprep.subr.mxu0 0.0
        %2114 = vmatpush1.msra.mxu0 0.0
        %2115 = vmatprep.subr.mxu0 0.0
        %2116 = vmatpush1.msra.mxu0 0.0
        %2117 = vmatprep.subr.mxu0 0.0
        %2118 = vmatpush1.msra.mxu0 0.0
        %2119 = vmatprep.subr.mxu0 0.0
        %2120 = vmatpush1.msra.mxu0 0.0
        %2121 = vmatprep.subr.mxu0 0.0
        %2122 = vmatpush1.msra.mxu0 0.0
        %2123 = vmatprep.subr.mxu0 0.0
        %2124 = vmatpush1.msra.mxu0 0.0
        %2125 = vmatprep.subr.mxu0 0.0
        %2126 = vmatpush1.msra.mxu0 0.0
        %2127 = vmatprep.subr.mxu0 0.0
        %2128 = vmatpush1.msra.mxu0 0.0
        %2129 = vmatprep.subr.mxu0 0.0
        %2130 = vmatpush1.msra.mxu0 0.0
        %2131 = vmatprep.subr.mxu0 0.0
        %2132 = vmatpush1.msra.mxu0 0.0
        %2133 = vmatprep.subr.mxu0 0.0
        %2134 = vmatpush1.msra.mxu0 0.0
        %2135 = vmatprep.subr.mxu0 0.0
        %2136 = vmatpush1.msra.mxu0 0.0
        %2137 = vmatprep.subr.mxu0 0.0
        %2138 = vmatpush1.msra.mxu0 0.0
        %2139 = vmatprep.subr.mxu0 0.0
        %2140 = vmatpush1.msra.mxu0 0.0
        %2141 = vmatprep.subr.mxu0 0.0
        %2142 = vmatpush1.msra.mxu0 0.0
        %2143 = vmatprep.mubr.f32.mxu0 0.0
        %2144 = vmatmul.mubr.f32.gmra.mrb[0].mxu0 %v382
        %v2145 = vpop.f32.mrb[0].mxu0
        %v2146 = vadd.f32 %v2077, %v2145
        %v2147 = vpop.f32.mrb[0].mxu0
        %2148 = vdwg.mxu0
        %s2149 = scalar_lea.vmem %s5, 384
        %v2150 = vld [vmem:[%s2149] sm:$0xff]
        %v2151 = vld [vmem:[%s2149 + $0x8] sm:$0xff]
        %v2152 = vld [vmem:[%s2149 + $0x10] sm:$0xff]
        %v2153 = vld [vmem:[%s2149 + $0x18] sm:$0xff]
        %v2154 = vld [vmem:[%s2149 + $0x20] sm:$0xff]
        %v2155 = vld [vmem:[%s2149 + $0x28] sm:$0xff]
        %v2156 = vld [vmem:[%s2149 + $0x30] sm:$0xff]
        %v2157 = vld [vmem:[%s2149 + $0x38] sm:$0xff]
        %v2158 = vld [vmem:[%s2149 + $0x40] sm:$0xff]
        %v2159 = vld [vmem:[%s2149 + $0x48] sm:$0xff]
        %v2160 = vld [vmem:[%s2149 + $0x50] sm:$0xff]
        %v2161 = vld [vmem:[%s2149 + $0x58] sm:$0xff]
        %v2162 = vld [vmem:[%s2149 + $0x60] sm:$0xff]
        %v2163 = vld [vmem:[%s2149 + $0x68] sm:$0xff]
        %v2164 = vld [vmem:[%s2149 + $0x70] sm:$0xff]
        %v2165 = vld [vmem:[%s2149 + $0x78] sm:$0xff]
        %s2166 = scalar_lea.vmem %s6, 3
        %v2167 = vld [vmem:[%s2166] sm:$0x1]
        %v2169 = vlaneseq
        %v2170 = vshrl.u32 %v2169, 7
        %v2171 = vsub.s32 0, %v2170
        %v2172 = vrot.slane %v2167, %v2171
        %2174 = vmatprep.subr.mxu0 0.0
        %2175 = vmatpush1.msra.mxu0 %v2150
        %2176 = vmatprep.subr.mxu0 0.0
        %2177 = vmatpush1.msra.mxu0 %v2151
        %2178 = vmatprep.subr.mxu0 0.0
        %2179 = vmatpush1.msra.mxu0 %v2152
        %2180 = vmatprep.subr.mxu0 0.0
        %2181 = vmatpush1.msra.mxu0 %v2153
        %2182 = vmatprep.subr.mxu0 0.0
        %2183 = vmatpush1.msra.mxu0 %v2154
        %2184 = vmatprep.subr.mxu0 0.0
        %2185 = vmatpush1.msra.mxu0 %v2155
        %2186 = vmatprep.subr.mxu0 0.0
        %2187 = vmatpush1.msra.mxu0 %v2156
        %2188 = vmatprep.subr.mxu0 0.0
        %2189 = vmatpush1.msra.mxu0 %v2157
        %2190 = vmatprep.subr.mxu0 0.0
        %2191 = vmatpush1.msra.mxu0 %v2158
        %2192 = vmatprep.subr.mxu0 0.0
        %2193 = vmatpush1.msra.mxu0 %v2159
        %2194 = vmatprep.subr.mxu0 0.0
        %2195 = vmatpush1.msra.mxu0 %v2160
        %2196 = vmatprep.subr.mxu0 0.0
        %2197 = vmatpush1.msra.mxu0 %v2161
        %2198 = vmatprep.subr.mxu0 0.0
        %2199 = vmatpush1.msra.mxu0 %v2162
        %2200 = vmatprep.subr.mxu0 0.0
        %2201 = vmatpush1.msra.mxu0 %v2163
        %2202 = vmatprep.subr.mxu0 0.0
        %2203 = vmatpush1.msra.mxu0 %v2164
        %2204 = vmatprep.subr.mxu0 0.0
        %2205 = vmatpush1.msra.mxu0 %v2165
        %2206 = vmatprep.subr.mxu0 0.0
        %2207 = vmatpush1.msra.mxu0 0.0
        %2208 = vmatprep.subr.mxu0 0.0
        %2209 = vmatpush1.msra.mxu0 0.0
        %2210 = vmatprep.subr.mxu0 0.0
        %2211 = vmatpush1.msra.mxu0 0.0
        %2212 = vmatprep.subr.mxu0 0.0
        %2213 = vmatpush1.msra.mxu0 0.0
        %2214 = vmatprep.subr.mxu0 0.0
        %2215 = vmatpush1.msra.mxu0 0.0
        %2216 = vmatprep.subr.mxu0 0.0
        %2217 = vmatpush1.msra.mxu0 0.0
        %2218 = vmatprep.subr.mxu0 0.0
        %2219 = vmatpush1.msra.mxu0 0.0
        %2220 = vmatprep.subr.mxu0 0.0
        %2221 = vmatpush1.msra.mxu0 0.0
        %2222 = vmatprep.subr.mxu0 0.0
        %2223 = vmatpush1.msra.mxu0 0.0
        %2224 = vmatprep.subr.mxu0 0.0
        %2225 = vmatpush1.msra.mxu0 0.0
        %2226 = vmatprep.subr.mxu0 0.0
        %2227 = vmatpush1.msra.mxu0 0.0
        %2228 = vmatprep.subr.mxu0 0.0
        %2229 = vmatpush1.msra.mxu0 0.0
        %2230 = vmatprep.subr.mxu0 0.0
        %2231 = vmatpush1.msra.mxu0 0.0
        %2232 = vmatprep.subr.mxu0 0.0
        %2233 = vmatpush1.msra.mxu0 0.0
        %2234 = vmatprep.subr.mxu0 0.0
        %2235 = vmatpush1.msra.mxu0 0.0
        %2236 = vmatprep.subr.mxu0 0.0
        %2237 = vmatpush1.msra.mxu0 0.0
        %2238 = vmatprep.mubr.f32.mxu0 0.0
        %2239 = vmatmul.mubr.f32.gmra.mrb[0].mxu0 %v382
        %v2240 = vpop.f32.mrb[0].mxu0
        %v2241 = vadd.f32 %v2172, %v2240
        %v2242 = vpop.f32.mrb[0].mxu0
        %2243 = vdwg.mxu0
        %v2245 = vsel %vm667, %v2051, 0
        %v2248 = vsel %vm667, %v2146, 0
        %2250 = vmatprep.subr.mxu0 0.0
        %2251 = vmatpush1.xpose.msra.mxu0 %v2248
        %2252 = vmatprep.subr.mxu0 0.0
        %2253 = vmatpush1.xpose.msra.mxu0 0.0
        %2254 = vmatprep.subr.mxu0 0.0
        %2255 = vmatpush1.xpose.msra.mxu0 0.0
        %2256 = vmatprep.subr.mxu0 0.0
        %2257 = vmatpush1.xpose.msra.mxu0 0.0
        %2258 = vmatprep.subr.mxu0 0.0
        %2259 = vmatpush1.xpose.msra.mxu0 0.0
        %2260 = vmatprep.subr.mxu0 0.0
        %2261 = vmatpush1.xpose.msra.mxu0 0.0
        %2262 = vmatprep.subr.mxu0 0.0
        %2263 = vmatpush1.xpose.msra.mxu0 0.0
        %2264 = vmatprep.subr.mxu0 0.0
        %2265 = vmatpush1.xpose.msra.mxu0 0.0
        %2266 = vmatprep.subr.mxu0 0.0
        %2267 = vmatpush1.xpose.msra.mxu0 0.0
        %2268 = vmatprep.subr.mxu0 0.0
        %2269 = vmatpush1.xpose.msra.mxu0 0.0
        %2270 = vmatprep.subr.mxu0 0.0
        %2271 = vmatpush1.xpose.msra.mxu0 0.0
        %2272 = vmatprep.subr.mxu0 0.0
        %2273 = vmatpush1.xpose.msra.mxu0 0.0
        %2274 = vmatprep.subr.mxu0 0.0
        %2275 = vmatpush1.xpose.msra.mxu0 0.0
        %2276 = vmatprep.subr.mxu0 0.0
        %2277 = vmatpush1.xpose.msra.mxu0 0.0
        %2278 = vmatprep.subr.mxu0 0.0
        %2279 = vmatpush1.xpose.msra.mxu0 0.0
        %2280 = vmatprep.subr.mxu0 0.0
        %2281 = vmatpush1.xpose.msra.mxu0 0.0
        %2282 = vmatprep.subr.mxu0 0.0
        %2283 = vmatpush1.xpose.msra.mxu0 0.0
        %2284 = vmatprep.subr.mxu0 0.0
        %2285 = vmatpush1.xpose.msra.mxu0 0.0
        %2286 = vmatprep.subr.mxu0 0.0
        %2287 = vmatpush1.xpose.msra.mxu0 0.0
        %2288 = vmatprep.subr.mxu0 0.0
        %2289 = vmatpush1.xpose.msra.mxu0 0.0
        %2290 = vmatprep.subr.mxu0 0.0
        %2291 = vmatpush1.xpose.msra.mxu0 0.0
        %2292 = vmatprep.subr.mxu0 0.0
        %2293 = vmatpush1.xpose.msra.mxu0 0.0
        %2294 = vmatprep.subr.mxu0 0.0
        %2295 = vmatpush1.xpose.msra.mxu0 0.0
        %2296 = vmatprep.subr.mxu0 0.0
        %2297 = vmatpush1.xpose.msra.mxu0 0.0
        %2298 = vmatprep.subr.mxu0 0.0
        %2299 = vmatpush1.xpose.msra.mxu0 0.0
        %2300 = vmatprep.subr.mxu0 0.0
        %2301 = vmatpush1.xpose.msra.mxu0 0.0
        %2302 = vmatprep.subr.mxu0 0.0
        %2303 = vmatpush1.xpose.msra.mxu0 0.0
        %2304 = vmatprep.subr.mxu0 0.0
        %2305 = vmatpush1.xpose.msra.mxu0 0.0
        %2306 = vmatprep.subr.mxu0 0.0
        %2307 = vmatpush1.xpose.msra.mxu0 0.0
        %2308 = vmatprep.subr.mxu0 0.0
        %2309 = vmatpush1.xpose.msra.mxu0 0.0
        %2310 = vmatprep.subr.mxu0 0.0
        %2311 = vmatpush1.xpose.msra.mxu0 0.0
        %2312 = vmatprep.subr.mxu0 0.0
        %2313 = vmatpush1.xpose.msra.mxu0 0.0
        %2314 = vmatprep.mubr.f32.mxu0 0.0
        %2315 = vmatmul.mubr.f32.gmra.mrb[0].mxu0 %v2245
        %v2316 = vpop.f32.mrb[0].mxu0
        %v2317 = vadd.f32 0.0, %v2316
        %v2318 = vpop.f32.mrb[0].mxu0
        %2319 = vdwg.mxu0
        %v2320 = vmul.f32 %v2317, 0.17677669
        %v2321 = vsel %vm387, %v2320, -1e+30
        %v2322 = vsel %vm746, %v2321, -inf
        %2323 = vmax.xlane.f32.xlu0 %v2322
        %v2324 = vpop.xlane.xlu0 %2323
        %v2325 = vsub.f32 %v2321, %v2324
        %v2326 = vmul.f32 %v2325, 1.442695
        %v2327 = vpow.pop %v2326
        %v2328 = vsel %vm746, %v2327, 0.0
        %2329 = vadd.xlane.f32.xlu0 %v2328
        %v2330 = vpop.xlane.xlu0 %2329
        %v2331 = vrcp.pop %v2330
        %v2332 = vmul.f32 %v2327, %v2331
        %v2334 = vsel %vm746, %v2332, 0
        %2336 = vmatprep.subr.mxu0 0.0
        %2337 = vmatpush1.msra.mxu0 %v2241
        %2338 = vmatprep.subr.mxu0 0.0
        %2339 = vmatpush1.msra.mxu0 0.0
        %2340 = vmatprep.subr.mxu0 0.0
        %2341 = vmatpush1.msra.mxu0 0.0
        %2342 = vmatprep.subr.mxu0 0.0
        %2343 = vmatpush1.msra.mxu0 0.0
        %2344 = vmatprep.subr.mxu0 0.0
        %2345 = vmatpush1.msra.mxu0 0.0
        %2346 = vmatprep.subr.mxu0 0.0
        %2347 = vmatpush1.msra.mxu0 0.0
        %2348 = vmatprep.subr.mxu0 0.0
        %2349 = vmatpush1.msra.mxu0 0.0
        %2350 = vmatprep.subr.mxu0 0.0
        %2351 = vmatpush1.msra.mxu0 0.0
        %2352 = vmatprep.subr.mxu0 0.0
        %2353 = vmatpush1.msra.mxu0 0.0
        %2354 = vmatprep.subr.mxu0 0.0
        %2355 = vmatpush1.msra.mxu0 0.0
        %2356 = vmatprep.subr.mxu0 0.0
        %2357 = vmatpush1.msra.mxu0 0.0
        %2358 = vmatprep.subr.mxu0 0.0
        %2359 = vmatpush1.msra.mxu0 0.0
        %2360 = vmatprep.subr.mxu0 0.0
        %2361 = vmatpush1.msra.mxu0 0.0
        %2362 = vmatprep.subr.mxu0 0.0
        %2363 = vmatpush1.msra.mxu0 0.0
        %2364 = vmatprep.subr.mxu0 0.0
        %2365 = vmatpush1.msra.mxu0 0.0
        %2366 = vmatprep.subr.mxu0 0.0
        %2367 = vmatpush1.msra.mxu0 0.0
        %2368 = vmatprep.subr.mxu0 0.0
        %2369 = vmatpush1.msra.mxu0 0.0
        %2370 = vmatprep.subr.mxu0 0.0
        %2371 = vmatpush1.msra.mxu0 0.0
        %2372 = vmatprep.subr.mxu0 0.0
        %2373 = vmatpush1.msra.mxu0 0.0
        %2374 = vmatprep.subr.mxu0 0.0
        %2375 = vmatpush1.msra.mxu0 0.0
        %2376 = vmatprep.subr.mxu0 0.0
        %2377 = vmatpush1.msra.mxu0 0.0
        %2378 = vmatprep.subr.mxu0 0.0
        %2379 = vmatpush1.msra.mxu0 0.0
        %2380 = vmatprep.subr.mxu0 0.0
        %2381 = vmatpush1.msra.mxu0 0.0
        %2382 = vmatprep.subr.mxu0 0.0
        %2383 = vmatpush1.msra.mxu0 0.0
        %2384 = vmatprep.subr.mxu0 0.0
        %2385 = vmatpush1.msra.mxu0 0.0
        %2386 = vmatprep.subr.mxu0 0.0
        %2387 = vmatpush1.msra.mxu0 0.0
        %2388 = vmatprep.subr.mxu0 0.0
        %2389 = vmatpush1.msra.mxu0 0.0
        %2390 = vmatprep.subr.mxu0 0.0
        %2391 = vmatpush1.msra.mxu0 0.0
        %2392 = vmatprep.subr.mxu0 0.0
        %2393 = vmatpush1.msra.mxu0 0.0
        %2394 = vmatprep.subr.mxu0 0.0
        %2395 = vmatpush1.msra.mxu0 0.0
        %2396 = vmatprep.subr.mxu0 0.0
        %2397 = vmatpush1.msra.mxu0 0.0
        %2398 = vmatprep.subr.mxu0 0.0
        %2399 = vmatpush1.msra.mxu0 0.0
        %2400 = vmatprep.mubr.f32.mxu0 0.0
        %2401 = vmatmul.mubr.f32.gmra.mrb[0].mxu0 %v2334
        %v2402 = vpop.f32.mrb[0].mxu0
        %v2403 = vadd.f32 0.0, %v2402
        %v2404 = vpop.f32.mrb[0].mxu0
        %2405 = vdwg.mxu0
        %s2406 = scalar_lea.vmem %s7, 96
        %v2407 = vld [vmem:[%s2406] sm:$0xff]
        %v2408 = vld [vmem:[%s2406 + $0x8] sm:$0xff]
        %v2409 = vld [vmem:[%s2406 + $0x10] sm:$0xff]
        %v2410 = vld [vmem:[%s2406 + $0x18] sm:$0xff]
        %v2412 = vsel %vm667, %v2403, 0
        %2414 = vmatprep.subr.mxu0 0.0
        %2415 = vmatpush1.msra.mxu0 %v2407
        %2416 = vmatprep.subr.mxu0 0.0
        %2417 = vmatpush1.msra.mxu0 %v2408
        %2418 = vmatprep.subr.mxu0 0.0
        %2419 = vmatpush1.msra.mxu0 %v2409
        %2420 = vmatprep.subr.mxu0 0.0
        %2421 = vmatpush1.msra.mxu0 %v2410
        %2422 = vmatprep.subr.mxu0 0.0
        %2423 = vmatpush1.msra.mxu0 0.0
        %2424 = vmatprep.subr.mxu0 0.0
        %2425 = vmatpush1.msra.mxu0 0.0
        %2426 = vmatprep.subr.mxu0 0.0
        %2427 = vmatpush1.msra.mxu0 0.0
        %2428 = vmatprep.subr.mxu0 0.0
        %2429 = vmatpush1.msra.mxu0 0.0
        %2430 = vmatprep.subr.mxu0 0.0
        %2431 = vmatpush1.msra.mxu0 0.0
        %2432 = vmatprep.subr.mxu0 0.0
        %2433 = vmatpush1.msra.mxu0 0.0
        %2434 = vmatprep.subr.mxu0 0.0
        %2435 = vmatpush1.msra.mxu0 0.0
        %2436 = vmatprep.subr.mxu0 0.0
        %2437 = vmatpush1.msra.mxu0 0.0
        %2438 = vmatprep.subr.mxu0 0.0
        %2439 = vmatpush1.msra.mxu0 0.0
        %2440 = vmatprep.subr.mxu0 0.0
        %2441 = vmatpush1.msra.mxu0 0.0
        %2442 = vmatprep.subr.mxu0 0.0
        %2443 = vmatpush1.msra.mxu0 0.0
        %2444 = vmatprep.subr.mxu0 0.0
        %2445 = vmatpush1.msra.mxu0 0.0
        %2446 = vmatprep.subr.mxu0 0.0
        %2447 = vmatpush1.msra.mxu0 0.0
        %2448 = vmatprep.subr.mxu0 0.0
        %2449 = vmatpush1.msra.mxu0 0.0
        %2450 = vmatprep.subr.mxu0 0.0
        %2451 = vmatpush1.msra.mxu0 0.0
        %2452 = vmatprep.subr.mxu0 0.0
        %2453 = vmatpush1.msra.mxu0 0.0
        %2454 = vmatprep.subr.mxu0 0.0
        %2455 = vmatpush1.msra.mxu0 0.0
        %2456 = vmatprep.subr.mxu0 0.0
        %2457 = vmatpush1.msra.mxu0 0.0
        %2458 = vmatprep.subr.mxu0 0.0
        %2459 = vmatpush1.msra.mxu0 0.0
        %2460 = vmatprep.subr.mxu0 0.0
        %2461 = vmatpush1.msra.mxu0 0.0
        %2462 = vmatprep.subr.mxu0 0.0
        %2463 = vmatpush1.msra.mxu0 0.0
        %2464 = vmatprep.subr.mxu0 0.0
        %2465 = vmatpush1.msra.mxu0 0.0
        %2466 = vmatprep.subr.mxu0 0.0
        %2467 = vmatpush1.msra.mxu0 0.0
        %2468 = vmatprep.subr.mxu0 0.0
        %2469 = vmatpush1.msra.mxu0 0.0
        %2470 = vmatprep.subr.mxu0 0.0
        %2471 = vmatpush1.msra.mxu0 0.0
        %2472 = vmatprep.subr.mxu0 0.0
        %2473 = vmatpush1.msra.mxu0 0.0
        %2474 = vmatprep.subr.mxu0 0.0
        %2475 = vmatpush1.msra.mxu0 0.0
        %2476 = vmatprep.subr.mxu0 0.0
        %2477 = vmatpush1.msra.mxu0 0.0
        %2478 = vmatprep.mubr.f32.mxu0 0.0
        %2479 = vmatmul.mubr.f32.gmra.mrb[0].mxu0 %v2412
        %v2480 = vpop.f32.mrb[0].mxu0
        %v2481 = vadd.f32 0.0, %v2480
        %v2482 = vpop.f32.mrb[0].mxu0
        %2483 = vdwg.mxu0
        %v2484 = vadd.f32 %v1958, %v2481
        %v2485 = vadd.f32 %v382, %v2484
        %v2486 = vld [vmem:[%s8] sm:$0x1]
        %v2488 = vlaneseq
        %v2489 = vshrl.u32 %v2488, 7
        %v2490 = vsub.s32 0, %v2489
        %v2491 = vrot.slane %v2486, %v2490
        %v2493 = vadd.f32 %v2485, %v2491
        %v2494 = vld [vmem:[%s9] sm:$0x1]
        %v2495 = vld [vmem:[%s10] sm:$0x1]
        %2496 = vadd.xlane.f32.xlu0 %v2493
        %v2497 = vpop.xlane.xlu0 %2496
        %v2498 = vmul.f32 %v2497, 0.0078125
        %v2499 = vsub.f32 %v2493, %v2498
        %v2500 = vmul.f32 %v2499, %v2499
        %2501 = vadd.xlane.f32.xlu0 %v2500
        %v2502 = vpop.xlane.xlu0 %2501
        %v2503 = vmul.f32 %v2502, 0.0078125
        %v2504 = vadd.f32 %v2503, 1e-05
        %v2505 = vrsqrt.pop %v2504
        %v2506 = vmul.f32 %v2499, %v2505
        %v2508 = vlaneseq
        %v2509 = vshrl.u32 %v2508, 7
        %v2510 = vsub.s32 0, %v2509
        %v2511 = vrot.slane %v2494, %v2510
        %v2513 = vmul.f32 %v2506, %v2511
        %v2515 = vlaneseq
        %v2516 = vshrl.u32 %v2515, 7
        %v2517 = vsub.s32 0, %v2516
        %v2518 = vrot.slane %v2495, %v2517
        %v2520 = vadd.f32 %v2513, %v2518
        %2521 = vst [vmem:[%s377] sm:$0xff] %v2520
        %s2522 = sand.u32 %s269, 1
        %s2523 = scalar_lea.sflag [#allocation3], %s2522
        %s2524 = sand.u32 %s269, 1
        %s2525 = smul.addr %s2524, 8
        %s2526 = scalar_lea.vmem [#allocation2], %s2525
        // Predicated region
        $region65: #{tpu_custom_call.1} parent=63 // pred_check
          %p2527 = pneg %p279
        $region66: #{tpu_custom_call.1} parent=63 // pred_check_branch
          %2529 = sbr.rel (%p2527) target = $region68
        $region67: #{tpu_custom_call.1} parent=63 // pred_region
          %s2531 = ssub.s32 128, 128
          %2532 = vsyncadd %s2523, %s2531
          %s2533 = smul.addr %s25, 128
          %s2534 = scalar_lea.hbm %s11, %s2533
          %s2536 = sshll.u32 %s2526, 4
          %s2537 = int_to_ptr.vmem [resolvable:$true] %s2536
          %2539 = dma.vmem_to_hbm [thread:$0]  %s2537, 128, %s2534, %s2523
        $region68: #{tpu_custom_call.1} parent=63 // pred_fallthru
          _
      $region64: #{tpu_custom_call.1} parent=5 // pred_fallthru
        _
      %p2540 = scmp.le.s32.totalorder 2, %s20
      // Predicated region
      $region69: #{tpu_custom_call.1} parent=5 // pred_check
        %p2541 = pneg %p2540
      $region70: #{tpu_custom_call.1} parent=5 // pred_check_branch
        %2543 = sbr.rel (%p2541) target = $region72
      $region71: #{tpu_custom_call.1} parent=5 // pred_region
        %s2544 = ssub.s32 %s20, 2
        // Predicated region
        $region73: #{tpu_custom_call.1} parent=71 // pred_check
          %p2545 = pneg %p285
        $region74: #{tpu_custom_call.1} parent=71 // pred_check_branch
          %2547 = sbr.rel (%p2545) target = $region76
        $region75: #{tpu_custom_call.1} parent=71 // pred_region
          %s2548 = sand.u32 %s270, 1
          %s2549 = scalar_lea.sflag [#allocation3], %s2548
          %s2550 = sand.u32 %s270, 1
          %s2551 = smul.addr %s2550, 8
          %s2552 = scalar_lea.vmem [#allocation2], %s2551
          %2553 = dma.done %s2549, 128
        $region76: #{tpu_custom_call.1} parent=71 // pred_fallthru
          _
      $region72: #{tpu_custom_call.1} parent=5 // pred_fallthru
        _
    $region6: #{tpu_custom_call.1} parent=1 // loop_footer
      %s24 = sadd.s32 1, %s20
    $region7: #{tpu_custom_call.1} parent=1 // loop_footer_branch
      %19 = sbr.rel target = $region3
    $region8: #{tpu_custom_call.1} parent=1 // loop_exit
      _
    %2554 = vsyncpa [#allocation3], 1
    %s2555 = scalar_lea.sflag [#allocation3], 1
    %2556 = vsyncpa %s2555, 1

</llo_original>
